<compile_context>
chip_gen: v7x
topology: tpu7x:2x2x1
jax: 0.10.0
libtpu: 0.0.40
codegen_flags: <defaults>
</compile_context>

<pallas_src>
import jax
import jax.numpy as jnp
import numpy as np
from jax.experimental import pallas as pl
from jax.experimental.pallas import tpu as pltpu


def gcsa_kernel(params_ref, x_ref, o_ref):
    # params (SMEM, f32[7]): wq, bq, wk, bk, wv, bv, gamma
    wq, bq = params_ref[0], params_ref[1]
    wk, bk = params_ref[2], params_ref[3]
    wv, bv = params_ref[4], params_ref[5]
    gamma = params_ref[6]

    x = x_ref[...]                       # (TB, L) f32

    # 1x1 Conv1d with 1 in/out channel == scalar affine; whole tile at once (VPU).
    q = wq * x + bq                      # (TB, L)
    k = wk * x + bk                      # (TB, L)
    v = wv * x + bv                      # (TB, L)

    tb = x.shape[0]

    # Unrolled per-row softmax-attention.  Rows are independent; the (L,L) numerator
    # `e` is the only big live slab per row and the MXU dot drains it immediately.
    for r in range(tb):
        qr = q[r:r + 1, :]               # (1, L)
        kr = k[r:r + 1, :]               # (1, L)
        vr = v[r:r + 1, :]               # (1, L)

        # scores[i, j] = q[i] * k[j] is rank-1 -> analytic per-row max, no (L,L) reduce.
        kmax = jnp.max(kr, axis=-1, keepdims=True)   # (1, 1)
        kmin = jnp.min(kr, axis=-1, keepdims=True)   # (1, 1)
        qc = jnp.transpose(qr)                       # (L, 1) lane->sublane relayout (XLU)
        m = jnp.maximum(qc * kmax, qc * kmin)        # (L, 1) row max of scores
        e = jnp.exp(qc * kr - m)                     # (L, L) softmax numerator (EUP)
        s = jnp.sum(e, axis=-1, keepdims=True)       # (L, 1) denominator
        p = e * pl.reciprocal(s, approx=False)       # normalized attention, fused scale

        # out[l] = sum_i v[i] * p[i, l]  == torch.bmm(v, attention)
        out_r = jnp.dot(vr, p, preferred_element_type=jnp.float32)   # (1, L) on MXU

        o_ref[pl.ds(r, 1), :] = (gamma * out_r + x[r:r + 1, :]).astype(o_ref.dtype)


def gcsa_pallas(x, params, *, tb=None):
    B, L = x.shape
    if tb is None:
        tb = next(t for t in (8, 4, 2, 1) if B % t == 0)
    assert B % tb == 0, "batch must be divisible by the row tile"
    grid = (B // tb,)

    return pl.pallas_call(
        gcsa_kernel,
        out_shape=jax.ShapeDtypeStruct((B, L), x.dtype),
        grid=grid,
        in_specs=[
            pl.BlockSpec(memory_space=pltpu.MemorySpace.SMEM),   # params, whole array
            pl.BlockSpec((tb, L), lambda b: (b, 0)),             # TB batch rows per step
        ],
        out_specs=pl.BlockSpec((tb, L), lambda b: (b, 0)),
        compiler_params=pltpu.CompilerParams(dimension_semantics=("parallel",)),
        cost_estimate=pl.CostEstimate(
            flops=4 * B * L * L,              # exp arg + scale + MXU MACs (advisory)
            transcendentals=B * L * L,
            bytes_accessed=2 * B * L * 4 + 7 * 4,
        ),
    )(params, x)


def gcsa_ref(x, params):
    """Pure-JAX reference mirroring the PyTorch forward."""
    wq, bq, wk, bk, wv, bv, gamma = [params[i] for i in range(7)]
    q = wq * x + bq
    k = wk * x + bk
    v = wv * x + bv
    scores = q[:, :, None] * k[:, None, :]            # (B, L, L)
    attn = jax.nn.softmax(scores, axis=-1)
    out = jnp.einsum("bi,bil->bl", v, attn)           # contracts the non-normalized axis
    return gamma * out + x


if __name__ == "__main__":
    B, L = 16, 128           # feature_dim = 1 (forced by x.unsqueeze(1) + Conv1d channels)

    key = jax.random.PRNGKey(0)
    kx, kp = jax.random.split(key)
    x = jax.random.normal(kx, (B, L), dtype=jnp.float32)

    # Conv1d(1, 1, 1) weights/biases: six scalars, drawn deterministically.
    conv_params = 0.5 * jax.random.normal(kp, (6,), dtype=jnp.float32)
    # Module __init__ sets gamma = 0 (which would make out == x); use a nonzero
    # deterministic value here so the attention path is actually exercised.
    gamma = jnp.array([0.5], dtype=jnp.float32)
    params = jnp.concatenate([conv_params, gamma])

    y = gcsa_pallas(x, params)
    jax.block_until_ready(y)

    y_ref = gcsa_ref(x, params)
    np.testing.assert_allclose(np.asarray(y), np.asarray(y_ref), rtol=1e-5, atol=1e-5)

    # PyTorch returns .detach().cpu().numpy(); equivalent host array:
    _ = np.asarray(y)

    print("KERNEL_OK")
</pallas_src>

<mosaic_0001>
module attributes {stable_mosaic.version = 11 : i64} {
  func.func @gcsa_kernel(%arg0: i32, %arg1: memref<7xf32, #tpu.memory_space<smem>>, %arg2: memref<8x128xf32, #tpu.memory_space<vmem>>, %arg3: memref<8x128xf32, #tpu.memory_space<vmem>>) attributes {dimension_semantics = [#tpu.dimension_semantics<parallel>], iteration_bounds = array<i64: 2>, scalar_prefetch = 0 : i64, scratch_operands = 0 : i64, tpu.core_type = #tpu.core_type<tc>, window_params = [{transform_indices = @transform_0, window_bounds = array<i64: 7>}, {transform_indices = @transform_1, window_bounds = array<i64: 8, 128>}, {transform_indices = @transform_2, window_bounds = array<i64: 8, 128>}]} {
    %c0 = arith.constant 0 : index
    %0 = memref.load %arg1[%c0] : memref<7xf32, #tpu.memory_space<smem>>
    %c1 = arith.constant 1 : index
    %1 = memref.load %arg1[%c1] : memref<7xf32, #tpu.memory_space<smem>>
    %c2 = arith.constant 2 : index
    %2 = memref.load %arg1[%c2] : memref<7xf32, #tpu.memory_space<smem>>
    %c3 = arith.constant 3 : index
    %3 = memref.load %arg1[%c3] : memref<7xf32, #tpu.memory_space<smem>>
    %c4 = arith.constant 4 : index
    %4 = memref.load %arg1[%c4] : memref<7xf32, #tpu.memory_space<smem>>
    %c5 = arith.constant 5 : index
    %5 = memref.load %arg1[%c5] : memref<7xf32, #tpu.memory_space<smem>>
    %c6 = arith.constant 6 : index
    %6 = memref.load %arg1[%c6] : memref<7xf32, #tpu.memory_space<smem>>
    %c0_0 = arith.constant 0 : index
    %c0_1 = arith.constant 0 : index
    %7 = vector.load %arg2[%c0_0, %c0_1] : memref<8x128xf32, #tpu.memory_space<vmem>>, vector<8x128xf32>
    %8 = vector.broadcast %0 : f32 to vector<8x128xf32>
    %9 = arith.mulf %8, %7 : vector<8x128xf32>
    %10 = vector.broadcast %1 : f32 to vector<8x128xf32>
    %11 = arith.addf %9, %10 : vector<8x128xf32>
    %12 = vector.broadcast %2 : f32 to vector<8x128xf32>
    %13 = arith.mulf %12, %7 : vector<8x128xf32>
    %14 = vector.broadcast %3 : f32 to vector<8x128xf32>
    %15 = arith.addf %13, %14 : vector<8x128xf32>
    %16 = vector.broadcast %4 : f32 to vector<8x128xf32>
    %17 = arith.mulf %16, %7 : vector<8x128xf32>
    %18 = vector.broadcast %5 : f32 to vector<8x128xf32>
    %19 = arith.addf %17, %18 : vector<8x128xf32>
    %20 = vector.extract_strided_slice %11 {offsets = [0, 0], sizes = [1, 128], strides = [1, 1]} : vector<8x128xf32> to vector<1x128xf32>
    %21 = vector.extract_strided_slice %15 {offsets = [0, 0], sizes = [1, 128], strides = [1, 1]} : vector<8x128xf32> to vector<1x128xf32>
    %22 = vector.extract_strided_slice %19 {offsets = [0, 0], sizes = [1, 128], strides = [1, 1]} : vector<8x128xf32> to vector<1x128xf32>
    %cst = arith.constant dense<0xFF800000> : vector<1xf32>
    %23 = vector.multi_reduction <maximumf>, %21, %cst [1] : vector<1x128xf32> to vector<1xf32>
    %24 = vector.shape_cast %23 : vector<1xf32> to vector<1x1xf32>
    %cst_2 = arith.constant dense<0x7F800000> : vector<1xf32>
    %25 = vector.multi_reduction <minimumf>, %21, %cst_2 [1] : vector<1x128xf32> to vector<1xf32>
    %26 = vector.shape_cast %25 : vector<1xf32> to vector<1x1xf32>
    %27 = tpu.transpose %20, [1, 0] : vector<1x128xf32> -> vector<128x1xf32>
    %28 = vector.broadcast %24 : vector<1x1xf32> to vector<128x1xf32>
    %29 = arith.mulf %27, %28 : vector<128x1xf32>
    %30 = vector.broadcast %26 : vector<1x1xf32> to vector<128x1xf32>
    %31 = arith.mulf %27, %30 : vector<128x1xf32>
    %32 = arith.maximumf %29, %31 : vector<128x1xf32>
    %33 = vector.broadcast %27 : vector<128x1xf32> to vector<128x128xf32>
    %34 = vector.broadcast %21 : vector<1x128xf32> to vector<128x128xf32>
    %35 = arith.mulf %33, %34 : vector<128x128xf32>
    %36 = vector.broadcast %32 : vector<128x1xf32> to vector<128x128xf32>
    %37 = arith.subf %35, %36 : vector<128x128xf32>
    %38 = math.exp %37 : vector<128x128xf32>
    %cst_3 = arith.constant dense<0.000000e+00> : vector<128xf32>
    %39 = vector.multi_reduction <add>, %38, %cst_3 [1] : vector<128x128xf32> to vector<128xf32>
    %40 = vector.shape_cast %39 : vector<128xf32> to vector<128x1xf32>
    %41 = tpu.reciprocal %40 : vector<128x1xf32> -> vector<128x1xf32>
    %42 = vector.broadcast %41 : vector<128x1xf32> to vector<128x128xf32>
    %43 = arith.mulf %38, %42 : vector<128x128xf32>
    %cst_4 = arith.constant dense<0.000000e+00> : vector<1x128xf32>
    %44 = tpu.matmul %22, %43, %cst_4 {dimension_numbers = #tpu.dot_dimension_numbers<[1], [0], [0], [1], [0, 0, 1, 1], [], []>} : vector<1x128xf32>, vector<128x128xf32>, vector<1x128xf32> -> vector<1x128xf32>
    %45 = vector.broadcast %6 : f32 to vector<1x128xf32>
    %46 = arith.mulf %45, %44 : vector<1x128xf32>
    %47 = vector.extract_strided_slice %7 {offsets = [0, 0], sizes = [1, 128], strides = [1, 1]} : vector<8x128xf32> to vector<1x128xf32>
    %48 = arith.addf %46, %47 : vector<1x128xf32>
    %c0_5 = arith.constant 0 : index
    %c0_6 = arith.constant 0 : index
    %49 = vector.load %arg3[%c0_5, %c0_6] : memref<8x128xf32, #tpu.memory_space<vmem>>, vector<1x128xf32>
    tpu.vector_store %arg3[%c0_5, %c0_6], %48 {strides = array<i32>} : memref<8x128xf32, #tpu.memory_space<vmem>>, vector<1x128xf32>,
    %50 = vector.extract_strided_slice %11 {offsets = [1, 0], sizes = [1, 128], strides = [1, 1]} : vector<8x128xf32> to vector<1x128xf32>
    %51 = vector.extract_strided_slice %15 {offsets = [1, 0], sizes = [1, 128], strides = [1, 1]} : vector<8x128xf32> to vector<1x128xf32>
    %52 = vector.extract_strided_slice %19 {offsets = [1, 0], sizes = [1, 128], strides = [1, 1]} : vector<8x128xf32> to vector<1x128xf32>
    %cst_7 = arith.constant dense<0xFF800000> : vector<1xf32>
    %53 = vector.multi_reduction <maximumf>, %51, %cst_7 [1] : vector<1x128xf32> to vector<1xf32>
    %54 = vector.shape_cast %53 : vector<1xf32> to vector<1x1xf32>
    %cst_8 = arith.constant dense<0x7F800000> : vector<1xf32>
    %55 = vector.multi_reduction <minimumf>, %51, %cst_8 [1] : vector<1x128xf32> to vector<1xf32>
    %56 = vector.shape_cast %55 : vector<1xf32> to vector<1x1xf32>
    %57 = tpu.transpose %50, [1, 0] : vector<1x128xf32> -> vector<128x1xf32>
    %58 = vector.broadcast %54 : vector<1x1xf32> to vector<128x1xf32>
    %59 = arith.mulf %57, %58 : vector<128x1xf32>
    %60 = vector.broadcast %56 : vector<1x1xf32> to vector<128x1xf32>
    %61 = arith.mulf %57, %60 : vector<128x1xf32>
    %62 = arith.maximumf %59, %61 : vector<128x1xf32>
    %63 = vector.broadcast %57 : vector<128x1xf32> to vector<128x128xf32>
    %64 = vector.broadcast %51 : vector<1x128xf32> to vector<128x128xf32>
    %65 = arith.mulf %63, %64 : vector<128x128xf32>
    %66 = vector.broadcast %62 : vector<128x1xf32> to vector<128x128xf32>
    %67 = arith.subf %65, %66 : vector<128x128xf32>
    %68 = math.exp %67 : vector<128x128xf32>
    %cst_9 = arith.constant dense<0.000000e+00> : vector<128xf32>
    %69 = vector.multi_reduction <add>, %68, %cst_9 [1] : vector<128x128xf32> to vector<128xf32>
    %70 = vector.shape_cast %69 : vector<128xf32> to vector<128x1xf32>
    %71 = tpu.reciprocal %70 : vector<128x1xf32> -> vector<128x1xf32>
    %72 = vector.broadcast %71 : vector<128x1xf32> to vector<128x128xf32>
    %73 = arith.mulf %68, %72 : vector<128x128xf32>
    %cst_10 = arith.constant dense<0.000000e+00> : vector<1x128xf32>
    %74 = tpu.matmul %52, %73, %cst_10 {dimension_numbers = #tpu.dot_dimension_numbers<[1], [0], [0], [1], [0, 0, 1, 1], [], []>} : vector<1x128xf32>, vector<128x128xf32>, vector<1x128xf32> -> vector<1x128xf32>
    %75 = vector.broadcast %6 : f32 to vector<1x128xf32>
    %76 = arith.mulf %75, %74 : vector<1x128xf32>
    %77 = vector.extract_strided_slice %7 {offsets = [1, 0], sizes = [1, 128], strides = [1, 1]} : vector<8x128xf32> to vector<1x128xf32>
    %78 = arith.addf %76, %77 : vector<1x128xf32>
    %c1_11 = arith.constant 1 : index
    %c0_12 = arith.constant 0 : index
    %79 = vector.load %arg3[%c1_11, %c0_12] : memref<8x128xf32, #tpu.memory_space<vmem>>, vector<1x128xf32>
    tpu.vector_store %arg3[%c1_11, %c0_12], %78 {strides = array<i32>} : memref<8x128xf32, #tpu.memory_space<vmem>>, vector<1x128xf32>,
    %80 = vector.extract_strided_slice %11 {offsets = [2, 0], sizes = [1, 128], strides = [1, 1]} : vector<8x128xf32> to vector<1x128xf32>
    %81 = vector.extract_strided_slice %15 {offsets = [2, 0], sizes = [1, 128], strides = [1, 1]} : vector<8x128xf32> to vector<1x128xf32>
    %82 = vector.extract_strided_slice %19 {offsets = [2, 0], sizes = [1, 128], strides = [1, 1]} : vector<8x128xf32> to vector<1x128xf32>
    %cst_13 = arith.constant dense<0xFF800000> : vector<1xf32>
    %83 = vector.multi_reduction <maximumf>, %81, %cst_13 [1] : vector<1x128xf32> to vector<1xf32>
    %84 = vector.shape_cast %83 : vector<1xf32> to vector<1x1xf32>
    %cst_14 = arith.constant dense<0x7F800000> : vector<1xf32>
    %85 = vector.multi_reduction <minimumf>, %81, %cst_14 [1] : vector<1x128xf32> to vector<1xf32>
    %86 = vector.shape_cast %85 : vector<1xf32> to vector<1x1xf32>
    %87 = tpu.transpose %80, [1, 0] : vector<1x128xf32> -> vector<128x1xf32>
    %88 = vector.broadcast %84 : vector<1x1xf32> to vector<128x1xf32>
    %89 = arith.mulf %87, %88 : vector<128x1xf32>
    %90 = vector.broadcast %86 : vector<1x1xf32> to vector<128x1xf32>
    %91 = arith.mulf %87, %90 : vector<128x1xf32>
    %92 = arith.maximumf %89, %91 : vector<128x1xf32>
    %93 = vector.broadcast %87 : vector<128x1xf32> to vector<128x128xf32>
    %94 = vector.broadcast %81 : vector<1x128xf32> to vector<128x128xf32>
    %95 = arith.mulf %93, %94 : vector<128x128xf32>
    %96 = vector.broadcast %92 : vector<128x1xf32> to vector<128x128xf32>
    %97 = arith.subf %95, %96 : vector<128x128xf32>
    %98 = math.exp %97 : vector<128x128xf32>
    %cst_15 = arith.constant dense<0.000000e+00> : vector<128xf32>
    %99 = vector.multi_reduction <add>, %98, %cst_15 [1] : vector<128x128xf32> to vector<128xf32>
    %100 = vector.shape_cast %99 : vector<128xf32> to vector<128x1xf32>
    %101 = tpu.reciprocal %100 : vector<128x1xf32> -> vector<128x1xf32>
    %102 = vector.broadcast %101 : vector<128x1xf32> to vector<128x128xf32>
    %103 = arith.mulf %98, %102 : vector<128x128xf32>
    %cst_16 = arith.constant dense<0.000000e+00> : vector<1x128xf32>
    %104 = tpu.matmul %82, %103, %cst_16 {dimension_numbers = #tpu.dot_dimension_numbers<[1], [0], [0], [1], [0, 0, 1, 1], [], []>} : vector<1x128xf32>, vector<128x128xf32>, vector<1x128xf32> -> vector<1x128xf32>
    %105 = vector.broadcast %6 : f32 to vector<1x128xf32>
    %106 = arith.mulf %105, %104 : vector<1x128xf32>
    %107 = vector.extract_strided_slice %7 {offsets = [2, 0], sizes = [1, 128], strides = [1, 1]} : vector<8x128xf32> to vector<1x128xf32>
    %108 = arith.addf %106, %107 : vector<1x128xf32>
    %c2_17 = arith.constant 2 : index
    %c0_18 = arith.constant 0 : index
    %109 = vector.load %arg3[%c2_17, %c0_18] : memref<8x128xf32, #tpu.memory_space<vmem>>, vector<1x128xf32>
    tpu.vector_store %arg3[%c2_17, %c0_18], %108 {strides = array<i32>} : memref<8x128xf32, #tpu.memory_space<vmem>>, vector<1x128xf32>,
    %110 = vector.extract_strided_slice %11 {offsets = [3, 0], sizes = [1, 128], strides = [1, 1]} : vector<8x128xf32> to vector<1x128xf32>
    %111 = vector.extract_strided_slice %15 {offsets = [3, 0], sizes = [1, 128], strides = [1, 1]} : vector<8x128xf32> to vector<1x128xf32>
    %112 = vector.extract_strided_slice %19 {offsets = [3, 0], sizes = [1, 128], strides = [1, 1]} : vector<8x128xf32> to vector<1x128xf32>
    %cst_19 = arith.constant dense<0xFF800000> : vector<1xf32>
    %113 = vector.multi_reduction <maximumf>, %111, %cst_19 [1] : vector<1x128xf32> to vector<1xf32>
    %114 = vector.shape_cast %113 : vector<1xf32> to vector<1x1xf32>
    %cst_20 = arith.constant dense<0x7F800000> : vector<1xf32>
    %115 = vector.multi_reduction <minimumf>, %111, %cst_20 [1] : vector<1x128xf32> to vector<1xf32>
    %116 = vector.shape_cast %115 : vector<1xf32> to vector<1x1xf32>
    %117 = tpu.transpose %110, [1, 0] : vector<1x128xf32> -> vector<128x1xf32>
    %118 = vector.broadcast %114 : vector<1x1xf32> to vector<128x1xf32>
    %119 = arith.mulf %117, %118 : vector<128x1xf32>
    %120 = vector.broadcast %116 : vector<1x1xf32> to vector<128x1xf32>
    %121 = arith.mulf %117, %120 : vector<128x1xf32>
    %122 = arith.maximumf %119, %121 : vector<128x1xf32>
    %123 = vector.broadcast %117 : vector<128x1xf32> to vector<128x128xf32>
    %124 = vector.broadcast %111 : vector<1x128xf32> to vector<128x128xf32>
    %125 = arith.mulf %123, %124 : vector<128x128xf32>
    %126 = vector.broadcast %122 : vector<128x1xf32> to vector<128x128xf32>
    %127 = arith.subf %125, %126 : vector<128x128xf32>
    %128 = math.exp %127 : vector<128x128xf32>
    %cst_21 = arith.constant dense<0.000000e+00> : vector<128xf32>
    %129 = vector.multi_reduction <add>, %128, %cst_21 [1] : vector<128x128xf32> to vector<128xf32>
    %130 = vector.shape_cast %129 : vector<128xf32> to vector<128x1xf32>
    %131 = tpu.reciprocal %130 : vector<128x1xf32> -> vector<128x1xf32>
    %132 = vector.broadcast %131 : vector<128x1xf32> to vector<128x128xf32>
    %133 = arith.mulf %128, %132 : vector<128x128xf32>
    %cst_22 = arith.constant dense<0.000000e+00> : vector<1x128xf32>
    %134 = tpu.matmul %112, %133, %cst_22 {dimension_numbers = #tpu.dot_dimension_numbers<[1], [0], [0], [1], [0, 0, 1, 1], [], []>} : vector<1x128xf32>, vector<128x128xf32>, vector<1x128xf32> -> vector<1x128xf32>
    %135 = vector.broadcast %6 : f32 to vector<1x128xf32>
    %136 = arith.mulf %135, %134 : vector<1x128xf32>
    %137 = vector.extract_strided_slice %7 {offsets = [3, 0], sizes = [1, 128], strides = [1, 1]} : vector<8x128xf32> to vector<1x128xf32>
    %138 = arith.addf %136, %137 : vector<1x128xf32>
    %c3_23 = arith.constant 3 : index
    %c0_24 = arith.constant 0 : index
    %139 = vector.load %arg3[%c3_23, %c0_24] : memref<8x128xf32, #tpu.memory_space<vmem>>, vector<1x128xf32>
    tpu.vector_store %arg3[%c3_23, %c0_24], %138 {strides = array<i32>} : memref<8x128xf32, #tpu.memory_space<vmem>>, vector<1x128xf32>,
    %140 = vector.extract_strided_slice %11 {offsets = [4, 0], sizes = [1, 128], strides = [1, 1]} : vector<8x128xf32> to vector<1x128xf32>
    %141 = vector.extract_strided_slice %15 {offsets = [4, 0], sizes = [1, 128], strides = [1, 1]} : vector<8x128xf32> to vector<1x128xf32>
    %142 = vector.extract_strided_slice %19 {offsets = [4, 0], sizes = [1, 128], strides = [1, 1]} : vector<8x128xf32> to vector<1x128xf32>
    %cst_25 = arith.constant dense<0xFF800000> : vector<1xf32>
    %143 = vector.multi_reduction <maximumf>, %141, %cst_25 [1] : vector<1x128xf32> to vector<1xf32>
    %144 = vector.shape_cast %143 : vector<1xf32> to vector<1x1xf32>
    %cst_26 = arith.constant dense<0x7F800000> : vector<1xf32>
    %145 = vector.multi_reduction <minimumf>, %141, %cst_26 [1] : vector<1x128xf32> to vector<1xf32>
    %146 = vector.shape_cast %145 : vector<1xf32> to vector<1x1xf32>
    %147 = tpu.transpose %140, [1, 0] : vector<1x128xf32> -> vector<128x1xf32>
    %148 = vector.broadcast %144 : vector<1x1xf32> to vector<128x1xf32>
    %149 = arith.mulf %147, %148 : vector<128x1xf32>
    %150 = vector.broadcast %146 : vector<1x1xf32> to vector<128x1xf32>
    %151 = arith.mulf %147, %150 : vector<128x1xf32>
    %152 = arith.maximumf %149, %151 : vector<128x1xf32>
    %153 = vector.broadcast %147 : vector<128x1xf32> to vector<128x128xf32>
    %154 = vector.broadcast %141 : vector<1x128xf32> to vector<128x128xf32>
    %155 = arith.mulf %153, %154 : vector<128x128xf32>
    %156 = vector.broadcast %152 : vector<128x1xf32> to vector<128x128xf32>
    %157 = arith.subf %155, %156 : vector<128x128xf32>
    %158 = math.exp %157 : vector<128x128xf32>
    %cst_27 = arith.constant dense<0.000000e+00> : vector<128xf32>
    %159 = vector.multi_reduction <add>, %158, %cst_27 [1] : vector<128x128xf32> to vector<128xf32>
    %160 = vector.shape_cast %159 : vector<128xf32> to vector<128x1xf32>
    %161 = tpu.reciprocal %160 : vector<128x1xf32> -> vector<128x1xf32>
    %162 = vector.broadcast %161 : vector<128x1xf32> to vector<128x128xf32>
    %163 = arith.mulf %158, %162 : vector<128x128xf32>
    %cst_28 = arith.constant dense<0.000000e+00> : vector<1x128xf32>
    %164 = tpu.matmul %142, %163, %cst_28 {dimension_numbers = #tpu.dot_dimension_numbers<[1], [0], [0], [1], [0, 0, 1, 1], [], []>} : vector<1x128xf32>, vector<128x128xf32>, vector<1x128xf32> -> vector<1x128xf32>
    %165 = vector.broadcast %6 : f32 to vector<1x128xf32>
    %166 = arith.mulf %165, %164 : vector<1x128xf32>
    %167 = vector.extract_strided_slice %7 {offsets = [4, 0], sizes = [1, 128], strides = [1, 1]} : vector<8x128xf32> to vector<1x128xf32>
    %168 = arith.addf %166, %167 : vector<1x128xf32>
    %c4_29 = arith.constant 4 : index
    %c0_30 = arith.constant 0 : index
    %169 = vector.load %arg3[%c4_29, %c0_30] : memref<8x128xf32, #tpu.memory_space<vmem>>, vector<1x128xf32>
    tpu.vector_store %arg3[%c4_29, %c0_30], %168 {strides = array<i32>} : memref<8x128xf32, #tpu.memory_space<vmem>>, vector<1x128xf32>,
    %170 = vector.extract_strided_slice %11 {offsets = [5, 0], sizes = [1, 128], strides = [1, 1]} : vector<8x128xf32> to vector<1x128xf32>
    %171 = vector.extract_strided_slice %15 {offsets = [5, 0], sizes = [1, 128], strides = [1, 1]} : vector<8x128xf32> to vector<1x128xf32>
    %172 = vector.extract_strided_slice %19 {offsets = [5, 0], sizes = [1, 128], strides = [1, 1]} : vector<8x128xf32> to vector<1x128xf32>
    %cst_31 = arith.constant dense<0xFF800000> : vector<1xf32>
    %173 = vector.multi_reduction <maximumf>, %171, %cst_31 [1] : vector<1x128xf32> to vector<1xf32>
    %174 = vector.shape_cast %173 : vector<1xf32> to vector<1x1xf32>
    %cst_32 = arith.constant dense<0x7F800000> : vector<1xf32>
    %175 = vector.multi_reduction <minimumf>, %171, %cst_32 [1] : vector<1x128xf32> to vector<1xf32>
    %176 = vector.shape_cast %175 : vector<1xf32> to vector<1x1xf32>
    %177 = tpu.transpose %170, [1, 0] : vector<1x128xf32> -> vector<128x1xf32>
    %178 = vector.broadcast %174 : vector<1x1xf32> to vector<128x1xf32>
    %179 = arith.mulf %177, %178 : vector<128x1xf32>
    %180 = vector.broadcast %176 : vector<1x1xf32> to vector<128x1xf32>
    %181 = arith.mulf %177, %180 : vector<128x1xf32>
    %182 = arith.maximumf %179, %181 : vector<128x1xf32>
    %183 = vector.broadcast %177 : vector<128x1xf32> to vector<128x128xf32>
    %184 = vector.broadcast %171 : vector<1x128xf32> to vector<128x128xf32>
    %185 = arith.mulf %183, %184 : vector<128x128xf32>
    %186 = vector.broadcast %182 : vector<128x1xf32> to vector<128x128xf32>
    %187 = arith.subf %185, %186 : vector<128x128xf32>
    %188 = math.exp %187 : vector<128x128xf32>
    %cst_33 = arith.constant dense<0.000000e+00> : vector<128xf32>
    %189 = vector.multi_reduction <add>, %188, %cst_33 [1] : vector<128x128xf32> to vector<128xf32>
    %190 = vector.shape_cast %189 : vector<128xf32> to vector<128x1xf32>
    %191 = tpu.reciprocal %190 : vector<128x1xf32> -> vector<128x1xf32>
    %192 = vector.broadcast %191 : vector<128x1xf32> to vector<128x128xf32>
    %193 = arith.mulf %188, %192 : vector<128x128xf32>
    %cst_34 = arith.constant dense<0.000000e+00> : vector<1x128xf32>
    %194 = tpu.matmul %172, %193, %cst_34 {dimension_numbers = #tpu.dot_dimension_numbers<[1], [0], [0], [1], [0, 0, 1, 1], [], []>} : vector<1x128xf32>, vector<128x128xf32>, vector<1x128xf32> -> vector<1x128xf32>
    %195 = vector.broadcast %6 : f32 to vector<1x128xf32>
    %196 = arith.mulf %195, %194 : vector<1x128xf32>
    %197 = vector.extract_strided_slice %7 {offsets = [5, 0], sizes = [1, 128], strides = [1, 1]} : vector<8x128xf32> to vector<1x128xf32>
    %198 = arith.addf %196, %197 : vector<1x128xf32>
    %c5_35 = arith.constant 5 : index
    %c0_36 = arith.constant 0 : index
    %199 = vector.load %arg3[%c5_35, %c0_36] : memref<8x128xf32, #tpu.memory_space<vmem>>, vector<1x128xf32>
    tpu.vector_store %arg3[%c5_35, %c0_36], %198 {strides = array<i32>} : memref<8x128xf32, #tpu.memory_space<vmem>>, vector<1x128xf32>,
    %200 = vector.extract_strided_slice %11 {offsets = [6, 0], sizes = [1, 128], strides = [1, 1]} : vector<8x128xf32> to vector<1x128xf32>
    %201 = vector.extract_strided_slice %15 {offsets = [6, 0], sizes = [1, 128], strides = [1, 1]} : vector<8x128xf32> to vector<1x128xf32>
    %202 = vector.extract_strided_slice %19 {offsets = [6, 0], sizes = [1, 128], strides = [1, 1]} : vector<8x128xf32> to vector<1x128xf32>
    %cst_37 = arith.constant dense<0xFF800000> : vector<1xf32>
    %203 = vector.multi_reduction <maximumf>, %201, %cst_37 [1] : vector<1x128xf32> to vector<1xf32>
    %204 = vector.shape_cast %203 : vector<1xf32> to vector<1x1xf32>
    %cst_38 = arith.constant dense<0x7F800000> : vector<1xf32>
    %205 = vector.multi_reduction <minimumf>, %201, %cst_38 [1] : vector<1x128xf32> to vector<1xf32>
    %206 = vector.shape_cast %205 : vector<1xf32> to vector<1x1xf32>
    %207 = tpu.transpose %200, [1, 0] : vector<1x128xf32> -> vector<128x1xf32>
    %208 = vector.broadcast %204 : vector<1x1xf32> to vector<128x1xf32>
    %209 = arith.mulf %207, %208 : vector<128x1xf32>
    %210 = vector.broadcast %206 : vector<1x1xf32> to vector<128x1xf32>
    %211 = arith.mulf %207, %210 : vector<128x1xf32>
    %212 = arith.maximumf %209, %211 : vector<128x1xf32>
    %213 = vector.broadcast %207 : vector<128x1xf32> to vector<128x128xf32>
    %214 = vector.broadcast %201 : vector<1x128xf32> to vector<128x128xf32>
    %215 = arith.mulf %213, %214 : vector<128x128xf32>
    %216 = vector.broadcast %212 : vector<128x1xf32> to vector<128x128xf32>
    %217 = arith.subf %215, %216 : vector<128x128xf32>
    %218 = math.exp %217 : vector<128x128xf32>
    %cst_39 = arith.constant dense<0.000000e+00> : vector<128xf32>
    %219 = vector.multi_reduction <add>, %218, %cst_39 [1] : vector<128x128xf32> to vector<128xf32>
    %220 = vector.shape_cast %219 : vector<128xf32> to vector<128x1xf32>
    %221 = tpu.reciprocal %220 : vector<128x1xf32> -> vector<128x1xf32>
    %222 = vector.broadcast %221 : vector<128x1xf32> to vector<128x128xf32>
    %223 = arith.mulf %218, %222 : vector<128x128xf32>
    %cst_40 = arith.constant dense<0.000000e+00> : vector<1x128xf32>
    %224 = tpu.matmul %202, %223, %cst_40 {dimension_numbers = #tpu.dot_dimension_numbers<[1], [0], [0], [1], [0, 0, 1, 1], [], []>} : vector<1x128xf32>, vector<128x128xf32>, vector<1x128xf32> -> vector<1x128xf32>
    %225 = vector.broadcast %6 : f32 to vector<1x128xf32>
    %226 = arith.mulf %225, %224 : vector<1x128xf32>
    %227 = vector.extract_strided_slice %7 {offsets = [6, 0], sizes = [1, 128], strides = [1, 1]} : vector<8x128xf32> to vector<1x128xf32>
    %228 = arith.addf %226, %227 : vector<1x128xf32>
    %c6_41 = arith.constant 6 : index
    %c0_42 = arith.constant 0 : index
    %229 = vector.load %arg3[%c6_41, %c0_42] : memref<8x128xf32, #tpu.memory_space<vmem>>, vector<1x128xf32>
    tpu.vector_store %arg3[%c6_41, %c0_42], %228 {strides = array<i32>} : memref<8x128xf32, #tpu.memory_space<vmem>>, vector<1x128xf32>,
    %230 = vector.extract_strided_slice %11 {offsets = [7, 0], sizes = [1, 128], strides = [1, 1]} : vector<8x128xf32> to vector<1x128xf32>
    %231 = vector.extract_strided_slice %15 {offsets = [7, 0], sizes = [1, 128], strides = [1, 1]} : vector<8x128xf32> to vector<1x128xf32>
    %232 = vector.extract_strided_slice %19 {offsets = [7, 0], sizes = [1, 128], strides = [1, 1]} : vector<8x128xf32> to vector<1x128xf32>
    %cst_43 = arith.constant dense<0xFF800000> : vector<1xf32>
    %233 = vector.multi_reduction <maximumf>, %231, %cst_43 [1] : vector<1x128xf32> to vector<1xf32>
    %234 = vector.shape_cast %233 : vector<1xf32> to vector<1x1xf32>
    %cst_44 = arith.constant dense<0x7F800000> : vector<1xf32>
    %235 = vector.multi_reduction <minimumf>, %231, %cst_44 [1] : vector<1x128xf32> to vector<1xf32>
    %236 = vector.shape_cast %235 : vector<1xf32> to vector<1x1xf32>
    %237 = tpu.transpose %230, [1, 0] : vector<1x128xf32> -> vector<128x1xf32>
    %238 = vector.broadcast %234 : vector<1x1xf32> to vector<128x1xf32>
    %239 = arith.mulf %237, %238 : vector<128x1xf32>
    %240 = vector.broadcast %236 : vector<1x1xf32> to vector<128x1xf32>
    %241 = arith.mulf %237, %240 : vector<128x1xf32>
    %242 = arith.maximumf %239, %241 : vector<128x1xf32>
    %243 = vector.broadcast %237 : vector<128x1xf32> to vector<128x128xf32>
    %244 = vector.broadcast %231 : vector<1x128xf32> to vector<128x128xf32>
    %245 = arith.mulf %243, %244 : vector<128x128xf32>
    %246 = vector.broadcast %242 : vector<128x1xf32> to vector<128x128xf32>
    %247 = arith.subf %245, %246 : vector<128x128xf32>
    %248 = math.exp %247 : vector<128x128xf32>
    %cst_45 = arith.constant dense<0.000000e+00> : vector<128xf32>
    %249 = vector.multi_reduction <add>, %248, %cst_45 [1] : vector<128x128xf32> to vector<128xf32>
    %250 = vector.shape_cast %249 : vector<128xf32> to vector<128x1xf32>
    %251 = tpu.reciprocal %250 : vector<128x1xf32> -> vector<128x1xf32>
    %252 = vector.broadcast %251 : vector<128x1xf32> to vector<128x128xf32>
    %253 = arith.mulf %248, %252 : vector<128x128xf32>
    %cst_46 = arith.constant dense<0.000000e+00> : vector<1x128xf32>
    %254 = tpu.matmul %232, %253, %cst_46 {dimension_numbers = #tpu.dot_dimension_numbers<[1], [0], [0], [1], [0, 0, 1, 1], [], []>} : vector<1x128xf32>, vector<128x128xf32>, vector<1x128xf32> -> vector<1x128xf32>
    %255 = vector.broadcast %6 : f32 to vector<1x128xf32>
    %256 = arith.mulf %255, %254 : vector<1x128xf32>
    %257 = vector.extract_strided_slice %7 {offsets = [7, 0], sizes = [1, 128], strides = [1, 1]} : vector<8x128xf32> to vector<1x128xf32>
    %258 = arith.addf %256, %257 : vector<1x128xf32>
    %c7 = arith.constant 7 : index
    %c0_47 = arith.constant 0 : index
    %259 = vector.load %arg3[%c7, %c0_47] : memref<8x128xf32, #tpu.memory_space<vmem>>, vector<1x128xf32>
    tpu.vector_store %arg3[%c7, %c0_47], %258 {strides = array<i32>} : memref<8x128xf32, #tpu.memory_space<vmem>>, vector<1x128xf32>,
    return
  }
  func.func @transform_0(%arg0: i32) -> i32 {
    %c0_i32 = arith.constant 0 : i32
    %c0_i32_0 = arith.constant 0 : i32
    return %c0_i32 : i32
  }
  func.func @transform_1(%arg0: i32) -> (i32, i32) {
    %c0_i32 = arith.constant 0 : i32
    %c0_i32_0 = arith.constant 0 : i32
    return %arg0, %c0_i32 : i32, i32
  }
  func.func @transform_2(%arg0: i32) -> (i32, i32) {
    %c0_i32 = arith.constant 0 : i32
    %c0_i32_0 = arith.constant 0 : i32
    return %arg0, %c0_i32 : i32, i32
  }
}

</mosaic_0001>

<llo_original>
// kernel: tpu_custom_call.1
$region0: #{tpu_custom_call.1}
  #allocation0 [shape = 'u32[]', space=smem, size = 0x4, offset = 0x4, fixed_abs, tag = 'smem constant byte address 0x4 - core index']
  #allocation1 [shape = 'u32[144,128]{1,0:T(1,128)}', space=vmem, size = 0x12000, scoped, tag = 'internal scratch']
  %s0 = inlined_call_operand.hbm [shape: f32[7], index: 0, kind: input, shape index: {}]
  %s1 = inlined_call_operand.hbm [shape: f32[16,128], index: 1, kind: input, shape index: {}]
  %s2 = inlined_call_operand.hbm [shape: f32[16,128], index: 2, kind: output, shape index: {}]
  %s3 = sld [smem:[#allocation0]]
  $region49: #{tpu_custom_call.1} parent=0
    _
  %s5 = ssub.s32 1, %s3
  %s6 = scalar_select 0, %s5, %s3
  $region1: #{tpu_custom_call.1} parent=0
    #allocation2 [shape = 'u8[512]{0}', space=smem, size = 0x200, scoped, tag = 'input window, operand 0, single buffered']
    #allocation3 [shape = 's32[2]{0}', space=sflag, size = 0x8, scoped, tag = 'scoped memory for tpu_custom_call.1']
    #allocation4 [shape = 's32[2]{0}', space=sflag, size = 0x8, scoped, tag = 'scoped memory for tpu_custom_call.1']
    #allocation5 [shape = 's32[2]{0}', space=sflag, size = 0x8, scoped, tag = 'scoped memory for tpu_custom_call.1']
    #allocation6 [shape = 'u8[8192]{0}', space=vmem, size = 0x2000, scoped, tag = 'input window, operand 1']
    #allocation7 [shape = 'u8[8192]{0}', space=vmem, size = 0x2000, scoped, tag = 'output window, operand 0']
    %7 = vsyncpa [#allocation5], 0
    %8 = vsyncpa [#allocation3], 0
    %s9 = scalar_lea.sflag [#allocation3], 1
    %10 = vsyncpa %s9, 0
    %11 = vsyncpa [#allocation4], 0
    %s12 = scalar_lea.sflag [#allocation4], 1
    %13 = vsyncpa %s12, 0
    loop: start=0, step=1, limit=4
    $region2: #{tpu_custom_call.1} parent=1 // loop_pre_header
      _
    $region3: #{tpu_custom_call.1} parent=1 // loop_header
      %s15 = sphi 0, %s19
      %p16 = scmp.ge.s32.totalorder %s15, 4
      %s23 = sphi 0, %s23
      %s25 = sphi 0, %s23
      %s26 = sphi 0, %s25
      %s40 = sphi 0, %s26
      %s46 = sphi 0, %s48
      %s49 = sphi 0, %s46
      %s50 = sphi 0, %s49
      %s66 = sphi 0, %s50
      %s72 = sphi 0, %s74
      %s75 = sphi 0, %s72
      %s76 = sphi 0, %s75
      %s92 = sphi 0, %s76
    $region4: #{tpu_custom_call.1} parent=1 // loop_header_branch
      %18 = sbr.rel (%p16) target = $region8
    $region5: #{tpu_custom_call.1} parent=1 // loop_body
      %s20 = ssub.s32 %s15, 1
      %s21 = ssub.s32 %s15, 2
      %s22 = sadd.s32 %s15, 1
      %s24 = sadd.s32 %s23, 1
      %p27 = scmp.eq.s32.totalorder %s15, 1
      %p28 = scmp.ne.s32.totalorder %s23, %s25
      %p29 = scmp.eq.s32.totalorder %s15, 0
      %p30 = por %p28, %p29
      %p31 = scmp.ne.s32.totalorder %s23, %s25
      %p32 = scmp.eq.s32.totalorder %s20, 1
      %p33 = por %p31, %p32
      %p34 = scmp.ne.s32.totalorder %s25, %s26
      %p35 = scmp.eq.s32.totalorder %s20, 0
      %p36 = por %p34, %p35
      %p37 = scmp.ne.s32.totalorder %s25, %s26
      %p38 = scmp.eq.s32.totalorder %s21, 1
      %p39 = por %p37, %p38
      %p41 = scmp.ne.s32.totalorder %s26, %s40
      %p42 = scmp.eq.s32.totalorder %s21, 0
      %p43 = por %p41, %p42
      %s44 = ssub.s32 %s15, %s22
      %p45 = scmp.eq.s32.totalorder %s44, 0
      %s47 = sadd.s32 %s46, 1
      %s48 = scalar_select %p45, %s46, %s47
      %p51 = pneg %p45
      %p52 = scmp.eq.s32.totalorder %s15, 1
      %p53 = por %p51, %p52
      %p54 = scmp.ne.s32.totalorder %s46, %s49
      %p55 = scmp.eq.s32.totalorder %s15, 0
      %p56 = por %p54, %p55
      %p57 = scmp.ne.s32.totalorder %s46, %s49
      %p58 = scmp.eq.s32.totalorder %s20, 1
      %p59 = por %p57, %p58
      %p60 = scmp.ne.s32.totalorder %s49, %s50
      %p61 = scmp.eq.s32.totalorder %s20, 0
      %p62 = por %p60, %p61
      %p63 = scmp.ne.s32.totalorder %s49, %s50
      %p64 = scmp.eq.s32.totalorder %s21, 1
      %p65 = por %p63, %p64
      %p67 = scmp.ne.s32.totalorder %s50, %s66
      %p68 = scmp.eq.s32.totalorder %s21, 0
      %p69 = por %p67, %p68
      %s70 = ssub.s32 %s15, %s22
      %p71 = scmp.eq.s32.totalorder %s70, 0
      %s73 = sadd.s32 %s72, 1
      %s74 = scalar_select %p71, %s72, %s73
      %p77 = pneg %p71
      %p78 = scmp.eq.s32.totalorder %s15, 1
      %p79 = por %p77, %p78
      %p80 = scmp.ne.s32.totalorder %s72, %s75
      %p81 = scmp.eq.s32.totalorder %s15, 0
      %p82 = por %p80, %p81
      %p83 = scmp.ne.s32.totalorder %s72, %s75
      %p84 = scmp.eq.s32.totalorder %s20, 1
      %p85 = por %p83, %p84
      %p86 = scmp.ne.s32.totalorder %s75, %s76
      %p87 = scmp.eq.s32.totalorder %s20, 0
      %p88 = por %p86, %p87
      %p89 = scmp.ne.s32.totalorder %s75, %s76
      %p90 = scmp.eq.s32.totalorder %s21, 1
      %p91 = por %p89, %p90
      %p93 = scmp.ne.s32.totalorder %s76, %s92
      %p94 = scmp.eq.s32.totalorder %s21, 0
      %p95 = por %p93, %p94
      %p96 = scmp.le.s32.totalorder 1, %s15
      %p97 = scmp.lt.s32.totalorder %s15, 3
      %p98 = pnand %p96, %p97
      %p99 = pneg %p98
      // Predicated region
      $region9: #{tpu_custom_call.1} parent=5 // pred_check
        _
      $region10: #{tpu_custom_call.1} parent=5 // pred_check_branch
        %101 = sbr.rel (%p98) target = $region12
      $region11: #{tpu_custom_call.1} parent=5 // pred_region
        %s102 = ssub.s32 %s15, 1
        // Predicated region
        $region13: #{tpu_custom_call.1} parent=11 // pred_check
          %p103 = pneg %p36
        $region14: #{tpu_custom_call.1} parent=11 // pred_check_branch
          %105 = sbr.rel (%p103) target = $region16
        $region15: #{tpu_custom_call.1} parent=11 // pred_region
          %s107 = ssub.s32 16, 16
          %108 = vsyncadd [#allocation5], %s107
          %111 = dma.hbm_to_smem %s0, 16, [#allocation2], [#allocation5]
        $region16: #{tpu_custom_call.1} parent=11 // pred_fallthru
          _
      $region12: #{tpu_custom_call.1} parent=5 // pred_fallthru
        _
      %p112 = scmp.lt.s32.totalorder %s15, 2
      // Predicated region
      $region17: #{tpu_custom_call.1} parent=5 // pred_check
        %p113 = pneg %p112
      $region18: #{tpu_custom_call.1} parent=5 // pred_check_branch
        %115 = sbr.rel (%p113) target = $region20
      $region19: #{tpu_custom_call.1} parent=5 // pred_region
        // Predicated region
        $region21: #{tpu_custom_call.1} parent=19 // pred_check
          %p116 = pneg %p56
        $region22: #{tpu_custom_call.1} parent=19 // pred_check_branch
          %118 = sbr.rel (%p116) target = $region24
        $region23: #{tpu_custom_call.1} parent=19 // pred_region
          %s119 = sand.u32 %s46, 1
          %s120 = scalar_lea.sflag [#allocation3], %s119
          %s121 = sand.u32 %s46, 1
          %s122 = smul.addr %s121, 8
          %s123 = scalar_lea.vmem [#allocation6], %s122
          %s125 = ssub.s32 128, 128
          %126 = vsyncadd %s120, %s125
          %s127 = smul.addr %s15, 128
          %s128 = scalar_lea.hbm %s1, %s127
          %s130 = sshll.u32 %s123, 4
          %s131 = int_to_ptr.vmem [resolvable:$true] %s130
          %133 = dma.hbm_to_vmem [thread:$0]  %s128, 128, %s131, %s120
        $region24: #{tpu_custom_call.1} parent=19 // pred_fallthru
          _
      $region20: #{tpu_custom_call.1} parent=5 // pred_fallthru
        _
      %p134 = scmp.le.s32.totalorder 1, %s15
      %p135 = scmp.lt.s32.totalorder %s15, 3
      %p136 = pnand %p134, %p135
      %p137 = pneg %p136
      // Predicated region
      $region25: #{tpu_custom_call.1} parent=5 // pred_check
        _
      $region26: #{tpu_custom_call.1} parent=5 // pred_check_branch
        %139 = sbr.rel (%p136) target = $region28
      $region27: #{tpu_custom_call.1} parent=5 // pred_region
        %s140 = ssub.s32 %s15, 1
        // Predicated region
        $region29: #{tpu_custom_call.1} parent=27 // pred_check
          %p141 = pneg %p36
        $region30: #{tpu_custom_call.1} parent=27 // pred_check_branch
          %143 = sbr.rel (%p141) target = $region32
        $region31: #{tpu_custom_call.1} parent=27 // pred_region
          %144 = dma.done [#allocation5], 16
        $region32: #{tpu_custom_call.1} parent=27 // pred_fallthru
          _
        %s145 = sand.u32 %s49, 1
        %s146 = scalar_lea.sflag [#allocation3], %s145
        %s147 = sand.u32 %s49, 1
        %s148 = smul.addr %s147, 8
        %s149 = scalar_lea.vmem [#allocation6], %s148
        // Predicated region
        $region33: #{tpu_custom_call.1} parent=27 // pred_check
          %p150 = pneg %p62
        $region34: #{tpu_custom_call.1} parent=27 // pred_check_branch
          %152 = sbr.rel (%p150) target = $region36
        $region35: #{tpu_custom_call.1} parent=27 // pred_region
          %153 = dma.done %s146, 128
        $region36: #{tpu_custom_call.1} parent=27 // pred_fallthru
          _
        %154 = sfence
        %p155 = pneg %p36
        %p156 = pneg %p33
        %s157 = sand.u32 %s49, 1
        %s158 = scalar_lea.sflag [#allocation3], %s157
        %s159 = sand.u32 %s49, 1
        %s160 = smul.addr %s159, 8
        %s161 = scalar_lea.vmem [#allocation6], %s160
        %p162 = pneg %p62
        %p163 = pneg %p59
        %p164 = pneg %p88
        %p165 = pneg %p85
        %s166 = sand.u32 %s75, 1
        %s167 = scalar_lea.sflag [#allocation4], %s166
        %s168 = sand.u32 %s75, 1
        %s169 = smul.addr %s168, 8
        %s170 = scalar_lea.vmem [#allocation7], %s169
        %s171 = sld [smem:[#allocation2]]
        %s172 = sld [smem:[#allocation2 + $0x1]]
        %s173 = sld [smem:[#allocation2 + $0x2]]
        %s174 = sld [smem:[#allocation2 + $0x3]]
        %s175 = sld [smem:[#allocation2 + $0x4]]
        %s176 = sld [smem:[#allocation2 + $0x5]]
        %s177 = sld [smem:[#allocation2 + $0x6]]
        %v178 = vld [vmem:[%s149] sm:$0xff]
        %v179 = vstv %s171
        %v180 = vmul.f32 %v179, %v178
        %v181 = vstv %s172
        %v182 = vadd.f32 %v180, %v181
        %v183 = vstv %s173
        %v184 = vmul.f32 %v183, %v178
        %v185 = vstv %s174
        %v186 = vadd.f32 %v184, %v185
        %v187 = vstv %s175
        %v188 = vmul.f32 %v187, %v178
        %v189 = vstv %s176
        %v190 = vadd.f32 %v188, %v189
        %vm191 = vcmask 1040384
        %v192 = vsel %vm191, %v186, -inf
        %193 = vmax.xlane.f32.xlu0 %v192
        %v194 = vpop.xlane.xlu0 %193
        %v195 = vsel %vm191, %v186, inf
        %196 = vmin.xlane.f32.xlu0 %v195
        %v197 = vpop.xlane.xlu0 %196
        %198 = vxpose.xlu0.b32.start [1/16] %v182, 128
        %199 = vxpose.xlu0.b32.cont [2/16] 0.0, 128
        %200 = vxpose.xlu0.b32.cont [3/16] 0.0, 128
        %201 = vxpose.xlu0.b32.cont [4/16] 0.0, 128
        %202 = vxpose.xlu0.b32.cont [5/16] 0.0, 128
        %203 = vxpose.xlu0.b32.cont [6/16] 0.0, 128
        %204 = vxpose.xlu0.b32.cont [7/16] 0.0, 128
        %205 = vxpose.xlu0.b32.cont [8/16] 0.0, 128
        %206 = vxpose.xlu0.b32.cont [9/16] 0.0, 128
        %207 = vxpose.xlu0.b32.cont [10/16] 0.0, 128
        %208 = vxpose.xlu0.b32.cont [11/16] 0.0, 128
        %209 = vxpose.xlu0.b32.cont [12/16] 0.0, 128
        %210 = vxpose.xlu0.b32.cont [13/16] 0.0, 128
        %211 = vxpose.xlu0.b32.cont [14/16] 0.0, 128
        %212 = vxpose.xlu0.b32.cont [15/16] 0.0, 128
        %213 = vxpose.xlu0.b32.end [16/16] 0.0, 128
        %v214 = vpop.trf.xlu0
        %v215 = vpop.trf.xlu0
        %v216 = vpop.trf.xlu0
        %v217 = vpop.trf.xlu0
        %v218 = vpop.trf.xlu0
        %v219 = vpop.trf.xlu0
        %v220 = vpop.trf.xlu0
        %v221 = vpop.trf.xlu0
        %v222 = vpop.trf.xlu0
        %v223 = vpop.trf.xlu0
        %v224 = vpop.trf.xlu0
        %v225 = vpop.trf.xlu0
        %v226 = vpop.trf.xlu0
        %v227 = vpop.trf.xlu0
        %v228 = vpop.trf.xlu0
        %v229 = vpop.trf.xlu0
        %v230 = vlaneseq
        %v231 = vshrl.u32 %v230, 7
        %v232 = vsub.s32 0, %v231
        %v233 = vrot.slane %v194, %v232
        %v234 = vmul.f32 %v214, %v233
        %v235 = vmul.f32 %v215, %v233
        %v236 = vmul.f32 %v216, %v233
        %v237 = vmul.f32 %v217, %v233
        %v238 = vmul.f32 %v218, %v233
        %v239 = vmul.f32 %v219, %v233
        %v240 = vmul.f32 %v220, %v233
        %v241 = vmul.f32 %v221, %v233
        %v242 = vmul.f32 %v222, %v233
        %v243 = vmul.f32 %v223, %v233
        %v244 = vmul.f32 %v224, %v233
        %v245 = vmul.f32 %v225, %v233
        %v246 = vmul.f32 %v226, %v233
        %v247 = vmul.f32 %v227, %v233
        %v248 = vmul.f32 %v228, %v233
        %v249 = vmul.f32 %v229, %v233
        %v250 = vlaneseq
        %v251 = vshrl.u32 %v250, 7
        %v252 = vsub.s32 0, %v251
        %v253 = vrot.slane %v197, %v252
        %v254 = vmul.f32 %v214, %v253
        %v255 = vmul.f32 %v215, %v253
        %v256 = vmul.f32 %v216, %v253
        %v257 = vmul.f32 %v217, %v253
        %v258 = vmul.f32 %v218, %v253
        %v259 = vmul.f32 %v219, %v253
        %v260 = vmul.f32 %v220, %v253
        %v261 = vmul.f32 %v221, %v253
        %v262 = vmul.f32 %v222, %v253
        %v263 = vmul.f32 %v223, %v253
        %v264 = vmul.f32 %v224, %v253
        %v265 = vmul.f32 %v225, %v253
        %v266 = vmul.f32 %v226, %v253
        %v267 = vmul.f32 %v227, %v253
        %v268 = vmul.f32 %v228, %v253
        %v269 = vmul.f32 %v229, %v253
        %v270 = vmax.f32 %v234, %v254
        %v271 = vmax.f32 %v235, %v255
        %v272 = vmax.f32 %v236, %v256
        %v273 = vmax.f32 %v237, %v257
        %v274 = vmax.f32 %v238, %v258
        %v275 = vmax.f32 %v239, %v259
        %v276 = vmax.f32 %v240, %v260
        %v277 = vmax.f32 %v241, %v261
        %v278 = vmax.f32 %v242, %v262
        %v279 = vmax.f32 %v243, %v263
        %v280 = vmax.f32 %v244, %v264
        %v281 = vmax.f32 %v245, %v265
        %v282 = vmax.f32 %v246, %v266
        %v283 = vmax.f32 %v247, %v267
        %v284 = vmax.f32 %v248, %v268
        %v285 = vmax.f32 %v249, %v269
        %287 = vset.pattern.permute.xlu0 0
        %288 = vperm.xlu0 %287, %v214
        %v289 = vpop.permute.xlu0 %288
        %292 = vset.pattern.permute.xlu0 0
        %293 = vperm.xlu0 %292, %v215
        %v294 = vpop.permute.xlu0 %293
        %297 = vset.pattern.permute.xlu0 0
        %298 = vperm.xlu0 %297, %v216
        %v299 = vpop.permute.xlu0 %298
        %302 = vset.pattern.permute.xlu0 0
        %303 = vperm.xlu0 %302, %v217
        %v304 = vpop.permute.xlu0 %303
        %307 = vset.pattern.permute.xlu0 0
        %308 = vperm.xlu0 %307, %v218
        %v309 = vpop.permute.xlu0 %308
        %312 = vset.pattern.permute.xlu0 0
        %313 = vperm.xlu0 %312, %v219
        %v314 = vpop.permute.xlu0 %313
        %317 = vset.pattern.permute.xlu0 0
        %318 = vperm.xlu0 %317, %v220
        %v319 = vpop.permute.xlu0 %318
        %322 = vset.pattern.permute.xlu0 0
        %323 = vperm.xlu0 %322, %v221
        %v324 = vpop.permute.xlu0 %323
        %327 = vset.pattern.permute.xlu0 0
        %328 = vperm.xlu0 %327, %v222
        %v329 = vpop.permute.xlu0 %328
        %332 = vset.pattern.permute.xlu0 0
        %333 = vperm.xlu0 %332, %v223
        %v334 = vpop.permute.xlu0 %333
        %337 = vset.pattern.permute.xlu0 0
        %338 = vperm.xlu0 %337, %v224
        %v339 = vpop.permute.xlu0 %338
        %342 = vset.pattern.permute.xlu0 0
        %343 = vperm.xlu0 %342, %v225
        %v344 = vpop.permute.xlu0 %343
        %347 = vset.pattern.permute.xlu0 0
        %348 = vperm.xlu0 %347, %v226
        %v349 = vpop.permute.xlu0 %348
        %352 = vset.pattern.permute.xlu0 0
        %353 = vperm.xlu0 %352, %v227
        %v354 = vpop.permute.xlu0 %353
        %357 = vset.pattern.permute.xlu0 0
        %358 = vperm.xlu0 %357, %v228
        %v359 = vpop.permute.xlu0 %358
        %362 = vset.pattern.permute.xlu0 0
        %363 = vperm.xlu0 %362, %v229
        %v364 = vpop.permute.xlu0 %363
        %v366 = vlaneseq
        %v367 = vshrl.u32 %v366, 7
        %v368 = vsub.s32 0, %v367
        %v369 = vrot.slane %v186, %v368
        %v370 = vmul.f32 %v289, %v369
        %v371 = vmul.f32 %v294, %v369
        %v372 = vmul.f32 %v299, %v369
        %v373 = vmul.f32 %v304, %v369
        %v374 = vmul.f32 %v309, %v369
        %v375 = vmul.f32 %v314, %v369
        %v376 = vmul.f32 %v319, %v369
        %v377 = vmul.f32 %v324, %v369
        %v378 = vmul.f32 %v329, %v369
        %v379 = vmul.f32 %v334, %v369
        %v380 = vmul.f32 %v339, %v369
        %v381 = vmul.f32 %v344, %v369
        %v382 = vmul.f32 %v349, %v369
        %v383 = vmul.f32 %v354, %v369
        %v384 = vmul.f32 %v359, %v369
        %v385 = vmul.f32 %v364, %v369
        %387 = vset.pattern.permute.xlu0 0
        %388 = vperm.xlu0 %387, %v270
        %v389 = vpop.permute.xlu0 %388
        %392 = vset.pattern.permute.xlu0 0
        %393 = vperm.xlu0 %392, %v271
        %v394 = vpop.permute.xlu0 %393
        %397 = vset.pattern.permute.xlu0 0
        %398 = vperm.xlu0 %397, %v272
        %v399 = vpop.permute.xlu0 %398
        %402 = vset.pattern.permute.xlu0 0
        %403 = vperm.xlu0 %402, %v273
        %v404 = vpop.permute.xlu0 %403
        %407 = vset.pattern.permute.xlu0 0
        %408 = vperm.xlu0 %407, %v274
        %v409 = vpop.permute.xlu0 %408
        %412 = vset.pattern.permute.xlu0 0
        %413 = vperm.xlu0 %412, %v275
        %v414 = vpop.permute.xlu0 %413
        %417 = vset.pattern.permute.xlu0 0
        %418 = vperm.xlu0 %417, %v276
        %v419 = vpop.permute.xlu0 %418
        %422 = vset.pattern.permute.xlu0 0
        %423 = vperm.xlu0 %422, %v277
        %v424 = vpop.permute.xlu0 %423
        %427 = vset.pattern.permute.xlu0 0
        %428 = vperm.xlu0 %427, %v278
        %v429 = vpop.permute.xlu0 %428
        %432 = vset.pattern.permute.xlu0 0
        %433 = vperm.xlu0 %432, %v279
        %v434 = vpop.permute.xlu0 %433
        %437 = vset.pattern.permute.xlu0 0
        %438 = vperm.xlu0 %437, %v280
        %v439 = vpop.permute.xlu0 %438
        %442 = vset.pattern.permute.xlu0 0
        %443 = vperm.xlu0 %442, %v281
        %v444 = vpop.permute.xlu0 %443
        %447 = vset.pattern.permute.xlu0 0
        %448 = vperm.xlu0 %447, %v282
        %v449 = vpop.permute.xlu0 %448
        %452 = vset.pattern.permute.xlu0 0
        %453 = vperm.xlu0 %452, %v283
        %v454 = vpop.permute.xlu0 %453
        %457 = vset.pattern.permute.xlu0 0
        %458 = vperm.xlu0 %457, %v284
        %v459 = vpop.permute.xlu0 %458
        %462 = vset.pattern.permute.xlu0 0
        %463 = vperm.xlu0 %462, %v285
        %v464 = vpop.permute.xlu0 %463
        %v466 = vsub.f32 %v370, %v389
        %v467 = vsub.f32 %v371, %v394
        %v468 = vsub.f32 %v372, %v399
        %v469 = vsub.f32 %v373, %v404
        %v470 = vsub.f32 %v374, %v409
        %v471 = vsub.f32 %v375, %v414
        %v472 = vsub.f32 %v376, %v419
        %v473 = vsub.f32 %v377, %v424
        %v474 = vsub.f32 %v378, %v429
        %v475 = vsub.f32 %v379, %v434
        %v476 = vsub.f32 %v380, %v439
        %v477 = vsub.f32 %v381, %v444
        %v478 = vsub.f32 %v382, %v449
        %v479 = vsub.f32 %v383, %v454
        %v480 = vsub.f32 %v384, %v459
        %v481 = vsub.f32 %v385, %v464
        %v482 = vmul.f32 %v466, 1.442695
        %v483 = vpow.pop %v482
        %v484 = vmul.f32 %v467, 1.442695
        %v485 = vpow.pop %v484
        %v486 = vmul.f32 %v468, 1.442695
        %v487 = vpow.pop %v486
        %v488 = vmul.f32 %v469, 1.442695
        %v489 = vpow.pop %v488
        %v490 = vmul.f32 %v470, 1.442695
        %v491 = vpow.pop %v490
        %v492 = vmul.f32 %v471, 1.442695
        %v493 = vpow.pop %v492
        %v494 = vmul.f32 %v472, 1.442695
        %v495 = vpow.pop %v494
        %v496 = vmul.f32 %v473, 1.442695
        %v497 = vpow.pop %v496
        %v498 = vmul.f32 %v474, 1.442695
        %v499 = vpow.pop %v498
        %v500 = vmul.f32 %v475, 1.442695
        %v501 = vpow.pop %v500
        %v502 = vmul.f32 %v476, 1.442695
        %v503 = vpow.pop %v502
        %v504 = vmul.f32 %v477, 1.442695
        %v505 = vpow.pop %v504
        %v506 = vmul.f32 %v478, 1.442695
        %v507 = vpow.pop %v506
        %v508 = vmul.f32 %v479, 1.442695
        %v509 = vpow.pop %v508
        %v510 = vmul.f32 %v480, 1.442695
        %v511 = vpow.pop %v510
        %v512 = vmul.f32 %v481, 1.442695
        %v513 = vpow.pop %v512
        %514 = vadd.xlane.f32.xlu0 %v483
        %v515 = vpop.xlane.xlu0 %514
        %516 = vadd.xlane.f32.xlu0 %v485
        %v517 = vpop.xlane.xlu0 %516
        %518 = vadd.xlane.f32.xlu0 %v487
        %v519 = vpop.xlane.xlu0 %518
        %520 = vadd.xlane.f32.xlu0 %v489
        %v521 = vpop.xlane.xlu0 %520
        %522 = vadd.xlane.f32.xlu0 %v491
        %v523 = vpop.xlane.xlu0 %522
        %524 = vadd.xlane.f32.xlu0 %v493
        %v525 = vpop.xlane.xlu0 %524
        %526 = vadd.xlane.f32.xlu0 %v495
        %v527 = vpop.xlane.xlu0 %526
        %528 = vadd.xlane.f32.xlu0 %v497
        %v529 = vpop.xlane.xlu0 %528
        %530 = vadd.xlane.f32.xlu0 %v499
        %v531 = vpop.xlane.xlu0 %530
        %532 = vadd.xlane.f32.xlu0 %v501
        %v533 = vpop.xlane.xlu0 %532
        %534 = vadd.xlane.f32.xlu0 %v503
        %v535 = vpop.xlane.xlu0 %534
        %536 = vadd.xlane.f32.xlu0 %v505
        %v537 = vpop.xlane.xlu0 %536
        %538 = vadd.xlane.f32.xlu0 %v507
        %v539 = vpop.xlane.xlu0 %538
        %540 = vadd.xlane.f32.xlu0 %v509
        %v541 = vpop.xlane.xlu0 %540
        %542 = vadd.xlane.f32.xlu0 %v511
        %v543 = vpop.xlane.xlu0 %542
        %544 = vadd.xlane.f32.xlu0 %v513
        %v545 = vpop.xlane.xlu0 %544
        %v546 = vrcp.pop %v515
        %v547 = vrcp.pop %v517
        %v548 = vrcp.pop %v519
        %v549 = vrcp.pop %v521
        %v550 = vrcp.pop %v523
        %v551 = vrcp.pop %v525
        %v552 = vrcp.pop %v527
        %v553 = vrcp.pop %v529
        %v554 = vrcp.pop %v531
        %v555 = vrcp.pop %v533
        %v556 = vrcp.pop %v535
        %v557 = vrcp.pop %v537
        %v558 = vrcp.pop %v539
        %v559 = vrcp.pop %v541
        %v560 = vrcp.pop %v543
        %v561 = vrcp.pop %v545
        %v562 = vmul.f32 %v483, %v546
        %v563 = vmul.f32 %v485, %v547
        %v564 = vmul.f32 %v487, %v548
        %v565 = vmul.f32 %v489, %v549
        %v566 = vmul.f32 %v491, %v550
        %v567 = vmul.f32 %v493, %v551
        %v568 = vmul.f32 %v495, %v552
        %v569 = vmul.f32 %v497, %v553
        %v570 = vmul.f32 %v499, %v554
        %v571 = vmul.f32 %v501, %v555
        %v572 = vmul.f32 %v503, %v556
        %v573 = vmul.f32 %v505, %v557
        %v574 = vmul.f32 %v507, %v558
        %v575 = vmul.f32 %v509, %v559
        %v576 = vmul.f32 %v511, %v560
        %v577 = vmul.f32 %v513, %v561
        %578 = vmatprep.subr.mxu0 0.0
        %579 = vmatpush1.msra.mxu0 %v562
        %580 = vmatprep.subr.mxu0 0.0
        %581 = vmatpush1.msra.mxu0 %v563
        %582 = vmatprep.subr.mxu0 0.0
        %583 = vmatpush1.msra.mxu0 %v564
        %584 = vmatprep.subr.mxu0 0.0
        %585 = vmatpush1.msra.mxu0 %v565
        %586 = vmatprep.subr.mxu0 0.0
        %587 = vmatpush1.msra.mxu0 %v566
        %588 = vmatprep.subr.mxu0 0.0
        %589 = vmatpush1.msra.mxu0 %v567
        %590 = vmatprep.subr.mxu0 0.0
        %591 = vmatpush1.msra.mxu0 %v568
        %592 = vmatprep.subr.mxu0 0.0
        %593 = vmatpush1.msra.mxu0 %v569
        %594 = vmatprep.subr.mxu0 0.0
        %595 = vmatpush1.msra.mxu0 %v570
        %596 = vmatprep.subr.mxu0 0.0
        %597 = vmatpush1.msra.mxu0 %v571
        %598 = vmatprep.subr.mxu0 0.0
        %599 = vmatpush1.msra.mxu0 %v572
        %600 = vmatprep.subr.mxu0 0.0
        %601 = vmatpush1.msra.mxu0 %v573
        %602 = vmatprep.subr.mxu0 0.0
        %603 = vmatpush1.msra.mxu0 %v574
        %604 = vmatprep.subr.mxu0 0.0
        %605 = vmatpush1.msra.mxu0 %v575
        %606 = vmatprep.subr.mxu0 0.0
        %607 = vmatpush1.msra.mxu0 %v576
        %608 = vmatprep.subr.mxu0 0.0
        %609 = vmatpush1.msra.mxu0 %v577
        %610 = vmatprep.subr.mxu0 0.0
        %611 = vmatpush1.msra.mxu0 0.0
        %612 = vmatprep.subr.mxu0 0.0
        %613 = vmatpush1.msra.mxu0 0.0
        %614 = vmatprep.subr.mxu0 0.0
        %615 = vmatpush1.msra.mxu0 0.0
        %616 = vmatprep.subr.mxu0 0.0
        %617 = vmatpush1.msra.mxu0 0.0
        %618 = vmatprep.subr.mxu0 0.0
        %619 = vmatpush1.msra.mxu0 0.0
        %620 = vmatprep.subr.mxu0 0.0
        %621 = vmatpush1.msra.mxu0 0.0
        %622 = vmatprep.subr.mxu0 0.0
        %623 = vmatpush1.msra.mxu0 0.0
        %624 = vmatprep.subr.mxu0 0.0
        %625 = vmatpush1.msra.mxu0 0.0
        %626 = vmatprep.subr.mxu0 0.0
        %627 = vmatpush1.msra.mxu0 0.0
        %628 = vmatprep.subr.mxu0 0.0
        %629 = vmatpush1.msra.mxu0 0.0
        %630 = vmatprep.subr.mxu0 0.0
        %631 = vmatpush1.msra.mxu0 0.0
        %632 = vmatprep.subr.mxu0 0.0
        %633 = vmatpush1.msra.mxu0 0.0
        %634 = vmatprep.subr.mxu0 0.0
        %635 = vmatpush1.msra.mxu0 0.0
        %636 = vmatprep.subr.mxu0 0.0
        %637 = vmatpush1.msra.mxu0 0.0
        %638 = vmatprep.subr.mxu0 0.0
        %639 = vmatpush1.msra.mxu0 0.0
        %640 = vmatprep.subr.mxu0 0.0
        %641 = vmatpush1.msra.mxu0 0.0
        %642 = vmatprep.mubr.f32.mxu0 0.0
        %643 = vmatmul.mubr.f32.gmra.mrb[0].mxu0 %v190
        %v644 = vpop.f32.mrb[0].mxu0
        %v645 = vadd.f32 0.0, %v644
        %v646 = vpop.f32.mrb[0].mxu0
        %647 = vdwg.mxu0
        %v648 = vstv %s177
        %v649 = vmul.f32 %v648, %v645
        %v650 = vadd.f32 %v649, %v178
        %651 = vst [vmem:[%s170] sm:$0x1] %v650
        %vm652 = vcmask 1041409
        %v653 = vsel %vm652, %v186, -inf
        %654 = vmax.xlane.f32.xlu0 %v653
        %v655 = vpop.xlane.xlu0 %654
        %v656 = vsel %vm652, %v186, inf
        %657 = vmin.xlane.f32.xlu0 %v656
        %v658 = vpop.xlane.xlu0 %657
        %v660 = vrot.slane %v182, 1
        %662 = vxpose.xlu0.b32.start [1/16] %v660, 128
        %663 = vxpose.xlu0.b32.cont [2/16] 0.0, 128
        %664 = vxpose.xlu0.b32.cont [3/16] 0.0, 128
        %665 = vxpose.xlu0.b32.cont [4/16] 0.0, 128
        %666 = vxpose.xlu0.b32.cont [5/16] 0.0, 128
        %667 = vxpose.xlu0.b32.cont [6/16] 0.0, 128
        %668 = vxpose.xlu0.b32.cont [7/16] 0.0, 128
        %669 = vxpose.xlu0.b32.cont [8/16] 0.0, 128
        %670 = vxpose.xlu0.b32.cont [9/16] 0.0, 128
        %671 = vxpose.xlu0.b32.cont [10/16] 0.0, 128
        %672 = vxpose.xlu0.b32.cont [11/16] 0.0, 128
        %673 = vxpose.xlu0.b32.cont [12/16] 0.0, 128
        %674 = vxpose.xlu0.b32.cont [13/16] 0.0, 128
        %675 = vxpose.xlu0.b32.cont [14/16] 0.0, 128
        %676 = vxpose.xlu0.b32.cont [15/16] 0.0, 128
        %677 = vxpose.xlu0.b32.end [16/16] 0.0, 128
        %v678 = vpop.trf.xlu0
        %v679 = vpop.trf.xlu0
        %v680 = vpop.trf.xlu0
        %v681 = vpop.trf.xlu0
        %v682 = vpop.trf.xlu0
        %v683 = vpop.trf.xlu0
        %v684 = vpop.trf.xlu0
        %v685 = vpop.trf.xlu0
        %v686 = vpop.trf.xlu0
        %v687 = vpop.trf.xlu0
        %v688 = vpop.trf.xlu0
        %v689 = vpop.trf.xlu0
        %v690 = vpop.trf.xlu0
        %v691 = vpop.trf.xlu0
        %v692 = vpop.trf.xlu0
        %v693 = vpop.trf.xlu0
        %v694 = vlaneseq
        %v695 = vshrl.u32 %v694, 7
        %v696 = vsub.s32 1, %v695
        %v697 = vrot.slane %v655, %v696
        %v698 = vmul.f32 %v678, %v697
        %v699 = vmul.f32 %v679, %v697
        %v700 = vmul.f32 %v680, %v697
        %v701 = vmul.f32 %v681, %v697
        %v702 = vmul.f32 %v682, %v697
        %v703 = vmul.f32 %v683, %v697
        %v704 = vmul.f32 %v684, %v697
        %v705 = vmul.f32 %v685, %v697
        %v706 = vmul.f32 %v686, %v697
        %v707 = vmul.f32 %v687, %v697
        %v708 = vmul.f32 %v688, %v697
        %v709 = vmul.f32 %v689, %v697
        %v710 = vmul.f32 %v690, %v697
        %v711 = vmul.f32 %v691, %v697
        %v712 = vmul.f32 %v692, %v697
        %v713 = vmul.f32 %v693, %v697
        %v714 = vlaneseq
        %v715 = vshrl.u32 %v714, 7
        %v716 = vsub.s32 1, %v715
        %v717 = vrot.slane %v658, %v716
        %v718 = vmul.f32 %v678, %v717
        %v719 = vmul.f32 %v679, %v717
        %v720 = vmul.f32 %v680, %v717
        %v721 = vmul.f32 %v681, %v717
        %v722 = vmul.f32 %v682, %v717
        %v723 = vmul.f32 %v683, %v717
        %v724 = vmul.f32 %v684, %v717
        %v725 = vmul.f32 %v685, %v717
        %v726 = vmul.f32 %v686, %v717
        %v727 = vmul.f32 %v687, %v717
        %v728 = vmul.f32 %v688, %v717
        %v729 = vmul.f32 %v689, %v717
        %v730 = vmul.f32 %v690, %v717
        %v731 = vmul.f32 %v691, %v717
        %v732 = vmul.f32 %v692, %v717
        %v733 = vmul.f32 %v693, %v717
        %v734 = vmax.f32 %v698, %v718
        %v735 = vmax.f32 %v699, %v719
        %v736 = vmax.f32 %v700, %v720
        %v737 = vmax.f32 %v701, %v721
        %v738 = vmax.f32 %v702, %v722
        %v739 = vmax.f32 %v703, %v723
        %v740 = vmax.f32 %v704, %v724
        %v741 = vmax.f32 %v705, %v725
        %v742 = vmax.f32 %v706, %v726
        %v743 = vmax.f32 %v707, %v727
        %v744 = vmax.f32 %v708, %v728
        %v745 = vmax.f32 %v709, %v729
        %v746 = vmax.f32 %v710, %v730
        %v747 = vmax.f32 %v711, %v731
        %v748 = vmax.f32 %v712, %v732
        %v749 = vmax.f32 %v713, %v733
        %751 = vset.pattern.permute.xlu0 0
        %752 = vperm.xlu0 %751, %v678
        %v753 = vpop.permute.xlu0 %752
        %756 = vset.pattern.permute.xlu0 0
        %757 = vperm.xlu0 %756, %v679
        %v758 = vpop.permute.xlu0 %757
        %761 = vset.pattern.permute.xlu0 0
        %762 = vperm.xlu0 %761, %v680
        %v763 = vpop.permute.xlu0 %762
        %766 = vset.pattern.permute.xlu0 0
        %767 = vperm.xlu0 %766, %v681
        %v768 = vpop.permute.xlu0 %767
        %771 = vset.pattern.permute.xlu0 0
        %772 = vperm.xlu0 %771, %v682
        %v773 = vpop.permute.xlu0 %772
        %776 = vset.pattern.permute.xlu0 0
        %777 = vperm.xlu0 %776, %v683
        %v778 = vpop.permute.xlu0 %777
        %781 = vset.pattern.permute.xlu0 0
        %782 = vperm.xlu0 %781, %v684
        %v783 = vpop.permute.xlu0 %782
        %786 = vset.pattern.permute.xlu0 0
        %787 = vperm.xlu0 %786, %v685
        %v788 = vpop.permute.xlu0 %787
        %791 = vset.pattern.permute.xlu0 0
        %792 = vperm.xlu0 %791, %v686
        %v793 = vpop.permute.xlu0 %792
        %796 = vset.pattern.permute.xlu0 0
        %797 = vperm.xlu0 %796, %v687
        %v798 = vpop.permute.xlu0 %797
        %801 = vset.pattern.permute.xlu0 0
        %802 = vperm.xlu0 %801, %v688
        %v803 = vpop.permute.xlu0 %802
        %806 = vset.pattern.permute.xlu0 0
        %807 = vperm.xlu0 %806, %v689
        %v808 = vpop.permute.xlu0 %807
        %811 = vset.pattern.permute.xlu0 0
        %812 = vperm.xlu0 %811, %v690
        %v813 = vpop.permute.xlu0 %812
        %816 = vset.pattern.permute.xlu0 0
        %817 = vperm.xlu0 %816, %v691
        %v818 = vpop.permute.xlu0 %817
        %821 = vset.pattern.permute.xlu0 0
        %822 = vperm.xlu0 %821, %v692
        %v823 = vpop.permute.xlu0 %822
        %826 = vset.pattern.permute.xlu0 0
        %827 = vperm.xlu0 %826, %v693
        %v828 = vpop.permute.xlu0 %827
        %v830 = vlaneseq
        %v831 = vshrl.u32 %v830, 7
        %v832 = vsub.s32 1, %v831
        %v833 = vrot.slane %v186, %v832
        %v834 = vmul.f32 %v753, %v833
        %v835 = vmul.f32 %v758, %v833
        %v836 = vmul.f32 %v763, %v833
        %v837 = vmul.f32 %v768, %v833
        %v838 = vmul.f32 %v773, %v833
        %v839 = vmul.f32 %v778, %v833
        %v840 = vmul.f32 %v783, %v833
        %v841 = vmul.f32 %v788, %v833
        %v842 = vmul.f32 %v793, %v833
        %v843 = vmul.f32 %v798, %v833
        %v844 = vmul.f32 %v803, %v833
        %v845 = vmul.f32 %v808, %v833
        %v846 = vmul.f32 %v813, %v833
        %v847 = vmul.f32 %v818, %v833
        %v848 = vmul.f32 %v823, %v833
        %v849 = vmul.f32 %v828, %v833
        %851 = vset.pattern.permute.xlu0 0
        %852 = vperm.xlu0 %851, %v734
        %v853 = vpop.permute.xlu0 %852
        %856 = vset.pattern.permute.xlu0 0
        %857 = vperm.xlu0 %856, %v735
        %v858 = vpop.permute.xlu0 %857
        %861 = vset.pattern.permute.xlu0 0
        %862 = vperm.xlu0 %861, %v736
        %v863 = vpop.permute.xlu0 %862
        %866 = vset.pattern.permute.xlu0 0
        %867 = vperm.xlu0 %866, %v737
        %v868 = vpop.permute.xlu0 %867
        %871 = vset.pattern.permute.xlu0 0
        %872 = vperm.xlu0 %871, %v738
        %v873 = vpop.permute.xlu0 %872
        %876 = vset.pattern.permute.xlu0 0
        %877 = vperm.xlu0 %876, %v739
        %v878 = vpop.permute.xlu0 %877
        %881 = vset.pattern.permute.xlu0 0
        %882 = vperm.xlu0 %881, %v740
        %v883 = vpop.permute.xlu0 %882
        %886 = vset.pattern.permute.xlu0 0
        %887 = vperm.xlu0 %886, %v741
        %v888 = vpop.permute.xlu0 %887
        %891 = vset.pattern.permute.xlu0 0
        %892 = vperm.xlu0 %891, %v742
        %v893 = vpop.permute.xlu0 %892
        %896 = vset.pattern.permute.xlu0 0
        %897 = vperm.xlu0 %896, %v743
        %v898 = vpop.permute.xlu0 %897
        %901 = vset.pattern.permute.xlu0 0
        %902 = vperm.xlu0 %901, %v744
        %v903 = vpop.permute.xlu0 %902
        %906 = vset.pattern.permute.xlu0 0
        %907 = vperm.xlu0 %906, %v745
        %v908 = vpop.permute.xlu0 %907
        %911 = vset.pattern.permute.xlu0 0
        %912 = vperm.xlu0 %911, %v746
        %v913 = vpop.permute.xlu0 %912
        %916 = vset.pattern.permute.xlu0 0
        %917 = vperm.xlu0 %916, %v747
        %v918 = vpop.permute.xlu0 %917
        %921 = vset.pattern.permute.xlu0 0
        %922 = vperm.xlu0 %921, %v748
        %v923 = vpop.permute.xlu0 %922
        %926 = vset.pattern.permute.xlu0 0
        %927 = vperm.xlu0 %926, %v749
        %v928 = vpop.permute.xlu0 %927
        %v930 = vsub.f32 %v834, %v853
        %v931 = vsub.f32 %v835, %v858
        %v932 = vsub.f32 %v836, %v863
        %v933 = vsub.f32 %v837, %v868
        %v934 = vsub.f32 %v838, %v873
        %v935 = vsub.f32 %v839, %v878
        %v936 = vsub.f32 %v840, %v883
        %v937 = vsub.f32 %v841, %v888
        %v938 = vsub.f32 %v842, %v893
        %v939 = vsub.f32 %v843, %v898
        %v940 = vsub.f32 %v844, %v903
        %v941 = vsub.f32 %v845, %v908
        %v942 = vsub.f32 %v846, %v913
        %v943 = vsub.f32 %v847, %v918
        %v944 = vsub.f32 %v848, %v923
        %v945 = vsub.f32 %v849, %v928
        %v946 = vmul.f32 %v930, 1.442695
        %v947 = vpow.pop %v946
        %v948 = vmul.f32 %v931, 1.442695
        %v949 = vpow.pop %v948
        %v950 = vmul.f32 %v932, 1.442695
        %v951 = vpow.pop %v950
        %v952 = vmul.f32 %v933, 1.442695
        %v953 = vpow.pop %v952
        %v954 = vmul.f32 %v934, 1.442695
        %v955 = vpow.pop %v954
        %v956 = vmul.f32 %v935, 1.442695
        %v957 = vpow.pop %v956
        %v958 = vmul.f32 %v936, 1.442695
        %v959 = vpow.pop %v958
        %v960 = vmul.f32 %v937, 1.442695
        %v961 = vpow.pop %v960
        %v962 = vmul.f32 %v938, 1.442695
        %v963 = vpow.pop %v962
        %v964 = vmul.f32 %v939, 1.442695
        %v965 = vpow.pop %v964
        %v966 = vmul.f32 %v940, 1.442695
        %v967 = vpow.pop %v966
        %v968 = vmul.f32 %v941, 1.442695
        %v969 = vpow.pop %v968
        %v970 = vmul.f32 %v942, 1.442695
        %v971 = vpow.pop %v970
        %v972 = vmul.f32 %v943, 1.442695
        %v973 = vpow.pop %v972
        %v974 = vmul.f32 %v944, 1.442695
        %v975 = vpow.pop %v974
        %v976 = vmul.f32 %v945, 1.442695
        %v977 = vpow.pop %v976
        %978 = vadd.xlane.f32.xlu0 %v947
        %v979 = vpop.xlane.xlu0 %978
        %980 = vadd.xlane.f32.xlu0 %v949
        %v981 = vpop.xlane.xlu0 %980
        %982 = vadd.xlane.f32.xlu0 %v951
        %v983 = vpop.xlane.xlu0 %982
        %984 = vadd.xlane.f32.xlu0 %v953
        %v985 = vpop.xlane.xlu0 %984
        %986 = vadd.xlane.f32.xlu0 %v955
        %v987 = vpop.xlane.xlu0 %986
        %988 = vadd.xlane.f32.xlu0 %v957
        %v989 = vpop.xlane.xlu0 %988
        %990 = vadd.xlane.f32.xlu0 %v959
        %v991 = vpop.xlane.xlu0 %990
        %992 = vadd.xlane.f32.xlu0 %v961
        %v993 = vpop.xlane.xlu0 %992
        %994 = vadd.xlane.f32.xlu0 %v963
        %v995 = vpop.xlane.xlu0 %994
        %996 = vadd.xlane.f32.xlu0 %v965
        %v997 = vpop.xlane.xlu0 %996
        %998 = vadd.xlane.f32.xlu0 %v967
        %v999 = vpop.xlane.xlu0 %998
        %1000 = vadd.xlane.f32.xlu0 %v969
        %v1001 = vpop.xlane.xlu0 %1000
        %1002 = vadd.xlane.f32.xlu0 %v971
        %v1003 = vpop.xlane.xlu0 %1002
        %1004 = vadd.xlane.f32.xlu0 %v973
        %v1005 = vpop.xlane.xlu0 %1004
        %1006 = vadd.xlane.f32.xlu0 %v975
        %v1007 = vpop.xlane.xlu0 %1006
        %1008 = vadd.xlane.f32.xlu0 %v977
        %v1009 = vpop.xlane.xlu0 %1008
        %v1010 = vrcp.pop %v979
        %v1011 = vrcp.pop %v981
        %v1012 = vrcp.pop %v983
        %v1013 = vrcp.pop %v985
        %v1014 = vrcp.pop %v987
        %v1015 = vrcp.pop %v989
        %v1016 = vrcp.pop %v991
        %v1017 = vrcp.pop %v993
        %v1018 = vrcp.pop %v995
        %v1019 = vrcp.pop %v997
        %v1020 = vrcp.pop %v999
        %v1021 = vrcp.pop %v1001
        %v1022 = vrcp.pop %v1003
        %v1023 = vrcp.pop %v1005
        %v1024 = vrcp.pop %v1007
        %v1025 = vrcp.pop %v1009
        %v1026 = vmul.f32 %v947, %v1010
        %v1027 = vmul.f32 %v949, %v1011
        %v1028 = vmul.f32 %v951, %v1012
        %v1029 = vmul.f32 %v953, %v1013
        %v1030 = vmul.f32 %v955, %v1014
        %v1031 = vmul.f32 %v957, %v1015
        %v1032 = vmul.f32 %v959, %v1016
        %v1033 = vmul.f32 %v961, %v1017
        %v1034 = vmul.f32 %v963, %v1018
        %v1035 = vmul.f32 %v965, %v1019
        %v1036 = vmul.f32 %v967, %v1020
        %v1037 = vmul.f32 %v969, %v1021
        %v1038 = vmul.f32 %v971, %v1022
        %v1039 = vmul.f32 %v973, %v1023
        %v1040 = vmul.f32 %v975, %v1024
        %v1041 = vmul.f32 %v977, %v1025
        %v1043 = vrot.slane %v190, 1
        %1045 = vmatprep.subr.mxu0 0.0
        %1046 = vmatpush1.msra.mxu0 %v1026
        %1047 = vmatprep.subr.mxu0 0.0
        %1048 = vmatpush1.msra.mxu0 %v1027
        %1049 = vmatprep.subr.mxu0 0.0
        %1050 = vmatpush1.msra.mxu0 %v1028
        %1051 = vmatprep.subr.mxu0 0.0
        %1052 = vmatpush1.msra.mxu0 %v1029
        %1053 = vmatprep.subr.mxu0 0.0
        %1054 = vmatpush1.msra.mxu0 %v1030
        %1055 = vmatprep.subr.mxu0 0.0
        %1056 = vmatpush1.msra.mxu0 %v1031
        %1057 = vmatprep.subr.mxu0 0.0
        %1058 = vmatpush1.msra.mxu0 %v1032
        %1059 = vmatprep.subr.mxu0 0.0
        %1060 = vmatpush1.msra.mxu0 %v1033
        %1061 = vmatprep.subr.mxu0 0.0
        %1062 = vmatpush1.msra.mxu0 %v1034
        %1063 = vmatprep.subr.mxu0 0.0
        %1064 = vmatpush1.msra.mxu0 %v1035
        %1065 = vmatprep.subr.mxu0 0.0
        %1066 = vmatpush1.msra.mxu0 %v1036
        %1067 = vmatprep.subr.mxu0 0.0
        %1068 = vmatpush1.msra.mxu0 %v1037
        %1069 = vmatprep.subr.mxu0 0.0
        %1070 = vmatpush1.msra.mxu0 %v1038
        %1071 = vmatprep.subr.mxu0 0.0
        %1072 = vmatpush1.msra.mxu0 %v1039
        %1073 = vmatprep.subr.mxu0 0.0
        %1074 = vmatpush1.msra.mxu0 %v1040
        %1075 = vmatprep.subr.mxu0 0.0
        %1076 = vmatpush1.msra.mxu0 %v1041
        %1077 = vmatprep.subr.mxu0 0.0
        %1078 = vmatpush1.msra.mxu0 0.0
        %1079 = vmatprep.subr.mxu0 0.0
        %1080 = vmatpush1.msra.mxu0 0.0
        %1081 = vmatprep.subr.mxu0 0.0
        %1082 = vmatpush1.msra.mxu0 0.0
        %1083 = vmatprep.subr.mxu0 0.0
        %1084 = vmatpush1.msra.mxu0 0.0
        %1085 = vmatprep.subr.mxu0 0.0
        %1086 = vmatpush1.msra.mxu0 0.0
        %1087 = vmatprep.subr.mxu0 0.0
        %1088 = vmatpush1.msra.mxu0 0.0
        %1089 = vmatprep.subr.mxu0 0.0
        %1090 = vmatpush1.msra.mxu0 0.0
        %1091 = vmatprep.subr.mxu0 0.0
        %1092 = vmatpush1.msra.mxu0 0.0
        %1093 = vmatprep.subr.mxu0 0.0
        %1094 = vmatpush1.msra.mxu0 0.0
        %1095 = vmatprep.subr.mxu0 0.0
        %1096 = vmatpush1.msra.mxu0 0.0
        %1097 = vmatprep.subr.mxu0 0.0
        %1098 = vmatpush1.msra.mxu0 0.0
        %1099 = vmatprep.subr.mxu0 0.0
        %1100 = vmatpush1.msra.mxu0 0.0
        %1101 = vmatprep.subr.mxu0 0.0
        %1102 = vmatpush1.msra.mxu0 0.0
        %1103 = vmatprep.subr.mxu0 0.0
        %1104 = vmatpush1.msra.mxu0 0.0
        %1105 = vmatprep.subr.mxu0 0.0
        %1106 = vmatpush1.msra.mxu0 0.0
        %1107 = vmatprep.subr.mxu0 0.0
        %1108 = vmatpush1.msra.mxu0 0.0
        %1109 = vmatprep.mubr.f32.mxu0 0.0
        %1110 = vmatmul.mubr.f32.gmra.mrb[0].mxu0 %v1043
        %v1111 = vpop.f32.mrb[0].mxu0
        %v1112 = vadd.f32 0.0, %v1111
        %v1113 = vpop.f32.mrb[0].mxu0
        %1114 = vdwg.mxu0
        %v1115 = vmul.f32 %v648, %v1112
        %v1117 = vrot.slane %v178, 1
        %v1119 = vadd.f32 %v1115, %v1117
        %1120 = vst [vmem:[%s170 + $0x1] sm:$0x1] %v1119
        %vm1121 = vcmask 1042434
        %v1122 = vsel %vm1121, %v186, -inf
        %1123 = vmax.xlane.f32.xlu0 %v1122
        %v1124 = vpop.xlane.xlu0 %1123
        %v1125 = vsel %vm1121, %v186, inf
        %1126 = vmin.xlane.f32.xlu0 %v1125
        %v1127 = vpop.xlane.xlu0 %1126
        %v1128 = vrot.slane %v182, 2
        %1130 = vxpose.xlu0.b32.start [1/16] %v1128, 128
        %1131 = vxpose.xlu0.b32.cont [2/16] 0.0, 128
        %1132 = vxpose.xlu0.b32.cont [3/16] 0.0, 128
        %1133 = vxpose.xlu0.b32.cont [4/16] 0.0, 128
        %1134 = vxpose.xlu0.b32.cont [5/16] 0.0, 128
        %1135 = vxpose.xlu0.b32.cont [6/16] 0.0, 128
        %1136 = vxpose.xlu0.b32.cont [7/16] 0.0, 128
        %1137 = vxpose.xlu0.b32.cont [8/16] 0.0, 128
        %1138 = vxpose.xlu0.b32.cont [9/16] 0.0, 128
        %1139 = vxpose.xlu0.b32.cont [10/16] 0.0, 128
        %1140 = vxpose.xlu0.b32.cont [11/16] 0.0, 128
        %1141 = vxpose.xlu0.b32.cont [12/16] 0.0, 128
        %1142 = vxpose.xlu0.b32.cont [13/16] 0.0, 128
        %1143 = vxpose.xlu0.b32.cont [14/16] 0.0, 128
        %1144 = vxpose.xlu0.b32.cont [15/16] 0.0, 128
        %1145 = vxpose.xlu0.b32.end [16/16] 0.0, 128
        %v1146 = vpop.trf.xlu0
        %v1147 = vpop.trf.xlu0
        %v1148 = vpop.trf.xlu0
        %v1149 = vpop.trf.xlu0
        %v1150 = vpop.trf.xlu0
        %v1151 = vpop.trf.xlu0
        %v1152 = vpop.trf.xlu0
        %v1153 = vpop.trf.xlu0
        %v1154 = vpop.trf.xlu0
        %v1155 = vpop.trf.xlu0
        %v1156 = vpop.trf.xlu0
        %v1157 = vpop.trf.xlu0
        %v1158 = vpop.trf.xlu0
        %v1159 = vpop.trf.xlu0
        %v1160 = vpop.trf.xlu0
        %v1161 = vpop.trf.xlu0
        %v1162 = vlaneseq
        %v1163 = vshrl.u32 %v1162, 7
        %v1164 = vsub.s32 2, %v1163
        %v1165 = vrot.slane %v1124, %v1164
        %v1166 = vmul.f32 %v1146, %v1165
        %v1167 = vmul.f32 %v1147, %v1165
        %v1168 = vmul.f32 %v1148, %v1165
        %v1169 = vmul.f32 %v1149, %v1165
        %v1170 = vmul.f32 %v1150, %v1165
        %v1171 = vmul.f32 %v1151, %v1165
        %v1172 = vmul.f32 %v1152, %v1165
        %v1173 = vmul.f32 %v1153, %v1165
        %v1174 = vmul.f32 %v1154, %v1165
        %v1175 = vmul.f32 %v1155, %v1165
        %v1176 = vmul.f32 %v1156, %v1165
        %v1177 = vmul.f32 %v1157, %v1165
        %v1178 = vmul.f32 %v1158, %v1165
        %v1179 = vmul.f32 %v1159, %v1165
        %v1180 = vmul.f32 %v1160, %v1165
        %v1181 = vmul.f32 %v1161, %v1165
        %v1182 = vlaneseq
        %v1183 = vshrl.u32 %v1182, 7
        %v1184 = vsub.s32 2, %v1183
        %v1185 = vrot.slane %v1127, %v1184
        %v1186 = vmul.f32 %v1146, %v1185
        %v1187 = vmul.f32 %v1147, %v1185
        %v1188 = vmul.f32 %v1148, %v1185
        %v1189 = vmul.f32 %v1149, %v1185
        %v1190 = vmul.f32 %v1150, %v1185
        %v1191 = vmul.f32 %v1151, %v1185
        %v1192 = vmul.f32 %v1152, %v1185
        %v1193 = vmul.f32 %v1153, %v1185
        %v1194 = vmul.f32 %v1154, %v1185
        %v1195 = vmul.f32 %v1155, %v1185
        %v1196 = vmul.f32 %v1156, %v1185
        %v1197 = vmul.f32 %v1157, %v1185
        %v1198 = vmul.f32 %v1158, %v1185
        %v1199 = vmul.f32 %v1159, %v1185
        %v1200 = vmul.f32 %v1160, %v1185
        %v1201 = vmul.f32 %v1161, %v1185
        %v1202 = vmax.f32 %v1166, %v1186
        %v1203 = vmax.f32 %v1167, %v1187
        %v1204 = vmax.f32 %v1168, %v1188
        %v1205 = vmax.f32 %v1169, %v1189
        %v1206 = vmax.f32 %v1170, %v1190
        %v1207 = vmax.f32 %v1171, %v1191
        %v1208 = vmax.f32 %v1172, %v1192
        %v1209 = vmax.f32 %v1173, %v1193
        %v1210 = vmax.f32 %v1174, %v1194
        %v1211 = vmax.f32 %v1175, %v1195
        %v1212 = vmax.f32 %v1176, %v1196
        %v1213 = vmax.f32 %v1177, %v1197
        %v1214 = vmax.f32 %v1178, %v1198
        %v1215 = vmax.f32 %v1179, %v1199
        %v1216 = vmax.f32 %v1180, %v1200
        %v1217 = vmax.f32 %v1181, %v1201
        %1219 = vset.pattern.permute.xlu0 0
        %1220 = vperm.xlu0 %1219, %v1146
        %v1221 = vpop.permute.xlu0 %1220
        %1224 = vset.pattern.permute.xlu0 0
        %1225 = vperm.xlu0 %1224, %v1147
        %v1226 = vpop.permute.xlu0 %1225
        %1229 = vset.pattern.permute.xlu0 0
        %1230 = vperm.xlu0 %1229, %v1148
        %v1231 = vpop.permute.xlu0 %1230
        %1234 = vset.pattern.permute.xlu0 0
        %1235 = vperm.xlu0 %1234, %v1149
        %v1236 = vpop.permute.xlu0 %1235
        %1239 = vset.pattern.permute.xlu0 0
        %1240 = vperm.xlu0 %1239, %v1150
        %v1241 = vpop.permute.xlu0 %1240
        %1244 = vset.pattern.permute.xlu0 0
        %1245 = vperm.xlu0 %1244, %v1151
        %v1246 = vpop.permute.xlu0 %1245
        %1249 = vset.pattern.permute.xlu0 0
        %1250 = vperm.xlu0 %1249, %v1152
        %v1251 = vpop.permute.xlu0 %1250
        %1254 = vset.pattern.permute.xlu0 0
        %1255 = vperm.xlu0 %1254, %v1153
        %v1256 = vpop.permute.xlu0 %1255
        %1259 = vset.pattern.permute.xlu0 0
        %1260 = vperm.xlu0 %1259, %v1154
        %v1261 = vpop.permute.xlu0 %1260
        %1264 = vset.pattern.permute.xlu0 0
        %1265 = vperm.xlu0 %1264, %v1155
        %v1266 = vpop.permute.xlu0 %1265
        %1269 = vset.pattern.permute.xlu0 0
        %1270 = vperm.xlu0 %1269, %v1156
        %v1271 = vpop.permute.xlu0 %1270
        %1274 = vset.pattern.permute.xlu0 0
        %1275 = vperm.xlu0 %1274, %v1157
        %v1276 = vpop.permute.xlu0 %1275
        %1279 = vset.pattern.permute.xlu0 0
        %1280 = vperm.xlu0 %1279, %v1158
        %v1281 = vpop.permute.xlu0 %1280
        %1284 = vset.pattern.permute.xlu0 0
        %1285 = vperm.xlu0 %1284, %v1159
        %v1286 = vpop.permute.xlu0 %1285
        %1289 = vset.pattern.permute.xlu0 0
        %1290 = vperm.xlu0 %1289, %v1160
        %v1291 = vpop.permute.xlu0 %1290
        %1294 = vset.pattern.permute.xlu0 0
        %1295 = vperm.xlu0 %1294, %v1161
        %v1296 = vpop.permute.xlu0 %1295
        %v1298 = vlaneseq
        %v1299 = vshrl.u32 %v1298, 7
        %v1300 = vsub.s32 2, %v1299
        %v1301 = vrot.slane %v186, %v1300
        %v1302 = vmul.f32 %v1221, %v1301
        %v1303 = vmul.f32 %v1226, %v1301
        %v1304 = vmul.f32 %v1231, %v1301
        %v1305 = vmul.f32 %v1236, %v1301
        %v1306 = vmul.f32 %v1241, %v1301
        %v1307 = vmul.f32 %v1246, %v1301
        %v1308 = vmul.f32 %v1251, %v1301
        %v1309 = vmul.f32 %v1256, %v1301
        %v1310 = vmul.f32 %v1261, %v1301
        %v1311 = vmul.f32 %v1266, %v1301
        %v1312 = vmul.f32 %v1271, %v1301
        %v1313 = vmul.f32 %v1276, %v1301
        %v1314 = vmul.f32 %v1281, %v1301
        %v1315 = vmul.f32 %v1286, %v1301
        %v1316 = vmul.f32 %v1291, %v1301
        %v1317 = vmul.f32 %v1296, %v1301
        %1319 = vset.pattern.permute.xlu0 0
        %1320 = vperm.xlu0 %1319, %v1202
        %v1321 = vpop.permute.xlu0 %1320
        %1324 = vset.pattern.permute.xlu0 0
        %1325 = vperm.xlu0 %1324, %v1203
        %v1326 = vpop.permute.xlu0 %1325
        %1329 = vset.pattern.permute.xlu0 0
        %1330 = vperm.xlu0 %1329, %v1204
        %v1331 = vpop.permute.xlu0 %1330
        %1334 = vset.pattern.permute.xlu0 0
        %1335 = vperm.xlu0 %1334, %v1205
        %v1336 = vpop.permute.xlu0 %1335
        %1339 = vset.pattern.permute.xlu0 0
        %1340 = vperm.xlu0 %1339, %v1206
        %v1341 = vpop.permute.xlu0 %1340
        %1344 = vset.pattern.permute.xlu0 0
        %1345 = vperm.xlu0 %1344, %v1207
        %v1346 = vpop.permute.xlu0 %1345
        %1349 = vset.pattern.permute.xlu0 0
        %1350 = vperm.xlu0 %1349, %v1208
        %v1351 = vpop.permute.xlu0 %1350
        %1354 = vset.pattern.permute.xlu0 0
        %1355 = vperm.xlu0 %1354, %v1209
        %v1356 = vpop.permute.xlu0 %1355
        %1359 = vset.pattern.permute.xlu0 0
        %1360 = vperm.xlu0 %1359, %v1210
        %v1361 = vpop.permute.xlu0 %1360
        %1364 = vset.pattern.permute.xlu0 0
        %1365 = vperm.xlu0 %1364, %v1211
        %v1366 = vpop.permute.xlu0 %1365
        %1369 = vset.pattern.permute.xlu0 0
        %1370 = vperm.xlu0 %1369, %v1212
        %v1371 = vpop.permute.xlu0 %1370
        %1374 = vset.pattern.permute.xlu0 0
        %1375 = vperm.xlu0 %1374, %v1213
        %v1376 = vpop.permute.xlu0 %1375
        %1379 = vset.pattern.permute.xlu0 0
        %1380 = vperm.xlu0 %1379, %v1214
        %v1381 = vpop.permute.xlu0 %1380
        %1384 = vset.pattern.permute.xlu0 0
        %1385 = vperm.xlu0 %1384, %v1215
        %v1386 = vpop.permute.xlu0 %1385
        %1389 = vset.pattern.permute.xlu0 0
        %1390 = vperm.xlu0 %1389, %v1216
        %v1391 = vpop.permute.xlu0 %1390
        %1394 = vset.pattern.permute.xlu0 0
        %1395 = vperm.xlu0 %1394, %v1217
        %v1396 = vpop.permute.xlu0 %1395
        %v1398 = vsub.f32 %v1302, %v1321
        %v1399 = vsub.f32 %v1303, %v1326
        %v1400 = vsub.f32 %v1304, %v1331
        %v1401 = vsub.f32 %v1305, %v1336
        %v1402 = vsub.f32 %v1306, %v1341
        %v1403 = vsub.f32 %v1307, %v1346
        %v1404 = vsub.f32 %v1308, %v1351
        %v1405 = vsub.f32 %v1309, %v1356
        %v1406 = vsub.f32 %v1310, %v1361
        %v1407 = vsub.f32 %v1311, %v1366
        %v1408 = vsub.f32 %v1312, %v1371
        %v1409 = vsub.f32 %v1313, %v1376
        %v1410 = vsub.f32 %v1314, %v1381
        %v1411 = vsub.f32 %v1315, %v1386
        %v1412 = vsub.f32 %v1316, %v1391
        %v1413 = vsub.f32 %v1317, %v1396
        %v1414 = vmul.f32 %v1398, 1.442695
        %v1415 = vpow.pop %v1414
        %v1416 = vmul.f32 %v1399, 1.442695
        %v1417 = vpow.pop %v1416
        %v1418 = vmul.f32 %v1400, 1.442695
        %v1419 = vpow.pop %v1418
        %v1420 = vmul.f32 %v1401, 1.442695
        %v1421 = vpow.pop %v1420
        %v1422 = vmul.f32 %v1402, 1.442695
        %v1423 = vpow.pop %v1422
        %v1424 = vmul.f32 %v1403, 1.442695
        %v1425 = vpow.pop %v1424
        %v1426 = vmul.f32 %v1404, 1.442695
        %v1427 = vpow.pop %v1426
        %v1428 = vmul.f32 %v1405, 1.442695
        %v1429 = vpow.pop %v1428
        %v1430 = vmul.f32 %v1406, 1.442695
        %v1431 = vpow.pop %v1430
        %v1432 = vmul.f32 %v1407, 1.442695
        %v1433 = vpow.pop %v1432
        %v1434 = vmul.f32 %v1408, 1.442695
        %v1435 = vpow.pop %v1434
        %v1436 = vmul.f32 %v1409, 1.442695
        %v1437 = vpow.pop %v1436
        %v1438 = vmul.f32 %v1410, 1.442695
        %v1439 = vpow.pop %v1438
        %v1440 = vmul.f32 %v1411, 1.442695
        %v1441 = vpow.pop %v1440
        %v1442 = vmul.f32 %v1412, 1.442695
        %v1443 = vpow.pop %v1442
        %v1444 = vmul.f32 %v1413, 1.442695
        %v1445 = vpow.pop %v1444
        %1446 = vadd.xlane.f32.xlu0 %v1415
        %v1447 = vpop.xlane.xlu0 %1446
        %1448 = vadd.xlane.f32.xlu0 %v1417
        %v1449 = vpop.xlane.xlu0 %1448
        %1450 = vadd.xlane.f32.xlu0 %v1419
        %v1451 = vpop.xlane.xlu0 %1450
        %1452 = vadd.xlane.f32.xlu0 %v1421
        %v1453 = vpop.xlane.xlu0 %1452
        %1454 = vadd.xlane.f32.xlu0 %v1423
        %v1455 = vpop.xlane.xlu0 %1454
        %1456 = vadd.xlane.f32.xlu0 %v1425
        %v1457 = vpop.xlane.xlu0 %1456
        %1458 = vadd.xlane.f32.xlu0 %v1427
        %v1459 = vpop.xlane.xlu0 %1458
        %1460 = vadd.xlane.f32.xlu0 %v1429
        %v1461 = vpop.xlane.xlu0 %1460
        %1462 = vadd.xlane.f32.xlu0 %v1431
        %v1463 = vpop.xlane.xlu0 %1462
        %1464 = vadd.xlane.f32.xlu0 %v1433
        %v1465 = vpop.xlane.xlu0 %1464
        %1466 = vadd.xlane.f32.xlu0 %v1435
        %v1467 = vpop.xlane.xlu0 %1466
        %1468 = vadd.xlane.f32.xlu0 %v1437
        %v1469 = vpop.xlane.xlu0 %1468
        %1470 = vadd.xlane.f32.xlu0 %v1439
        %v1471 = vpop.xlane.xlu0 %1470
        %1472 = vadd.xlane.f32.xlu0 %v1441
        %v1473 = vpop.xlane.xlu0 %1472
        %1474 = vadd.xlane.f32.xlu0 %v1443
        %v1475 = vpop.xlane.xlu0 %1474
        %1476 = vadd.xlane.f32.xlu0 %v1445
        %v1477 = vpop.xlane.xlu0 %1476
        %v1478 = vrcp.pop %v1447
        %v1479 = vrcp.pop %v1449
        %v1480 = vrcp.pop %v1451
        %v1481 = vrcp.pop %v1453
        %v1482 = vrcp.pop %v1455
        %v1483 = vrcp.pop %v1457
        %v1484 = vrcp.pop %v1459
        %v1485 = vrcp.pop %v1461
        %v1486 = vrcp.pop %v1463
        %v1487 = vrcp.pop %v1465
        %v1488 = vrcp.pop %v1467
        %v1489 = vrcp.pop %v1469
        %v1490 = vrcp.pop %v1471
        %v1491 = vrcp.pop %v1473
        %v1492 = vrcp.pop %v1475
        %v1493 = vrcp.pop %v1477
        %v1494 = vmul.f32 %v1415, %v1478
        %v1495 = vmul.f32 %v1417, %v1479
        %v1496 = vmul.f32 %v1419, %v1480
        %v1497 = vmul.f32 %v1421, %v1481
        %v1498 = vmul.f32 %v1423, %v1482
        %v1499 = vmul.f32 %v1425, %v1483
        %v1500 = vmul.f32 %v1427, %v1484
        %v1501 = vmul.f32 %v1429, %v1485
        %v1502 = vmul.f32 %v1431, %v1486
        %v1503 = vmul.f32 %v1433, %v1487
        %v1504 = vmul.f32 %v1435, %v1488
        %v1505 = vmul.f32 %v1437, %v1489
        %v1506 = vmul.f32 %v1439, %v1490
        %v1507 = vmul.f32 %v1441, %v1491
        %v1508 = vmul.f32 %v1443, %v1492
        %v1509 = vmul.f32 %v1445, %v1493
        %v1510 = vrot.slane %v190, 2
        %1512 = vmatprep.subr.mxu0 0.0
        %1513 = vmatpush1.msra.mxu0 %v1494
        %1514 = vmatprep.subr.mxu0 0.0
        %1515 = vmatpush1.msra.mxu0 %v1495
        %1516 = vmatprep.subr.mxu0 0.0
        %1517 = vmatpush1.msra.mxu0 %v1496
        %1518 = vmatprep.subr.mxu0 0.0
        %1519 = vmatpush1.msra.mxu0 %v1497
        %1520 = vmatprep.subr.mxu0 0.0
        %1521 = vmatpush1.msra.mxu0 %v1498
        %1522 = vmatprep.subr.mxu0 0.0
        %1523 = vmatpush1.msra.mxu0 %v1499
        %1524 = vmatprep.subr.mxu0 0.0
        %1525 = vmatpush1.msra.mxu0 %v1500
        %1526 = vmatprep.subr.mxu0 0.0
        %1527 = vmatpush1.msra.mxu0 %v1501
        %1528 = vmatprep.subr.mxu0 0.0
        %1529 = vmatpush1.msra.mxu0 %v1502
        %1530 = vmatprep.subr.mxu0 0.0
        %1531 = vmatpush1.msra.mxu0 %v1503
        %1532 = vmatprep.subr.mxu0 0.0
        %1533 = vmatpush1.msra.mxu0 %v1504
        %1534 = vmatprep.subr.mxu0 0.0
        %1535 = vmatpush1.msra.mxu0 %v1505
        %1536 = vmatprep.subr.mxu0 0.0
        %1537 = vmatpush1.msra.mxu0 %v1506
        %1538 = vmatprep.subr.mxu0 0.0
        %1539 = vmatpush1.msra.mxu0 %v1507
        %1540 = vmatprep.subr.mxu0 0.0
        %1541 = vmatpush1.msra.mxu0 %v1508
        %1542 = vmatprep.subr.mxu0 0.0
        %1543 = vmatpush1.msra.mxu0 %v1509
        %1544 = vmatprep.subr.mxu0 0.0
        %1545 = vmatpush1.msra.mxu0 0.0
        %1546 = vmatprep.subr.mxu0 0.0
        %1547 = vmatpush1.msra.mxu0 0.0
        %1548 = vmatprep.subr.mxu0 0.0
        %1549 = vmatpush1.msra.mxu0 0.0
        %1550 = vmatprep.subr.mxu0 0.0
        %1551 = vmatpush1.msra.mxu0 0.0
        %1552 = vmatprep.subr.mxu0 0.0
        %1553 = vmatpush1.msra.mxu0 0.0
        %1554 = vmatprep.subr.mxu0 0.0
        %1555 = vmatpush1.msra.mxu0 0.0
        %1556 = vmatprep.subr.mxu0 0.0
        %1557 = vmatpush1.msra.mxu0 0.0
        %1558 = vmatprep.subr.mxu0 0.0
        %1559 = vmatpush1.msra.mxu0 0.0
        %1560 = vmatprep.subr.mxu0 0.0
        %1561 = vmatpush1.msra.mxu0 0.0
        %1562 = vmatprep.subr.mxu0 0.0
        %1563 = vmatpush1.msra.mxu0 0.0
        %1564 = vmatprep.subr.mxu0 0.0
        %1565 = vmatpush1.msra.mxu0 0.0
        %1566 = vmatprep.subr.mxu0 0.0
        %1567 = vmatpush1.msra.mxu0 0.0
        %1568 = vmatprep.subr.mxu0 0.0
        %1569 = vmatpush1.msra.mxu0 0.0
        %1570 = vmatprep.subr.mxu0 0.0
        %1571 = vmatpush1.msra.mxu0 0.0
        %1572 = vmatprep.subr.mxu0 0.0
        %1573 = vmatpush1.msra.mxu0 0.0
        %1574 = vmatprep.subr.mxu0 0.0
        %1575 = vmatpush1.msra.mxu0 0.0
        %1576 = vmatprep.mubr.f32.mxu0 0.0
        %1577 = vmatmul.mubr.f32.gmra.mrb[0].mxu0 %v1510
        %v1578 = vpop.f32.mrb[0].mxu0
        %v1579 = vadd.f32 0.0, %v1578
        %v1580 = vpop.f32.mrb[0].mxu0
        %1581 = vdwg.mxu0
        %v1582 = vmul.f32 %v648, %v1579
        %v1583 = vrot.slane %v178, 2
        %v1585 = vadd.f32 %v1582, %v1583
        %1586 = vst [vmem:[%s170 + $0x2] sm:$0x1] %v1585
        %vm1587 = vcmask 1043459
        %v1588 = vsel %vm1587, %v186, -inf
        %1589 = vmax.xlane.f32.xlu0 %v1588
        %v1590 = vpop.xlane.xlu0 %1589
        %v1591 = vsel %vm1587, %v186, inf
        %1592 = vmin.xlane.f32.xlu0 %v1591
        %v1593 = vpop.xlane.xlu0 %1592
        %v1594 = vrot.slane %v182, 3
        %1596 = vxpose.xlu0.b32.start [1/16] %v1594, 128
        %1597 = vxpose.xlu0.b32.cont [2/16] 0.0, 128
        %1598 = vxpose.xlu0.b32.cont [3/16] 0.0, 128
        %1599 = vxpose.xlu0.b32.cont [4/16] 0.0, 128
        %1600 = vxpose.xlu0.b32.cont [5/16] 0.0, 128
        %1601 = vxpose.xlu0.b32.cont [6/16] 0.0, 128
        %1602 = vxpose.xlu0.b32.cont [7/16] 0.0, 128
        %1603 = vxpose.xlu0.b32.cont [8/16] 0.0, 128
        %1604 = vxpose.xlu0.b32.cont [9/16] 0.0, 128
        %1605 = vxpose.xlu0.b32.cont [10/16] 0.0, 128
        %1606 = vxpose.xlu0.b32.cont [11/16] 0.0, 128
        %1607 = vxpose.xlu0.b32.cont [12/16] 0.0, 128
        %1608 = vxpose.xlu0.b32.cont [13/16] 0.0, 128
        %1609 = vxpose.xlu0.b32.cont [14/16] 0.0, 128
        %1610 = vxpose.xlu0.b32.cont [15/16] 0.0, 128
        %1611 = vxpose.xlu0.b32.end [16/16] 0.0, 128
        %v1612 = vpop.trf.xlu0
        %v1613 = vpop.trf.xlu0
        %v1614 = vpop.trf.xlu0
        %v1615 = vpop.trf.xlu0
        %v1616 = vpop.trf.xlu0
        %v1617 = vpop.trf.xlu0
        %v1618 = vpop.trf.xlu0
        %v1619 = vpop.trf.xlu0
        %v1620 = vpop.trf.xlu0
        %v1621 = vpop.trf.xlu0
        %v1622 = vpop.trf.xlu0
        %v1623 = vpop.trf.xlu0
        %v1624 = vpop.trf.xlu0
        %v1625 = vpop.trf.xlu0
        %v1626 = vpop.trf.xlu0
        %v1627 = vpop.trf.xlu0
        %v1628 = vlaneseq
        %v1629 = vshrl.u32 %v1628, 7
        %v1630 = vsub.s32 3, %v1629
        %v1631 = vrot.slane %v1590, %v1630
        %v1632 = vmul.f32 %v1612, %v1631
        %v1633 = vmul.f32 %v1613, %v1631
        %v1634 = vmul.f32 %v1614, %v1631
        %v1635 = vmul.f32 %v1615, %v1631
        %v1636 = vmul.f32 %v1616, %v1631
        %v1637 = vmul.f32 %v1617, %v1631
        %v1638 = vmul.f32 %v1618, %v1631
        %v1639 = vmul.f32 %v1619, %v1631
        %v1640 = vmul.f32 %v1620, %v1631
        %v1641 = vmul.f32 %v1621, %v1631
        %v1642 = vmul.f32 %v1622, %v1631
        %v1643 = vmul.f32 %v1623, %v1631
        %v1644 = vmul.f32 %v1624, %v1631
        %v1645 = vmul.f32 %v1625, %v1631
        %v1646 = vmul.f32 %v1626, %v1631
        %v1647 = vmul.f32 %v1627, %v1631
        %v1648 = vlaneseq
        %v1649 = vshrl.u32 %v1648, 7
        %v1650 = vsub.s32 3, %v1649
        %v1651 = vrot.slane %v1593, %v1650
        %v1652 = vmul.f32 %v1612, %v1651
        %v1653 = vmul.f32 %v1613, %v1651
        %v1654 = vmul.f32 %v1614, %v1651
        %v1655 = vmul.f32 %v1615, %v1651
        %v1656 = vmul.f32 %v1616, %v1651
        %v1657 = vmul.f32 %v1617, %v1651
        %v1658 = vmul.f32 %v1618, %v1651
        %v1659 = vmul.f32 %v1619, %v1651
        %v1660 = vmul.f32 %v1620, %v1651
        %v1661 = vmul.f32 %v1621, %v1651
        %v1662 = vmul.f32 %v1622, %v1651
        %v1663 = vmul.f32 %v1623, %v1651
        %v1664 = vmul.f32 %v1624, %v1651
        %v1665 = vmul.f32 %v1625, %v1651
        %v1666 = vmul.f32 %v1626, %v1651
        %v1667 = vmul.f32 %v1627, %v1651
        %v1668 = vmax.f32 %v1632, %v1652
        %v1669 = vmax.f32 %v1633, %v1653
        %v1670 = vmax.f32 %v1634, %v1654
        %v1671 = vmax.f32 %v1635, %v1655
        %v1672 = vmax.f32 %v1636, %v1656
        %v1673 = vmax.f32 %v1637, %v1657
        %v1674 = vmax.f32 %v1638, %v1658
        %v1675 = vmax.f32 %v1639, %v1659
        %v1676 = vmax.f32 %v1640, %v1660
        %v1677 = vmax.f32 %v1641, %v1661
        %v1678 = vmax.f32 %v1642, %v1662
        %v1679 = vmax.f32 %v1643, %v1663
        %v1680 = vmax.f32 %v1644, %v1664
        %v1681 = vmax.f32 %v1645, %v1665
        %v1682 = vmax.f32 %v1646, %v1666
        %v1683 = vmax.f32 %v1647, %v1667
        %1685 = vset.pattern.permute.xlu0 0
        %1686 = vperm.xlu0 %1685, %v1612
        %v1687 = vpop.permute.xlu0 %1686
        %1690 = vset.pattern.permute.xlu0 0
        %1691 = vperm.xlu0 %1690, %v1613
        %v1692 = vpop.permute.xlu0 %1691
        %1695 = vset.pattern.permute.xlu0 0
        %1696 = vperm.xlu0 %1695, %v1614
        %v1697 = vpop.permute.xlu0 %1696
        %1700 = vset.pattern.permute.xlu0 0
        %1701 = vperm.xlu0 %1700, %v1615
        %v1702 = vpop.permute.xlu0 %1701
        %1705 = vset.pattern.permute.xlu0 0
        %1706 = vperm.xlu0 %1705, %v1616
        %v1707 = vpop.permute.xlu0 %1706
        %1710 = vset.pattern.permute.xlu0 0
        %1711 = vperm.xlu0 %1710, %v1617
        %v1712 = vpop.permute.xlu0 %1711
        %1715 = vset.pattern.permute.xlu0 0
        %1716 = vperm.xlu0 %1715, %v1618
        %v1717 = vpop.permute.xlu0 %1716
        %1720 = vset.pattern.permute.xlu0 0
        %1721 = vperm.xlu0 %1720, %v1619
        %v1722 = vpop.permute.xlu0 %1721
        %1725 = vset.pattern.permute.xlu0 0
        %1726 = vperm.xlu0 %1725, %v1620
        %v1727 = vpop.permute.xlu0 %1726
        %1730 = vset.pattern.permute.xlu0 0
        %1731 = vperm.xlu0 %1730, %v1621
        %v1732 = vpop.permute.xlu0 %1731
        %1735 = vset.pattern.permute.xlu0 0
        %1736 = vperm.xlu0 %1735, %v1622
        %v1737 = vpop.permute.xlu0 %1736
        %1740 = vset.pattern.permute.xlu0 0
        %1741 = vperm.xlu0 %1740, %v1623
        %v1742 = vpop.permute.xlu0 %1741
        %1745 = vset.pattern.permute.xlu0 0
        %1746 = vperm.xlu0 %1745, %v1624
        %v1747 = vpop.permute.xlu0 %1746
        %1750 = vset.pattern.permute.xlu0 0
        %1751 = vperm.xlu0 %1750, %v1625
        %v1752 = vpop.permute.xlu0 %1751
        %1755 = vset.pattern.permute.xlu0 0
        %1756 = vperm.xlu0 %1755, %v1626
        %v1757 = vpop.permute.xlu0 %1756
        %1760 = vset.pattern.permute.xlu0 0
        %1761 = vperm.xlu0 %1760, %v1627
        %v1762 = vpop.permute.xlu0 %1761
        %v1764 = vlaneseq
        %v1765 = vshrl.u32 %v1764, 7
        %v1766 = vsub.s32 3, %v1765
        %v1767 = vrot.slane %v186, %v1766
        %v1768 = vmul.f32 %v1687, %v1767
        %v1769 = vmul.f32 %v1692, %v1767
        %v1770 = vmul.f32 %v1697, %v1767
        %v1771 = vmul.f32 %v1702, %v1767
        %v1772 = vmul.f32 %v1707, %v1767
        %v1773 = vmul.f32 %v1712, %v1767
        %v1774 = vmul.f32 %v1717, %v1767
        %v1775 = vmul.f32 %v1722, %v1767
        %v1776 = vmul.f32 %v1727, %v1767
        %v1777 = vmul.f32 %v1732, %v1767
        %v1778 = vmul.f32 %v1737, %v1767
        %v1779 = vmul.f32 %v1742, %v1767
        %v1780 = vmul.f32 %v1747, %v1767
        %v1781 = vmul.f32 %v1752, %v1767
        %v1782 = vmul.f32 %v1757, %v1767
        %v1783 = vmul.f32 %v1762, %v1767
        %1785 = vset.pattern.permute.xlu0 0
        %1786 = vperm.xlu0 %1785, %v1668
        %v1787 = vpop.permute.xlu0 %1786
        %1790 = vset.pattern.permute.xlu0 0
        %1791 = vperm.xlu0 %1790, %v1669
        %v1792 = vpop.permute.xlu0 %1791
        %1795 = vset.pattern.permute.xlu0 0
        %1796 = vperm.xlu0 %1795, %v1670
        %v1797 = vpop.permute.xlu0 %1796
        %1800 = vset.pattern.permute.xlu0 0
        %1801 = vperm.xlu0 %1800, %v1671
        %v1802 = vpop.permute.xlu0 %1801
        %1805 = vset.pattern.permute.xlu0 0
        %1806 = vperm.xlu0 %1805, %v1672
        %v1807 = vpop.permute.xlu0 %1806
        %1810 = vset.pattern.permute.xlu0 0
        %1811 = vperm.xlu0 %1810, %v1673
        %v1812 = vpop.permute.xlu0 %1811
        %1815 = vset.pattern.permute.xlu0 0
        %1816 = vperm.xlu0 %1815, %v1674
        %v1817 = vpop.permute.xlu0 %1816
        %1820 = vset.pattern.permute.xlu0 0
        %1821 = vperm.xlu0 %1820, %v1675
        %v1822 = vpop.permute.xlu0 %1821
        %1825 = vset.pattern.permute.xlu0 0
        %1826 = vperm.xlu0 %1825, %v1676
        %v1827 = vpop.permute.xlu0 %1826
        %1830 = vset.pattern.permute.xlu0 0
        %1831 = vperm.xlu0 %1830, %v1677
        %v1832 = vpop.permute.xlu0 %1831
        %1835 = vset.pattern.permute.xlu0 0
        %1836 = vperm.xlu0 %1835, %v1678
        %v1837 = vpop.permute.xlu0 %1836
        %1840 = vset.pattern.permute.xlu0 0
        %1841 = vperm.xlu0 %1840, %v1679
        %v1842 = vpop.permute.xlu0 %1841
        %1845 = vset.pattern.permute.xlu0 0
        %1846 = vperm.xlu0 %1845, %v1680
        %v1847 = vpop.permute.xlu0 %1846
        %1850 = vset.pattern.permute.xlu0 0
        %1851 = vperm.xlu0 %1850, %v1681
        %v1852 = vpop.permute.xlu0 %1851
        %1855 = vset.pattern.permute.xlu0 0
        %1856 = vperm.xlu0 %1855, %v1682
        %v1857 = vpop.permute.xlu0 %1856
        %1860 = vset.pattern.permute.xlu0 0
        %1861 = vperm.xlu0 %1860, %v1683
        %v1862 = vpop.permute.xlu0 %1861
        %v1864 = vsub.f32 %v1768, %v1787
        %v1865 = vsub.f32 %v1769, %v1792
        %v1866 = vsub.f32 %v1770, %v1797
        %v1867 = vsub.f32 %v1771, %v1802
        %v1868 = vsub.f32 %v1772, %v1807
        %v1869 = vsub.f32 %v1773, %v1812
        %v1870 = vsub.f32 %v1774, %v1817
        %v1871 = vsub.f32 %v1775, %v1822
        %v1872 = vsub.f32 %v1776, %v1827
        %v1873 = vsub.f32 %v1777, %v1832
        %v1874 = vsub.f32 %v1778, %v1837
        %v1875 = vsub.f32 %v1779, %v1842
        %v1876 = vsub.f32 %v1780, %v1847
        %v1877 = vsub.f32 %v1781, %v1852
        %v1878 = vsub.f32 %v1782, %v1857
        %v1879 = vsub.f32 %v1783, %v1862
        %v1880 = vmul.f32 %v1864, 1.442695
        %v1881 = vpow.pop %v1880
        %v1882 = vmul.f32 %v1865, 1.442695
        %v1883 = vpow.pop %v1882
        %v1884 = vmul.f32 %v1866, 1.442695
        %v1885 = vpow.pop %v1884
        %v1886 = vmul.f32 %v1867, 1.442695
        %v1887 = vpow.pop %v1886
        %v1888 = vmul.f32 %v1868, 1.442695
        %v1889 = vpow.pop %v1888
        %v1890 = vmul.f32 %v1869, 1.442695
        %v1891 = vpow.pop %v1890
        %v1892 = vmul.f32 %v1870, 1.442695
        %v1893 = vpow.pop %v1892
        %v1894 = vmul.f32 %v1871, 1.442695
        %v1895 = vpow.pop %v1894
        %v1896 = vmul.f32 %v1872, 1.442695
        %v1897 = vpow.pop %v1896
        %v1898 = vmul.f32 %v1873, 1.442695
        %v1899 = vpow.pop %v1898
        %v1900 = vmul.f32 %v1874, 1.442695
        %v1901 = vpow.pop %v1900
        %v1902 = vmul.f32 %v1875, 1.442695
        %v1903 = vpow.pop %v1902
        %v1904 = vmul.f32 %v1876, 1.442695
        %v1905 = vpow.pop %v1904
        %v1906 = vmul.f32 %v1877, 1.442695
        %v1907 = vpow.pop %v1906
        %v1908 = vmul.f32 %v1878, 1.442695
        %v1909 = vpow.pop %v1908
        %v1910 = vmul.f32 %v1879, 1.442695
        %v1911 = vpow.pop %v1910
        %1912 = vadd.xlane.f32.xlu0 %v1881
        %v1913 = vpop.xlane.xlu0 %1912
        %1914 = vadd.xlane.f32.xlu0 %v1883
        %v1915 = vpop.xlane.xlu0 %1914
        %1916 = vadd.xlane.f32.xlu0 %v1885
        %v1917 = vpop.xlane.xlu0 %1916
        %1918 = vadd.xlane.f32.xlu0 %v1887
        %v1919 = vpop.xlane.xlu0 %1918
        %1920 = vadd.xlane.f32.xlu0 %v1889
        %v1921 = vpop.xlane.xlu0 %1920
        %1922 = vadd.xlane.f32.xlu0 %v1891
        %v1923 = vpop.xlane.xlu0 %1922
        %1924 = vadd.xlane.f32.xlu0 %v1893
        %v1925 = vpop.xlane.xlu0 %1924
        %1926 = vadd.xlane.f32.xlu0 %v1895
        %v1927 = vpop.xlane.xlu0 %1926
        %1928 = vadd.xlane.f32.xlu0 %v1897
        %v1929 = vpop.xlane.xlu0 %1928
        %1930 = vadd.xlane.f32.xlu0 %v1899
        %v1931 = vpop.xlane.xlu0 %1930
        %1932 = vadd.xlane.f32.xlu0 %v1901
        %v1933 = vpop.xlane.xlu0 %1932
        %1934 = vadd.xlane.f32.xlu0 %v1903
        %v1935 = vpop.xlane.xlu0 %1934
        %1936 = vadd.xlane.f32.xlu0 %v1905
        %v1937 = vpop.xlane.xlu0 %1936
        %1938 = vadd.xlane.f32.xlu0 %v1907
        %v1939 = vpop.xlane.xlu0 %1938
        %1940 = vadd.xlane.f32.xlu0 %v1909
        %v1941 = vpop.xlane.xlu0 %1940
        %1942 = vadd.xlane.f32.xlu0 %v1911
        %v1943 = vpop.xlane.xlu0 %1942
        %v1944 = vrcp.pop %v1913
        %v1945 = vrcp.pop %v1915
        %v1946 = vrcp.pop %v1917
        %v1947 = vrcp.pop %v1919
        %v1948 = vrcp.pop %v1921
        %v1949 = vrcp.pop %v1923
        %v1950 = vrcp.pop %v1925
        %v1951 = vrcp.pop %v1927
        %v1952 = vrcp.pop %v1929
        %v1953 = vrcp.pop %v1931
        %v1954 = vrcp.pop %v1933
        %v1955 = vrcp.pop %v1935
        %v1956 = vrcp.pop %v1937
        %v1957 = vrcp.pop %v1939
        %v1958 = vrcp.pop %v1941
        %v1959 = vrcp.pop %v1943
        %v1960 = vmul.f32 %v1881, %v1944
        %v1961 = vmul.f32 %v1883, %v1945
        %v1962 = vmul.f32 %v1885, %v1946
        %v1963 = vmul.f32 %v1887, %v1947
        %v1964 = vmul.f32 %v1889, %v1948
        %v1965 = vmul.f32 %v1891, %v1949
        %v1966 = vmul.f32 %v1893, %v1950
        %v1967 = vmul.f32 %v1895, %v1951
        %v1968 = vmul.f32 %v1897, %v1952
        %v1969 = vmul.f32 %v1899, %v1953
        %v1970 = vmul.f32 %v1901, %v1954
        %v1971 = vmul.f32 %v1903, %v1955
        %v1972 = vmul.f32 %v1905, %v1956
        %v1973 = vmul.f32 %v1907, %v1957
        %v1974 = vmul.f32 %v1909, %v1958
        %v1975 = vmul.f32 %v1911, %v1959
        %v1976 = vrot.slane %v190, 3
        %1978 = vmatprep.subr.mxu0 0.0
        %1979 = vmatpush1.msra.mxu0 %v1960
        %1980 = vmatprep.subr.mxu0 0.0
        %1981 = vmatpush1.msra.mxu0 %v1961
        %1982 = vmatprep.subr.mxu0 0.0
        %1983 = vmatpush1.msra.mxu0 %v1962
        %1984 = vmatprep.subr.mxu0 0.0
        %1985 = vmatpush1.msra.mxu0 %v1963
        %1986 = vmatprep.subr.mxu0 0.0
        %1987 = vmatpush1.msra.mxu0 %v1964
        %1988 = vmatprep.subr.mxu0 0.0
        %1989 = vmatpush1.msra.mxu0 %v1965
        %1990 = vmatprep.subr.mxu0 0.0
        %1991 = vmatpush1.msra.mxu0 %v1966
        %1992 = vmatprep.subr.mxu0 0.0
        %1993 = vmatpush1.msra.mxu0 %v1967
        %1994 = vmatprep.subr.mxu0 0.0
        %1995 = vmatpush1.msra.mxu0 %v1968
        %1996 = vmatprep.subr.mxu0 0.0
        %1997 = vmatpush1.msra.mxu0 %v1969
        %1998 = vmatprep.subr.mxu0 0.0
        %1999 = vmatpush1.msra.mxu0 %v1970
        %2000 = vmatprep.subr.mxu0 0.0
        %2001 = vmatpush1.msra.mxu0 %v1971
        %2002 = vmatprep.subr.mxu0 0.0
        %2003 = vmatpush1.msra.mxu0 %v1972
        %2004 = vmatprep.subr.mxu0 0.0
        %2005 = vmatpush1.msra.mxu0 %v1973
        %2006 = vmatprep.subr.mxu0 0.0
        %2007 = vmatpush1.msra.mxu0 %v1974
        %2008 = vmatprep.subr.mxu0 0.0
        %2009 = vmatpush1.msra.mxu0 %v1975
        %2010 = vmatprep.subr.mxu0 0.0
        %2011 = vmatpush1.msra.mxu0 0.0
        %2012 = vmatprep.subr.mxu0 0.0
        %2013 = vmatpush1.msra.mxu0 0.0
        %2014 = vmatprep.subr.mxu0 0.0
        %2015 = vmatpush1.msra.mxu0 0.0
        %2016 = vmatprep.subr.mxu0 0.0
        %2017 = vmatpush1.msra.mxu0 0.0
        %2018 = vmatprep.subr.mxu0 0.0
        %2019 = vmatpush1.msra.mxu0 0.0
        %2020 = vmatprep.subr.mxu0 0.0
        %2021 = vmatpush1.msra.mxu0 0.0
        %2022 = vmatprep.subr.mxu0 0.0
        %2023 = vmatpush1.msra.mxu0 0.0
        %2024 = vmatprep.subr.mxu0 0.0
        %2025 = vmatpush1.msra.mxu0 0.0
        %2026 = vmatprep.subr.mxu0 0.0
        %2027 = vmatpush1.msra.mxu0 0.0
        %2028 = vmatprep.subr.mxu0 0.0
        %2029 = vmatpush1.msra.mxu0 0.0
        %2030 = vmatprep.subr.mxu0 0.0
        %2031 = vmatpush1.msra.mxu0 0.0
        %2032 = vmatprep.subr.mxu0 0.0
        %2033 = vmatpush1.msra.mxu0 0.0
        %2034 = vmatprep.subr.mxu0 0.0
        %2035 = vmatpush1.msra.mxu0 0.0
        %2036 = vmatprep.subr.mxu0 0.0
        %2037 = vmatpush1.msra.mxu0 0.0
        %2038 = vmatprep.subr.mxu0 0.0
        %2039 = vmatpush1.msra.mxu0 0.0
        %2040 = vmatprep.subr.mxu0 0.0
        %2041 = vmatpush1.msra.mxu0 0.0
        %2042 = vmatprep.mubr.f32.mxu0 0.0
        %2043 = vmatmul.mubr.f32.gmra.mrb[0].mxu0 %v1976
        %v2044 = vpop.f32.mrb[0].mxu0
        %v2045 = vadd.f32 0.0, %v2044
        %v2046 = vpop.f32.mrb[0].mxu0
        %2047 = vdwg.mxu0
        %v2048 = vmul.f32 %v648, %v2045
        %v2049 = vrot.slane %v178, 3
        %v2051 = vadd.f32 %v2048, %v2049
        %2052 = vst [vmem:[%s170 + $0x3] sm:$0x1] %v2051
        %vm2053 = vcmask 1044484
        %v2054 = vsel %vm2053, %v186, -inf
        %2055 = vmax.xlane.f32.xlu0 %v2054
        %v2056 = vpop.xlane.xlu0 %2055
        %v2057 = vsel %vm2053, %v186, inf
        %2058 = vmin.xlane.f32.xlu0 %v2057
        %v2059 = vpop.xlane.xlu0 %2058
        %v2060 = vrot.slane %v182, 4
        %2062 = vxpose.xlu0.b32.start [1/16] %v2060, 128
        %2063 = vxpose.xlu0.b32.cont [2/16] 0.0, 128
        %2064 = vxpose.xlu0.b32.cont [3/16] 0.0, 128
        %2065 = vxpose.xlu0.b32.cont [4/16] 0.0, 128
        %2066 = vxpose.xlu0.b32.cont [5/16] 0.0, 128
        %2067 = vxpose.xlu0.b32.cont [6/16] 0.0, 128
        %2068 = vxpose.xlu0.b32.cont [7/16] 0.0, 128
        %2069 = vxpose.xlu0.b32.cont [8/16] 0.0, 128
        %2070 = vxpose.xlu0.b32.cont [9/16] 0.0, 128
        %2071 = vxpose.xlu0.b32.cont [10/16] 0.0, 128
        %2072 = vxpose.xlu0.b32.cont [11/16] 0.0, 128
        %2073 = vxpose.xlu0.b32.cont [12/16] 0.0, 128
        %2074 = vxpose.xlu0.b32.cont [13/16] 0.0, 128
        %2075 = vxpose.xlu0.b32.cont [14/16] 0.0, 128
        %2076 = vxpose.xlu0.b32.cont [15/16] 0.0, 128
        %2077 = vxpose.xlu0.b32.end [16/16] 0.0, 128
        %v2078 = vpop.trf.xlu0
        %v2079 = vpop.trf.xlu0
        %v2080 = vpop.trf.xlu0
        %v2081 = vpop.trf.xlu0
        %v2082 = vpop.trf.xlu0
        %v2083 = vpop.trf.xlu0
        %v2084 = vpop.trf.xlu0
        %v2085 = vpop.trf.xlu0
        %v2086 = vpop.trf.xlu0
        %v2087 = vpop.trf.xlu0
        %v2088 = vpop.trf.xlu0
        %v2089 = vpop.trf.xlu0
        %v2090 = vpop.trf.xlu0
        %v2091 = vpop.trf.xlu0
        %v2092 = vpop.trf.xlu0
        %v2093 = vpop.trf.xlu0
        %v2094 = vlaneseq
        %v2095 = vshrl.u32 %v2094, 7
        %v2096 = vsub.s32 4, %v2095
        %v2097 = vrot.slane %v2056, %v2096
        %v2098 = vmul.f32 %v2078, %v2097
        %v2099 = vmul.f32 %v2079, %v2097
        %v2100 = vmul.f32 %v2080, %v2097
        %v2101 = vmul.f32 %v2081, %v2097
        %v2102 = vmul.f32 %v2082, %v2097
        %v2103 = vmul.f32 %v2083, %v2097
        %v2104 = vmul.f32 %v2084, %v2097
        %v2105 = vmul.f32 %v2085, %v2097
        %v2106 = vmul.f32 %v2086, %v2097
        %v2107 = vmul.f32 %v2087, %v2097
        %v2108 = vmul.f32 %v2088, %v2097
        %v2109 = vmul.f32 %v2089, %v2097
        %v2110 = vmul.f32 %v2090, %v2097
        %v2111 = vmul.f32 %v2091, %v2097
        %v2112 = vmul.f32 %v2092, %v2097
        %v2113 = vmul.f32 %v2093, %v2097
        %v2114 = vlaneseq
        %v2115 = vshrl.u32 %v2114, 7
        %v2116 = vsub.s32 4, %v2115
        %v2117 = vrot.slane %v2059, %v2116
        %v2118 = vmul.f32 %v2078, %v2117
        %v2119 = vmul.f32 %v2079, %v2117
        %v2120 = vmul.f32 %v2080, %v2117
        %v2121 = vmul.f32 %v2081, %v2117
        %v2122 = vmul.f32 %v2082, %v2117
        %v2123 = vmul.f32 %v2083, %v2117
        %v2124 = vmul.f32 %v2084, %v2117
        %v2125 = vmul.f32 %v2085, %v2117
        %v2126 = vmul.f32 %v2086, %v2117
        %v2127 = vmul.f32 %v2087, %v2117
        %v2128 = vmul.f32 %v2088, %v2117
        %v2129 = vmul.f32 %v2089, %v2117
        %v2130 = vmul.f32 %v2090, %v2117
        %v2131 = vmul.f32 %v2091, %v2117
        %v2132 = vmul.f32 %v2092, %v2117
        %v2133 = vmul.f32 %v2093, %v2117
        %v2134 = vmax.f32 %v2098, %v2118
        %v2135 = vmax.f32 %v2099, %v2119
        %v2136 = vmax.f32 %v2100, %v2120
        %v2137 = vmax.f32 %v2101, %v2121
        %v2138 = vmax.f32 %v2102, %v2122
        %v2139 = vmax.f32 %v2103, %v2123
        %v2140 = vmax.f32 %v2104, %v2124
        %v2141 = vmax.f32 %v2105, %v2125
        %v2142 = vmax.f32 %v2106, %v2126
        %v2143 = vmax.f32 %v2107, %v2127
        %v2144 = vmax.f32 %v2108, %v2128
        %v2145 = vmax.f32 %v2109, %v2129
        %v2146 = vmax.f32 %v2110, %v2130
        %v2147 = vmax.f32 %v2111, %v2131
        %v2148 = vmax.f32 %v2112, %v2132
        %v2149 = vmax.f32 %v2113, %v2133
        %2151 = vset.pattern.permute.xlu0 0
        %2152 = vperm.xlu0 %2151, %v2078
        %v2153 = vpop.permute.xlu0 %2152
        %2156 = vset.pattern.permute.xlu0 0
        %2157 = vperm.xlu0 %2156, %v2079
        %v2158 = vpop.permute.xlu0 %2157
        %2161 = vset.pattern.permute.xlu0 0
        %2162 = vperm.xlu0 %2161, %v2080
        %v2163 = vpop.permute.xlu0 %2162
        %2166 = vset.pattern.permute.xlu0 0
        %2167 = vperm.xlu0 %2166, %v2081
        %v2168 = vpop.permute.xlu0 %2167
        %2171 = vset.pattern.permute.xlu0 0
        %2172 = vperm.xlu0 %2171, %v2082
        %v2173 = vpop.permute.xlu0 %2172
        %2176 = vset.pattern.permute.xlu0 0
        %2177 = vperm.xlu0 %2176, %v2083
        %v2178 = vpop.permute.xlu0 %2177
        %2181 = vset.pattern.permute.xlu0 0
        %2182 = vperm.xlu0 %2181, %v2084
        %v2183 = vpop.permute.xlu0 %2182
        %2186 = vset.pattern.permute.xlu0 0
        %2187 = vperm.xlu0 %2186, %v2085
        %v2188 = vpop.permute.xlu0 %2187
        %2191 = vset.pattern.permute.xlu0 0
        %2192 = vperm.xlu0 %2191, %v2086
        %v2193 = vpop.permute.xlu0 %2192
        %2196 = vset.pattern.permute.xlu0 0
        %2197 = vperm.xlu0 %2196, %v2087
        %v2198 = vpop.permute.xlu0 %2197
        %2201 = vset.pattern.permute.xlu0 0
        %2202 = vperm.xlu0 %2201, %v2088
        %v2203 = vpop.permute.xlu0 %2202
        %2206 = vset.pattern.permute.xlu0 0
        %2207 = vperm.xlu0 %2206, %v2089
        %v2208 = vpop.permute.xlu0 %2207
        %2211 = vset.pattern.permute.xlu0 0
        %2212 = vperm.xlu0 %2211, %v2090
        %v2213 = vpop.permute.xlu0 %2212
        %2216 = vset.pattern.permute.xlu0 0
        %2217 = vperm.xlu0 %2216, %v2091
        %v2218 = vpop.permute.xlu0 %2217
        %2221 = vset.pattern.permute.xlu0 0
        %2222 = vperm.xlu0 %2221, %v2092
        %v2223 = vpop.permute.xlu0 %2222
        %2226 = vset.pattern.permute.xlu0 0
        %2227 = vperm.xlu0 %2226, %v2093
        %v2228 = vpop.permute.xlu0 %2227
        %v2230 = vlaneseq
        %v2231 = vshrl.u32 %v2230, 7
        %v2232 = vsub.s32 4, %v2231
        %v2233 = vrot.slane %v186, %v2232
        %v2234 = vmul.f32 %v2153, %v2233
        %v2235 = vmul.f32 %v2158, %v2233
        %v2236 = vmul.f32 %v2163, %v2233
        %v2237 = vmul.f32 %v2168, %v2233
        %v2238 = vmul.f32 %v2173, %v2233
        %v2239 = vmul.f32 %v2178, %v2233
        %v2240 = vmul.f32 %v2183, %v2233
        %v2241 = vmul.f32 %v2188, %v2233
        %v2242 = vmul.f32 %v2193, %v2233
        %v2243 = vmul.f32 %v2198, %v2233
        %v2244 = vmul.f32 %v2203, %v2233
        %v2245 = vmul.f32 %v2208, %v2233
        %v2246 = vmul.f32 %v2213, %v2233
        %v2247 = vmul.f32 %v2218, %v2233
        %v2248 = vmul.f32 %v2223, %v2233
        %v2249 = vmul.f32 %v2228, %v2233
        %2251 = vset.pattern.permute.xlu0 0
        %2252 = vperm.xlu0 %2251, %v2134
        %v2253 = vpop.permute.xlu0 %2252
        %2256 = vset.pattern.permute.xlu0 0
        %2257 = vperm.xlu0 %2256, %v2135
        %v2258 = vpop.permute.xlu0 %2257
        %2261 = vset.pattern.permute.xlu0 0
        %2262 = vperm.xlu0 %2261, %v2136
        %v2263 = vpop.permute.xlu0 %2262
        %2266 = vset.pattern.permute.xlu0 0
        %2267 = vperm.xlu0 %2266, %v2137
        %v2268 = vpop.permute.xlu0 %2267
        %2271 = vset.pattern.permute.xlu0 0
        %2272 = vperm.xlu0 %2271, %v2138
        %v2273 = vpop.permute.xlu0 %2272
        %2276 = vset.pattern.permute.xlu0 0
        %2277 = vperm.xlu0 %2276, %v2139
        %v2278 = vpop.permute.xlu0 %2277
        %2281 = vset.pattern.permute.xlu0 0
        %2282 = vperm.xlu0 %2281, %v2140
        %v2283 = vpop.permute.xlu0 %2282
        %2286 = vset.pattern.permute.xlu0 0
        %2287 = vperm.xlu0 %2286, %v2141
        %v2288 = vpop.permute.xlu0 %2287
        %2291 = vset.pattern.permute.xlu0 0
        %2292 = vperm.xlu0 %2291, %v2142
        %v2293 = vpop.permute.xlu0 %2292
        %2296 = vset.pattern.permute.xlu0 0
        %2297 = vperm.xlu0 %2296, %v2143
        %v2298 = vpop.permute.xlu0 %2297
        %2301 = vset.pattern.permute.xlu0 0
        %2302 = vperm.xlu0 %2301, %v2144
        %v2303 = vpop.permute.xlu0 %2302
        %2306 = vset.pattern.permute.xlu0 0
        %2307 = vperm.xlu0 %2306, %v2145
        %v2308 = vpop.permute.xlu0 %2307
        %2311 = vset.pattern.permute.xlu0 0
        %2312 = vperm.xlu0 %2311, %v2146
        %v2313 = vpop.permute.xlu0 %2312
        %2316 = vset.pattern.permute.xlu0 0
        %2317 = vperm.xlu0 %2316, %v2147
        %v2318 = vpop.permute.xlu0 %2317
        %2321 = vset.pattern.permute.xlu0 0
        %2322 = vperm.xlu0 %2321, %v2148
        %v2323 = vpop.permute.xlu0 %2322
        %2326 = vset.pattern.permute.xlu0 0
        %2327 = vperm.xlu0 %2326, %v2149
        %v2328 = vpop.permute.xlu0 %2327
        %v2330 = vsub.f32 %v2234, %v2253
        %v2331 = vsub.f32 %v2235, %v2258
        %v2332 = vsub.f32 %v2236, %v2263
        %v2333 = vsub.f32 %v2237, %v2268
        %v2334 = vsub.f32 %v2238, %v2273
        %v2335 = vsub.f32 %v2239, %v2278
        %v2336 = vsub.f32 %v2240, %v2283
        %v2337 = vsub.f32 %v2241, %v2288
        %v2338 = vsub.f32 %v2242, %v2293
        %v2339 = vsub.f32 %v2243, %v2298
        %v2340 = vsub.f32 %v2244, %v2303
        %v2341 = vsub.f32 %v2245, %v2308
        %v2342 = vsub.f32 %v2246, %v2313
        %v2343 = vsub.f32 %v2247, %v2318
        %v2344 = vsub.f32 %v2248, %v2323
        %v2345 = vsub.f32 %v2249, %v2328
        %v2346 = vmul.f32 %v2330, 1.442695
        %v2347 = vpow.pop %v2346
        %v2348 = vmul.f32 %v2331, 1.442695
        %v2349 = vpow.pop %v2348
        %v2350 = vmul.f32 %v2332, 1.442695
        %v2351 = vpow.pop %v2350
        %v2352 = vmul.f32 %v2333, 1.442695
        %v2353 = vpow.pop %v2352
        %v2354 = vmul.f32 %v2334, 1.442695
        %v2355 = vpow.pop %v2354
        %v2356 = vmul.f32 %v2335, 1.442695
        %v2357 = vpow.pop %v2356
        %v2358 = vmul.f32 %v2336, 1.442695
        %v2359 = vpow.pop %v2358
        %v2360 = vmul.f32 %v2337, 1.442695
        %v2361 = vpow.pop %v2360
        %v2362 = vmul.f32 %v2338, 1.442695
        %v2363 = vpow.pop %v2362
        %v2364 = vmul.f32 %v2339, 1.442695
        %v2365 = vpow.pop %v2364
        %v2366 = vmul.f32 %v2340, 1.442695
        %v2367 = vpow.pop %v2366
        %v2368 = vmul.f32 %v2341, 1.442695
        %v2369 = vpow.pop %v2368
        %v2370 = vmul.f32 %v2342, 1.442695
        %v2371 = vpow.pop %v2370
        %v2372 = vmul.f32 %v2343, 1.442695
        %v2373 = vpow.pop %v2372
        %v2374 = vmul.f32 %v2344, 1.442695
        %v2375 = vpow.pop %v2374
        %v2376 = vmul.f32 %v2345, 1.442695
        %v2377 = vpow.pop %v2376
        %2378 = vadd.xlane.f32.xlu0 %v2347
        %v2379 = vpop.xlane.xlu0 %2378
        %2380 = vadd.xlane.f32.xlu0 %v2349
        %v2381 = vpop.xlane.xlu0 %2380
        %2382 = vadd.xlane.f32.xlu0 %v2351
        %v2383 = vpop.xlane.xlu0 %2382
        %2384 = vadd.xlane.f32.xlu0 %v2353
        %v2385 = vpop.xlane.xlu0 %2384
        %2386 = vadd.xlane.f32.xlu0 %v2355
        %v2387 = vpop.xlane.xlu0 %2386
        %2388 = vadd.xlane.f32.xlu0 %v2357
        %v2389 = vpop.xlane.xlu0 %2388
        %2390 = vadd.xlane.f32.xlu0 %v2359
        %v2391 = vpop.xlane.xlu0 %2390
        %2392 = vadd.xlane.f32.xlu0 %v2361
        %v2393 = vpop.xlane.xlu0 %2392
        %2394 = vadd.xlane.f32.xlu0 %v2363
        %v2395 = vpop.xlane.xlu0 %2394
        %2396 = vadd.xlane.f32.xlu0 %v2365
        %v2397 = vpop.xlane.xlu0 %2396
        %2398 = vadd.xlane.f32.xlu0 %v2367
        %v2399 = vpop.xlane.xlu0 %2398
        %2400 = vadd.xlane.f32.xlu0 %v2369
        %v2401 = vpop.xlane.xlu0 %2400
        %2402 = vadd.xlane.f32.xlu0 %v2371
        %v2403 = vpop.xlane.xlu0 %2402
        %2404 = vadd.xlane.f32.xlu0 %v2373
        %v2405 = vpop.xlane.xlu0 %2404
        %2406 = vadd.xlane.f32.xlu0 %v2375
        %v2407 = vpop.xlane.xlu0 %2406
        %2408 = vadd.xlane.f32.xlu0 %v2377
        %v2409 = vpop.xlane.xlu0 %2408
        %v2410 = vrcp.pop %v2379
        %v2411 = vrcp.pop %v2381
        %v2412 = vrcp.pop %v2383
        %v2413 = vrcp.pop %v2385
        %v2414 = vrcp.pop %v2387
        %v2415 = vrcp.pop %v2389
        %v2416 = vrcp.pop %v2391
        %v2417 = vrcp.pop %v2393
        %v2418 = vrcp.pop %v2395
        %v2419 = vrcp.pop %v2397
        %v2420 = vrcp.pop %v2399
        %v2421 = vrcp.pop %v2401
        %v2422 = vrcp.pop %v2403
        %v2423 = vrcp.pop %v2405
        %v2424 = vrcp.pop %v2407
        %v2425 = vrcp.pop %v2409
        %v2426 = vmul.f32 %v2347, %v2410
        %v2427 = vmul.f32 %v2349, %v2411
        %v2428 = vmul.f32 %v2351, %v2412
        %v2429 = vmul.f32 %v2353, %v2413
        %v2430 = vmul.f32 %v2355, %v2414
        %v2431 = vmul.f32 %v2357, %v2415
        %v2432 = vmul.f32 %v2359, %v2416
        %v2433 = vmul.f32 %v2361, %v2417
        %v2434 = vmul.f32 %v2363, %v2418
        %v2435 = vmul.f32 %v2365, %v2419
        %v2436 = vmul.f32 %v2367, %v2420
        %v2437 = vmul.f32 %v2369, %v2421
        %v2438 = vmul.f32 %v2371, %v2422
        %v2439 = vmul.f32 %v2373, %v2423
        %v2440 = vmul.f32 %v2375, %v2424
        %v2441 = vmul.f32 %v2377, %v2425
        %v2442 = vrot.slane %v190, 4
        %2444 = vmatprep.subr.mxu0 0.0
        %2445 = vmatpush1.msra.mxu0 %v2426
        %2446 = vmatprep.subr.mxu0 0.0
        %2447 = vmatpush1.msra.mxu0 %v2427
        %2448 = vmatprep.subr.mxu0 0.0
        %2449 = vmatpush1.msra.mxu0 %v2428
        %2450 = vmatprep.subr.mxu0 0.0
        %2451 = vmatpush1.msra.mxu0 %v2429
        %2452 = vmatprep.subr.mxu0 0.0
        %2453 = vmatpush1.msra.mxu0 %v2430
        %2454 = vmatprep.subr.mxu0 0.0
        %2455 = vmatpush1.msra.mxu0 %v2431
        %2456 = vmatprep.subr.mxu0 0.0
        %2457 = vmatpush1.msra.mxu0 %v2432
        %2458 = vmatprep.subr.mxu0 0.0
        %2459 = vmatpush1.msra.mxu0 %v2433
        %2460 = vmatprep.subr.mxu0 0.0
        %2461 = vmatpush1.msra.mxu0 %v2434
        %2462 = vmatprep.subr.mxu0 0.0
        %2463 = vmatpush1.msra.mxu0 %v2435
        %2464 = vmatprep.subr.mxu0 0.0
        %2465 = vmatpush1.msra.mxu0 %v2436
        %2466 = vmatprep.subr.mxu0 0.0
        %2467 = vmatpush1.msra.mxu0 %v2437
        %2468 = vmatprep.subr.mxu0 0.0
        %2469 = vmatpush1.msra.mxu0 %v2438
        %2470 = vmatprep.subr.mxu0 0.0
        %2471 = vmatpush1.msra.mxu0 %v2439
        %2472 = vmatprep.subr.mxu0 0.0
        %2473 = vmatpush1.msra.mxu0 %v2440
        %2474 = vmatprep.subr.mxu0 0.0
        %2475 = vmatpush1.msra.mxu0 %v2441
        %2476 = vmatprep.subr.mxu0 0.0
        %2477 = vmatpush1.msra.mxu0 0.0
        %2478 = vmatprep.subr.mxu0 0.0
        %2479 = vmatpush1.msra.mxu0 0.0
        %2480 = vmatprep.subr.mxu0 0.0
        %2481 = vmatpush1.msra.mxu0 0.0
        %2482 = vmatprep.subr.mxu0 0.0
        %2483 = vmatpush1.msra.mxu0 0.0
        %2484 = vmatprep.subr.mxu0 0.0
        %2485 = vmatpush1.msra.mxu0 0.0
        %2486 = vmatprep.subr.mxu0 0.0
        %2487 = vmatpush1.msra.mxu0 0.0
        %2488 = vmatprep.subr.mxu0 0.0
        %2489 = vmatpush1.msra.mxu0 0.0
        %2490 = vmatprep.subr.mxu0 0.0
        %2491 = vmatpush1.msra.mxu0 0.0
        %2492 = vmatprep.subr.mxu0 0.0
        %2493 = vmatpush1.msra.mxu0 0.0
        %2494 = vmatprep.subr.mxu0 0.0
        %2495 = vmatpush1.msra.mxu0 0.0
        %2496 = vmatprep.subr.mxu0 0.0
        %2497 = vmatpush1.msra.mxu0 0.0
        %2498 = vmatprep.subr.mxu0 0.0
        %2499 = vmatpush1.msra.mxu0 0.0
        %2500 = vmatprep.subr.mxu0 0.0
        %2501 = vmatpush1.msra.mxu0 0.0
        %2502 = vmatprep.subr.mxu0 0.0
        %2503 = vmatpush1.msra.mxu0 0.0
        %2504 = vmatprep.subr.mxu0 0.0
        %2505 = vmatpush1.msra.mxu0 0.0
        %2506 = vmatprep.subr.mxu0 0.0
        %2507 = vmatpush1.msra.mxu0 0.0
        %2508 = vmatprep.mubr.f32.mxu0 0.0
        %2509 = vmatmul.mubr.f32.gmra.mrb[0].mxu0 %v2442
        %v2510 = vpop.f32.mrb[0].mxu0
        %v2511 = vadd.f32 0.0, %v2510
        %v2512 = vpop.f32.mrb[0].mxu0
        %2513 = vdwg.mxu0
        %v2514 = vmul.f32 %v648, %v2511
        %v2515 = vrot.slane %v178, 4
        %v2517 = vadd.f32 %v2514, %v2515
        %2518 = vst [vmem:[%s170 + $0x4] sm:$0x1] %v2517
        %vm2519 = vcmask 1045509
        %v2520 = vsel %vm2519, %v186, -inf
        %2521 = vmax.xlane.f32.xlu0 %v2520
        %v2522 = vpop.xlane.xlu0 %2521
        %v2523 = vsel %vm2519, %v186, inf
        %2524 = vmin.xlane.f32.xlu0 %v2523
        %v2525 = vpop.xlane.xlu0 %2524
        %v2526 = vrot.slane %v182, 5
        %2528 = vxpose.xlu0.b32.start [1/16] %v2526, 128
        %2529 = vxpose.xlu0.b32.cont [2/16] 0.0, 128
        %2530 = vxpose.xlu0.b32.cont [3/16] 0.0, 128
        %2531 = vxpose.xlu0.b32.cont [4/16] 0.0, 128
        %2532 = vxpose.xlu0.b32.cont [5/16] 0.0, 128
        %2533 = vxpose.xlu0.b32.cont [6/16] 0.0, 128
        %2534 = vxpose.xlu0.b32.cont [7/16] 0.0, 128
        %2535 = vxpose.xlu0.b32.cont [8/16] 0.0, 128
        %2536 = vxpose.xlu0.b32.cont [9/16] 0.0, 128
        %2537 = vxpose.xlu0.b32.cont [10/16] 0.0, 128
        %2538 = vxpose.xlu0.b32.cont [11/16] 0.0, 128
        %2539 = vxpose.xlu0.b32.cont [12/16] 0.0, 128
        %2540 = vxpose.xlu0.b32.cont [13/16] 0.0, 128
        %2541 = vxpose.xlu0.b32.cont [14/16] 0.0, 128
        %2542 = vxpose.xlu0.b32.cont [15/16] 0.0, 128
        %2543 = vxpose.xlu0.b32.end [16/16] 0.0, 128
        %v2544 = vpop.trf.xlu0
        %v2545 = vpop.trf.xlu0
        %v2546 = vpop.trf.xlu0
        %v2547 = vpop.trf.xlu0
        %v2548 = vpop.trf.xlu0
        %v2549 = vpop.trf.xlu0
        %v2550 = vpop.trf.xlu0
        %v2551 = vpop.trf.xlu0
        %v2552 = vpop.trf.xlu0
        %v2553 = vpop.trf.xlu0
        %v2554 = vpop.trf.xlu0
        %v2555 = vpop.trf.xlu0
        %v2556 = vpop.trf.xlu0
        %v2557 = vpop.trf.xlu0
        %v2558 = vpop.trf.xlu0
        %v2559 = vpop.trf.xlu0
        %v2560 = vlaneseq
        %v2561 = vshrl.u32 %v2560, 7
        %v2562 = vsub.s32 5, %v2561
        %v2563 = vrot.slane %v2522, %v2562
        %v2564 = vmul.f32 %v2544, %v2563
        %v2565 = vmul.f32 %v2545, %v2563
        %v2566 = vmul.f32 %v2546, %v2563
        %v2567 = vmul.f32 %v2547, %v2563
        %v2568 = vmul.f32 %v2548, %v2563
        %v2569 = vmul.f32 %v2549, %v2563
        %v2570 = vmul.f32 %v2550, %v2563
        %v2571 = vmul.f32 %v2551, %v2563
        %v2572 = vmul.f32 %v2552, %v2563
        %v2573 = vmul.f32 %v2553, %v2563
        %v2574 = vmul.f32 %v2554, %v2563
        %v2575 = vmul.f32 %v2555, %v2563
        %v2576 = vmul.f32 %v2556, %v2563
        %v2577 = vmul.f32 %v2557, %v2563
        %v2578 = vmul.f32 %v2558, %v2563
        %v2579 = vmul.f32 %v2559, %v2563
        %v2580 = vlaneseq
        %v2581 = vshrl.u32 %v2580, 7
        %v2582 = vsub.s32 5, %v2581
        %v2583 = vrot.slane %v2525, %v2582
        %v2584 = vmul.f32 %v2544, %v2583
        %v2585 = vmul.f32 %v2545, %v2583
        %v2586 = vmul.f32 %v2546, %v2583
        %v2587 = vmul.f32 %v2547, %v2583
        %v2588 = vmul.f32 %v2548, %v2583
        %v2589 = vmul.f32 %v2549, %v2583
        %v2590 = vmul.f32 %v2550, %v2583
        %v2591 = vmul.f32 %v2551, %v2583
        %v2592 = vmul.f32 %v2552, %v2583
        %v2593 = vmul.f32 %v2553, %v2583
        %v2594 = vmul.f32 %v2554, %v2583
        %v2595 = vmul.f32 %v2555, %v2583
        %v2596 = vmul.f32 %v2556, %v2583
        %v2597 = vmul.f32 %v2557, %v2583
        %v2598 = vmul.f32 %v2558, %v2583
        %v2599 = vmul.f32 %v2559, %v2583
        %v2600 = vmax.f32 %v2564, %v2584
        %v2601 = vmax.f32 %v2565, %v2585
        %v2602 = vmax.f32 %v2566, %v2586
        %v2603 = vmax.f32 %v2567, %v2587
        %v2604 = vmax.f32 %v2568, %v2588
        %v2605 = vmax.f32 %v2569, %v2589
        %v2606 = vmax.f32 %v2570, %v2590
        %v2607 = vmax.f32 %v2571, %v2591
        %v2608 = vmax.f32 %v2572, %v2592
        %v2609 = vmax.f32 %v2573, %v2593
        %v2610 = vmax.f32 %v2574, %v2594
        %v2611 = vmax.f32 %v2575, %v2595
        %v2612 = vmax.f32 %v2576, %v2596
        %v2613 = vmax.f32 %v2577, %v2597
        %v2614 = vmax.f32 %v2578, %v2598
        %v2615 = vmax.f32 %v2579, %v2599
        %2617 = vset.pattern.permute.xlu0 0
        %2618 = vperm.xlu0 %2617, %v2544
        %v2619 = vpop.permute.xlu0 %2618
        %2622 = vset.pattern.permute.xlu0 0
        %2623 = vperm.xlu0 %2622, %v2545
        %v2624 = vpop.permute.xlu0 %2623
        %2627 = vset.pattern.permute.xlu0 0
        %2628 = vperm.xlu0 %2627, %v2546
        %v2629 = vpop.permute.xlu0 %2628
        %2632 = vset.pattern.permute.xlu0 0
        %2633 = vperm.xlu0 %2632, %v2547
        %v2634 = vpop.permute.xlu0 %2633
        %2637 = vset.pattern.permute.xlu0 0
        %2638 = vperm.xlu0 %2637, %v2548
        %v2639 = vpop.permute.xlu0 %2638
        %2642 = vset.pattern.permute.xlu0 0
        %2643 = vperm.xlu0 %2642, %v2549
        %v2644 = vpop.permute.xlu0 %2643
        %2647 = vset.pattern.permute.xlu0 0
        %2648 = vperm.xlu0 %2647, %v2550
        %v2649 = vpop.permute.xlu0 %2648
        %2652 = vset.pattern.permute.xlu0 0
        %2653 = vperm.xlu0 %2652, %v2551
        %v2654 = vpop.permute.xlu0 %2653
        %2657 = vset.pattern.permute.xlu0 0
        %2658 = vperm.xlu0 %2657, %v2552
        %v2659 = vpop.permute.xlu0 %2658
        %2662 = vset.pattern.permute.xlu0 0
        %2663 = vperm.xlu0 %2662, %v2553
        %v2664 = vpop.permute.xlu0 %2663
        %2667 = vset.pattern.permute.xlu0 0
        %2668 = vperm.xlu0 %2667, %v2554
        %v2669 = vpop.permute.xlu0 %2668
        %2672 = vset.pattern.permute.xlu0 0
        %2673 = vperm.xlu0 %2672, %v2555
        %v2674 = vpop.permute.xlu0 %2673
        %2677 = vset.pattern.permute.xlu0 0
        %2678 = vperm.xlu0 %2677, %v2556
        %v2679 = vpop.permute.xlu0 %2678
        %2682 = vset.pattern.permute.xlu0 0
        %2683 = vperm.xlu0 %2682, %v2557
        %v2684 = vpop.permute.xlu0 %2683
        %2687 = vset.pattern.permute.xlu0 0
        %2688 = vperm.xlu0 %2687, %v2558
        %v2689 = vpop.permute.xlu0 %2688
        %2692 = vset.pattern.permute.xlu0 0
        %2693 = vperm.xlu0 %2692, %v2559
        %v2694 = vpop.permute.xlu0 %2693
        %v2696 = vlaneseq
        %v2697 = vshrl.u32 %v2696, 7
        %v2698 = vsub.s32 5, %v2697
        %v2699 = vrot.slane %v186, %v2698
        %v2700 = vmul.f32 %v2619, %v2699
        %v2701 = vmul.f32 %v2624, %v2699
        %v2702 = vmul.f32 %v2629, %v2699
        %v2703 = vmul.f32 %v2634, %v2699
        %v2704 = vmul.f32 %v2639, %v2699
        %v2705 = vmul.f32 %v2644, %v2699
        %v2706 = vmul.f32 %v2649, %v2699
        %v2707 = vmul.f32 %v2654, %v2699
        %v2708 = vmul.f32 %v2659, %v2699
        %v2709 = vmul.f32 %v2664, %v2699
        %v2710 = vmul.f32 %v2669, %v2699
        %v2711 = vmul.f32 %v2674, %v2699
        %v2712 = vmul.f32 %v2679, %v2699
        %v2713 = vmul.f32 %v2684, %v2699
        %v2714 = vmul.f32 %v2689, %v2699
        %v2715 = vmul.f32 %v2694, %v2699
        %2717 = vset.pattern.permute.xlu0 0
        %2718 = vperm.xlu0 %2717, %v2600
        %v2719 = vpop.permute.xlu0 %2718
        %2722 = vset.pattern.permute.xlu0 0
        %2723 = vperm.xlu0 %2722, %v2601
        %v2724 = vpop.permute.xlu0 %2723
        %2727 = vset.pattern.permute.xlu0 0
        %2728 = vperm.xlu0 %2727, %v2602
        %v2729 = vpop.permute.xlu0 %2728
        %2732 = vset.pattern.permute.xlu0 0
        %2733 = vperm.xlu0 %2732, %v2603
        %v2734 = vpop.permute.xlu0 %2733
        %2737 = vset.pattern.permute.xlu0 0
        %2738 = vperm.xlu0 %2737, %v2604
        %v2739 = vpop.permute.xlu0 %2738
        %2742 = vset.pattern.permute.xlu0 0
        %2743 = vperm.xlu0 %2742, %v2605
        %v2744 = vpop.permute.xlu0 %2743
        %2747 = vset.pattern.permute.xlu0 0
        %2748 = vperm.xlu0 %2747, %v2606
        %v2749 = vpop.permute.xlu0 %2748
        %2752 = vset.pattern.permute.xlu0 0
        %2753 = vperm.xlu0 %2752, %v2607
        %v2754 = vpop.permute.xlu0 %2753
        %2757 = vset.pattern.permute.xlu0 0
        %2758 = vperm.xlu0 %2757, %v2608
        %v2759 = vpop.permute.xlu0 %2758
        %2762 = vset.pattern.permute.xlu0 0
        %2763 = vperm.xlu0 %2762, %v2609
        %v2764 = vpop.permute.xlu0 %2763
        %2767 = vset.pattern.permute.xlu0 0
        %2768 = vperm.xlu0 %2767, %v2610
        %v2769 = vpop.permute.xlu0 %2768
        %2772 = vset.pattern.permute.xlu0 0
        %2773 = vperm.xlu0 %2772, %v2611
        %v2774 = vpop.permute.xlu0 %2773
        %2777 = vset.pattern.permute.xlu0 0
        %2778 = vperm.xlu0 %2777, %v2612
        %v2779 = vpop.permute.xlu0 %2778
        %2782 = vset.pattern.permute.xlu0 0
        %2783 = vperm.xlu0 %2782, %v2613
        %v2784 = vpop.permute.xlu0 %2783
        %2787 = vset.pattern.permute.xlu0 0
        %2788 = vperm.xlu0 %2787, %v2614
        %v2789 = vpop.permute.xlu0 %2788
        %2792 = vset.pattern.permute.xlu0 0
        %2793 = vperm.xlu0 %2792, %v2615
        %v2794 = vpop.permute.xlu0 %2793
        %v2796 = vsub.f32 %v2700, %v2719
        %v2797 = vsub.f32 %v2701, %v2724
        %v2798 = vsub.f32 %v2702, %v2729
        %v2799 = vsub.f32 %v2703, %v2734
        %v2800 = vsub.f32 %v2704, %v2739
        %v2801 = vsub.f32 %v2705, %v2744
        %v2802 = vsub.f32 %v2706, %v2749
        %v2803 = vsub.f32 %v2707, %v2754
        %v2804 = vsub.f32 %v2708, %v2759
        %v2805 = vsub.f32 %v2709, %v2764
        %v2806 = vsub.f32 %v2710, %v2769
        %v2807 = vsub.f32 %v2711, %v2774
        %v2808 = vsub.f32 %v2712, %v2779
        %v2809 = vsub.f32 %v2713, %v2784
        %v2810 = vsub.f32 %v2714, %v2789
        %v2811 = vsub.f32 %v2715, %v2794
        %v2812 = vmul.f32 %v2796, 1.442695
        %v2813 = vpow.pop %v2812
        %v2814 = vmul.f32 %v2797, 1.442695
        %v2815 = vpow.pop %v2814
        %v2816 = vmul.f32 %v2798, 1.442695
        %v2817 = vpow.pop %v2816
        %v2818 = vmul.f32 %v2799, 1.442695
        %v2819 = vpow.pop %v2818
        %v2820 = vmul.f32 %v2800, 1.442695
        %v2821 = vpow.pop %v2820
        %v2822 = vmul.f32 %v2801, 1.442695
        %v2823 = vpow.pop %v2822
        %v2824 = vmul.f32 %v2802, 1.442695
        %v2825 = vpow.pop %v2824
        %v2826 = vmul.f32 %v2803, 1.442695
        %v2827 = vpow.pop %v2826
        %v2828 = vmul.f32 %v2804, 1.442695
        %v2829 = vpow.pop %v2828
        %v2830 = vmul.f32 %v2805, 1.442695
        %v2831 = vpow.pop %v2830
        %v2832 = vmul.f32 %v2806, 1.442695
        %v2833 = vpow.pop %v2832
        %v2834 = vmul.f32 %v2807, 1.442695
        %v2835 = vpow.pop %v2834
        %v2836 = vmul.f32 %v2808, 1.442695
        %v2837 = vpow.pop %v2836
        %v2838 = vmul.f32 %v2809, 1.442695
        %v2839 = vpow.pop %v2838
        %v2840 = vmul.f32 %v2810, 1.442695
        %v2841 = vpow.pop %v2840
        %v2842 = vmul.f32 %v2811, 1.442695
        %v2843 = vpow.pop %v2842
        %2844 = vadd.xlane.f32.xlu0 %v2813
        %v2845 = vpop.xlane.xlu0 %2844
        %2846 = vadd.xlane.f32.xlu0 %v2815
        %v2847 = vpop.xlane.xlu0 %2846
        %2848 = vadd.xlane.f32.xlu0 %v2817
        %v2849 = vpop.xlane.xlu0 %2848
        %2850 = vadd.xlane.f32.xlu0 %v2819
        %v2851 = vpop.xlane.xlu0 %2850
        %2852 = vadd.xlane.f32.xlu0 %v2821
        %v2853 = vpop.xlane.xlu0 %2852
        %2854 = vadd.xlane.f32.xlu0 %v2823
        %v2855 = vpop.xlane.xlu0 %2854
        %2856 = vadd.xlane.f32.xlu0 %v2825
        %v2857 = vpop.xlane.xlu0 %2856
        %2858 = vadd.xlane.f32.xlu0 %v2827
        %v2859 = vpop.xlane.xlu0 %2858
        %2860 = vadd.xlane.f32.xlu0 %v2829
        %v2861 = vpop.xlane.xlu0 %2860
        %2862 = vadd.xlane.f32.xlu0 %v2831
        %v2863 = vpop.xlane.xlu0 %2862
        %2864 = vadd.xlane.f32.xlu0 %v2833
        %v2865 = vpop.xlane.xlu0 %2864
        %2866 = vadd.xlane.f32.xlu0 %v2835
        %v2867 = vpop.xlane.xlu0 %2866
        %2868 = vadd.xlane.f32.xlu0 %v2837
        %v2869 = vpop.xlane.xlu0 %2868
        %2870 = vadd.xlane.f32.xlu0 %v2839
        %v2871 = vpop.xlane.xlu0 %2870
        %2872 = vadd.xlane.f32.xlu0 %v2841
        %v2873 = vpop.xlane.xlu0 %2872
        %2874 = vadd.xlane.f32.xlu0 %v2843
        %v2875 = vpop.xlane.xlu0 %2874
        %v2876 = vrcp.pop %v2845
        %v2877 = vrcp.pop %v2847
        %v2878 = vrcp.pop %v2849
        %v2879 = vrcp.pop %v2851
        %v2880 = vrcp.pop %v2853
        %v2881 = vrcp.pop %v2855
        %v2882 = vrcp.pop %v2857
        %v2883 = vrcp.pop %v2859
        %v2884 = vrcp.pop %v2861
        %v2885 = vrcp.pop %v2863
        %v2886 = vrcp.pop %v2865
        %v2887 = vrcp.pop %v2867
        %v2888 = vrcp.pop %v2869
        %v2889 = vrcp.pop %v2871
        %v2890 = vrcp.pop %v2873
        %v2891 = vrcp.pop %v2875
        %v2892 = vmul.f32 %v2813, %v2876
        %v2893 = vmul.f32 %v2815, %v2877
        %v2894 = vmul.f32 %v2817, %v2878
        %v2895 = vmul.f32 %v2819, %v2879
        %v2896 = vmul.f32 %v2821, %v2880
        %v2897 = vmul.f32 %v2823, %v2881
        %v2898 = vmul.f32 %v2825, %v2882
        %v2899 = vmul.f32 %v2827, %v2883
        %v2900 = vmul.f32 %v2829, %v2884
        %v2901 = vmul.f32 %v2831, %v2885
        %v2902 = vmul.f32 %v2833, %v2886
        %v2903 = vmul.f32 %v2835, %v2887
        %v2904 = vmul.f32 %v2837, %v2888
        %v2905 = vmul.f32 %v2839, %v2889
        %v2906 = vmul.f32 %v2841, %v2890
        %v2907 = vmul.f32 %v2843, %v2891
        %v2908 = vrot.slane %v190, 5
        %2910 = vmatprep.subr.mxu0 0.0
        %2911 = vmatpush1.msra.mxu0 %v2892
        %2912 = vmatprep.subr.mxu0 0.0
        %2913 = vmatpush1.msra.mxu0 %v2893
        %2914 = vmatprep.subr.mxu0 0.0
        %2915 = vmatpush1.msra.mxu0 %v2894
        %2916 = vmatprep.subr.mxu0 0.0
        %2917 = vmatpush1.msra.mxu0 %v2895
        %2918 = vmatprep.subr.mxu0 0.0
        %2919 = vmatpush1.msra.mxu0 %v2896
        %2920 = vmatprep.subr.mxu0 0.0
        %2921 = vmatpush1.msra.mxu0 %v2897
        %2922 = vmatprep.subr.mxu0 0.0
        %2923 = vmatpush1.msra.mxu0 %v2898
        %2924 = vmatprep.subr.mxu0 0.0
        %2925 = vmatpush1.msra.mxu0 %v2899
        %2926 = vmatprep.subr.mxu0 0.0
        %2927 = vmatpush1.msra.mxu0 %v2900
        %2928 = vmatprep.subr.mxu0 0.0
        %2929 = vmatpush1.msra.mxu0 %v2901
        %2930 = vmatprep.subr.mxu0 0.0
        %2931 = vmatpush1.msra.mxu0 %v2902
        %2932 = vmatprep.subr.mxu0 0.0
        %2933 = vmatpush1.msra.mxu0 %v2903
        %2934 = vmatprep.subr.mxu0 0.0
        %2935 = vmatpush1.msra.mxu0 %v2904
        %2936 = vmatprep.subr.mxu0 0.0
        %2937 = vmatpush1.msra.mxu0 %v2905
        %2938 = vmatprep.subr.mxu0 0.0
        %2939 = vmatpush1.msra.mxu0 %v2906
        %2940 = vmatprep.subr.mxu0 0.0
        %2941 = vmatpush1.msra.mxu0 %v2907
        %2942 = vmatprep.subr.mxu0 0.0
        %2943 = vmatpush1.msra.mxu0 0.0
        %2944 = vmatprep.subr.mxu0 0.0
        %2945 = vmatpush1.msra.mxu0 0.0
        %2946 = vmatprep.subr.mxu0 0.0
        %2947 = vmatpush1.msra.mxu0 0.0
        %2948 = vmatprep.subr.mxu0 0.0
        %2949 = vmatpush1.msra.mxu0 0.0
        %2950 = vmatprep.subr.mxu0 0.0
        %2951 = vmatpush1.msra.mxu0 0.0
        %2952 = vmatprep.subr.mxu0 0.0
        %2953 = vmatpush1.msra.mxu0 0.0
        %2954 = vmatprep.subr.mxu0 0.0
        %2955 = vmatpush1.msra.mxu0 0.0
        %2956 = vmatprep.subr.mxu0 0.0
        %2957 = vmatpush1.msra.mxu0 0.0
        %2958 = vmatprep.subr.mxu0 0.0
        %2959 = vmatpush1.msra.mxu0 0.0
        %2960 = vmatprep.subr.mxu0 0.0
        %2961 = vmatpush1.msra.mxu0 0.0
        %2962 = vmatprep.subr.mxu0 0.0
        %2963 = vmatpush1.msra.mxu0 0.0
        %2964 = vmatprep.subr.mxu0 0.0
        %2965 = vmatpush1.msra.mxu0 0.0
        %2966 = vmatprep.subr.mxu0 0.0
        %2967 = vmatpush1.msra.mxu0 0.0
        %2968 = vmatprep.subr.mxu0 0.0
        %2969 = vmatpush1.msra.mxu0 0.0
        %2970 = vmatprep.subr.mxu0 0.0
        %2971 = vmatpush1.msra.mxu0 0.0
        %2972 = vmatprep.subr.mxu0 0.0
        %2973 = vmatpush1.msra.mxu0 0.0
        %2974 = vmatprep.mubr.f32.mxu0 0.0
        %2975 = vmatmul.mubr.f32.gmra.mrb[0].mxu0 %v2908
        %v2976 = vpop.f32.mrb[0].mxu0
        %v2977 = vadd.f32 0.0, %v2976
        %v2978 = vpop.f32.mrb[0].mxu0
        %2979 = vdwg.mxu0
        %v2980 = vmul.f32 %v648, %v2977
        %v2981 = vrot.slane %v178, 5
        %v2983 = vadd.f32 %v2980, %v2981
        %2984 = vst [vmem:[%s170 + $0x5] sm:$0x1] %v2983
        %vm2985 = vcmask 1046534
        %v2986 = vsel %vm2985, %v186, -inf
        %2987 = vmax.xlane.f32.xlu0 %v2986
        %v2988 = vpop.xlane.xlu0 %2987
        %v2989 = vsel %vm2985, %v186, inf
        %2990 = vmin.xlane.f32.xlu0 %v2989
        %v2991 = vpop.xlane.xlu0 %2990
        %v2992 = vrot.slane %v182, 6
        %2994 = vxpose.xlu0.b32.start [1/16] %v2992, 128
        %2995 = vxpose.xlu0.b32.cont [2/16] 0.0, 128
        %2996 = vxpose.xlu0.b32.cont [3/16] 0.0, 128
        %2997 = vxpose.xlu0.b32.cont [4/16] 0.0, 128
        %2998 = vxpose.xlu0.b32.cont [5/16] 0.0, 128
        %2999 = vxpose.xlu0.b32.cont [6/16] 0.0, 128
        %3000 = vxpose.xlu0.b32.cont [7/16] 0.0, 128
        %3001 = vxpose.xlu0.b32.cont [8/16] 0.0, 128
        %3002 = vxpose.xlu0.b32.cont [9/16] 0.0, 128
        %3003 = vxpose.xlu0.b32.cont [10/16] 0.0, 128
        %3004 = vxpose.xlu0.b32.cont [11/16] 0.0, 128
        %3005 = vxpose.xlu0.b32.cont [12/16] 0.0, 128
        %3006 = vxpose.xlu0.b32.cont [13/16] 0.0, 128
        %3007 = vxpose.xlu0.b32.cont [14/16] 0.0, 128
        %3008 = vxpose.xlu0.b32.cont [15/16] 0.0, 128
        %3009 = vxpose.xlu0.b32.end [16/16] 0.0, 128
        %v3010 = vpop.trf.xlu0
        %v3011 = vpop.trf.xlu0
        %v3012 = vpop.trf.xlu0
        %v3013 = vpop.trf.xlu0
        %v3014 = vpop.trf.xlu0
        %v3015 = vpop.trf.xlu0
        %v3016 = vpop.trf.xlu0
        %v3017 = vpop.trf.xlu0
        %v3018 = vpop.trf.xlu0
        %v3019 = vpop.trf.xlu0
        %v3020 = vpop.trf.xlu0
        %v3021 = vpop.trf.xlu0
        %v3022 = vpop.trf.xlu0
        %v3023 = vpop.trf.xlu0
        %v3024 = vpop.trf.xlu0
        %v3025 = vpop.trf.xlu0
        %v3026 = vlaneseq
        %v3027 = vshrl.u32 %v3026, 7
        %v3028 = vsub.s32 6, %v3027
        %v3029 = vrot.slane %v2988, %v3028
        %v3030 = vmul.f32 %v3010, %v3029
        %v3031 = vmul.f32 %v3011, %v3029
        %v3032 = vmul.f32 %v3012, %v3029
        %v3033 = vmul.f32 %v3013, %v3029
        %v3034 = vmul.f32 %v3014, %v3029
        %v3035 = vmul.f32 %v3015, %v3029
        %v3036 = vmul.f32 %v3016, %v3029
        %v3037 = vmul.f32 %v3017, %v3029
        %v3038 = vmul.f32 %v3018, %v3029
        %v3039 = vmul.f32 %v3019, %v3029
        %v3040 = vmul.f32 %v3020, %v3029
        %v3041 = vmul.f32 %v3021, %v3029
        %v3042 = vmul.f32 %v3022, %v3029
        %v3043 = vmul.f32 %v3023, %v3029
        %v3044 = vmul.f32 %v3024, %v3029
        %v3045 = vmul.f32 %v3025, %v3029
        %v3046 = vlaneseq
        %v3047 = vshrl.u32 %v3046, 7
        %v3048 = vsub.s32 6, %v3047
        %v3049 = vrot.slane %v2991, %v3048
        %v3050 = vmul.f32 %v3010, %v3049
        %v3051 = vmul.f32 %v3011, %v3049
        %v3052 = vmul.f32 %v3012, %v3049
        %v3053 = vmul.f32 %v3013, %v3049
        %v3054 = vmul.f32 %v3014, %v3049
        %v3055 = vmul.f32 %v3015, %v3049
        %v3056 = vmul.f32 %v3016, %v3049
        %v3057 = vmul.f32 %v3017, %v3049
        %v3058 = vmul.f32 %v3018, %v3049
        %v3059 = vmul.f32 %v3019, %v3049
        %v3060 = vmul.f32 %v3020, %v3049
        %v3061 = vmul.f32 %v3021, %v3049
        %v3062 = vmul.f32 %v3022, %v3049
        %v3063 = vmul.f32 %v3023, %v3049
        %v3064 = vmul.f32 %v3024, %v3049
        %v3065 = vmul.f32 %v3025, %v3049
        %v3066 = vmax.f32 %v3030, %v3050
        %v3067 = vmax.f32 %v3031, %v3051
        %v3068 = vmax.f32 %v3032, %v3052
        %v3069 = vmax.f32 %v3033, %v3053
        %v3070 = vmax.f32 %v3034, %v3054
        %v3071 = vmax.f32 %v3035, %v3055
        %v3072 = vmax.f32 %v3036, %v3056
        %v3073 = vmax.f32 %v3037, %v3057
        %v3074 = vmax.f32 %v3038, %v3058
        %v3075 = vmax.f32 %v3039, %v3059
        %v3076 = vmax.f32 %v3040, %v3060
        %v3077 = vmax.f32 %v3041, %v3061
        %v3078 = vmax.f32 %v3042, %v3062
        %v3079 = vmax.f32 %v3043, %v3063
        %v3080 = vmax.f32 %v3044, %v3064
        %v3081 = vmax.f32 %v3045, %v3065
        %3083 = vset.pattern.permute.xlu0 0
        %3084 = vperm.xlu0 %3083, %v3010
        %v3085 = vpop.permute.xlu0 %3084
        %3088 = vset.pattern.permute.xlu0 0
        %3089 = vperm.xlu0 %3088, %v3011
        %v3090 = vpop.permute.xlu0 %3089
        %3093 = vset.pattern.permute.xlu0 0
        %3094 = vperm.xlu0 %3093, %v3012
        %v3095 = vpop.permute.xlu0 %3094
        %3098 = vset.pattern.permute.xlu0 0
        %3099 = vperm.xlu0 %3098, %v3013
        %v3100 = vpop.permute.xlu0 %3099
        %3103 = vset.pattern.permute.xlu0 0
        %3104 = vperm.xlu0 %3103, %v3014
        %v3105 = vpop.permute.xlu0 %3104
        %3108 = vset.pattern.permute.xlu0 0
        %3109 = vperm.xlu0 %3108, %v3015
        %v3110 = vpop.permute.xlu0 %3109
        %3113 = vset.pattern.permute.xlu0 0
        %3114 = vperm.xlu0 %3113, %v3016
        %v3115 = vpop.permute.xlu0 %3114
        %3118 = vset.pattern.permute.xlu0 0
        %3119 = vperm.xlu0 %3118, %v3017
        %v3120 = vpop.permute.xlu0 %3119
        %3123 = vset.pattern.permute.xlu0 0
        %3124 = vperm.xlu0 %3123, %v3018
        %v3125 = vpop.permute.xlu0 %3124
        %3128 = vset.pattern.permute.xlu0 0
        %3129 = vperm.xlu0 %3128, %v3019
        %v3130 = vpop.permute.xlu0 %3129
        %3133 = vset.pattern.permute.xlu0 0
        %3134 = vperm.xlu0 %3133, %v3020
        %v3135 = vpop.permute.xlu0 %3134
        %3138 = vset.pattern.permute.xlu0 0
        %3139 = vperm.xlu0 %3138, %v3021
        %v3140 = vpop.permute.xlu0 %3139
        %3143 = vset.pattern.permute.xlu0 0
        %3144 = vperm.xlu0 %3143, %v3022
        %v3145 = vpop.permute.xlu0 %3144
        %3148 = vset.pattern.permute.xlu0 0
        %3149 = vperm.xlu0 %3148, %v3023
        %v3150 = vpop.permute.xlu0 %3149
        %3153 = vset.pattern.permute.xlu0 0
        %3154 = vperm.xlu0 %3153, %v3024
        %v3155 = vpop.permute.xlu0 %3154
        %3158 = vset.pattern.permute.xlu0 0
        %3159 = vperm.xlu0 %3158, %v3025
        %v3160 = vpop.permute.xlu0 %3159
        %v3162 = vlaneseq
        %v3163 = vshrl.u32 %v3162, 7
        %v3164 = vsub.s32 6, %v3163
        %v3165 = vrot.slane %v186, %v3164
        %v3166 = vmul.f32 %v3085, %v3165
        %v3167 = vmul.f32 %v3090, %v3165
        %v3168 = vmul.f32 %v3095, %v3165
        %v3169 = vmul.f32 %v3100, %v3165
        %v3170 = vmul.f32 %v3105, %v3165
        %v3171 = vmul.f32 %v3110, %v3165
        %v3172 = vmul.f32 %v3115, %v3165
        %v3173 = vmul.f32 %v3120, %v3165
        %v3174 = vmul.f32 %v3125, %v3165
        %v3175 = vmul.f32 %v3130, %v3165
        %v3176 = vmul.f32 %v3135, %v3165
        %v3177 = vmul.f32 %v3140, %v3165
        %v3178 = vmul.f32 %v3145, %v3165
        %v3179 = vmul.f32 %v3150, %v3165
        %v3180 = vmul.f32 %v3155, %v3165
        %v3181 = vmul.f32 %v3160, %v3165
        %3183 = vset.pattern.permute.xlu0 0
        %3184 = vperm.xlu0 %3183, %v3066
        %v3185 = vpop.permute.xlu0 %3184
        %3188 = vset.pattern.permute.xlu0 0
        %3189 = vperm.xlu0 %3188, %v3067
        %v3190 = vpop.permute.xlu0 %3189
        %3193 = vset.pattern.permute.xlu0 0
        %3194 = vperm.xlu0 %3193, %v3068
        %v3195 = vpop.permute.xlu0 %3194
        %3198 = vset.pattern.permute.xlu0 0
        %3199 = vperm.xlu0 %3198, %v3069
        %v3200 = vpop.permute.xlu0 %3199
        %3203 = vset.pattern.permute.xlu0 0
        %3204 = vperm.xlu0 %3203, %v3070
        %v3205 = vpop.permute.xlu0 %3204
        %3208 = vset.pattern.permute.xlu0 0
        %3209 = vperm.xlu0 %3208, %v3071
        %v3210 = vpop.permute.xlu0 %3209
        %3213 = vset.pattern.permute.xlu0 0
        %3214 = vperm.xlu0 %3213, %v3072
        %v3215 = vpop.permute.xlu0 %3214
        %3218 = vset.pattern.permute.xlu0 0
        %3219 = vperm.xlu0 %3218, %v3073
        %v3220 = vpop.permute.xlu0 %3219
        %3223 = vset.pattern.permute.xlu0 0
        %3224 = vperm.xlu0 %3223, %v3074
        %v3225 = vpop.permute.xlu0 %3224
        %3228 = vset.pattern.permute.xlu0 0
        %3229 = vperm.xlu0 %3228, %v3075
        %v3230 = vpop.permute.xlu0 %3229
        %3233 = vset.pattern.permute.xlu0 0
        %3234 = vperm.xlu0 %3233, %v3076
        %v3235 = vpop.permute.xlu0 %3234
        %3238 = vset.pattern.permute.xlu0 0
        %3239 = vperm.xlu0 %3238, %v3077
        %v3240 = vpop.permute.xlu0 %3239
        %3243 = vset.pattern.permute.xlu0 0
        %3244 = vperm.xlu0 %3243, %v3078
        %v3245 = vpop.permute.xlu0 %3244
        %3248 = vset.pattern.permute.xlu0 0
        %3249 = vperm.xlu0 %3248, %v3079
        %v3250 = vpop.permute.xlu0 %3249
        %3253 = vset.pattern.permute.xlu0 0
        %3254 = vperm.xlu0 %3253, %v3080
        %v3255 = vpop.permute.xlu0 %3254
        %3258 = vset.pattern.permute.xlu0 0
        %3259 = vperm.xlu0 %3258, %v3081
        %v3260 = vpop.permute.xlu0 %3259
        %v3262 = vsub.f32 %v3166, %v3185
        %v3263 = vsub.f32 %v3167, %v3190
        %v3264 = vsub.f32 %v3168, %v3195
        %v3265 = vsub.f32 %v3169, %v3200
        %v3266 = vsub.f32 %v3170, %v3205
        %v3267 = vsub.f32 %v3171, %v3210
        %v3268 = vsub.f32 %v3172, %v3215
        %v3269 = vsub.f32 %v3173, %v3220
        %v3270 = vsub.f32 %v3174, %v3225
        %v3271 = vsub.f32 %v3175, %v3230
        %v3272 = vsub.f32 %v3176, %v3235
        %v3273 = vsub.f32 %v3177, %v3240
        %v3274 = vsub.f32 %v3178, %v3245
        %v3275 = vsub.f32 %v3179, %v3250
        %v3276 = vsub.f32 %v3180, %v3255
        %v3277 = vsub.f32 %v3181, %v3260
        %v3278 = vmul.f32 %v3262, 1.442695
        %v3279 = vpow.pop %v3278
        %v3280 = vmul.f32 %v3263, 1.442695
        %v3281 = vpow.pop %v3280
        %v3282 = vmul.f32 %v3264, 1.442695
        %v3283 = vpow.pop %v3282
        %v3284 = vmul.f32 %v3265, 1.442695
        %v3285 = vpow.pop %v3284
        %v3286 = vmul.f32 %v3266, 1.442695
        %v3287 = vpow.pop %v3286
        %v3288 = vmul.f32 %v3267, 1.442695
        %v3289 = vpow.pop %v3288
        %v3290 = vmul.f32 %v3268, 1.442695
        %v3291 = vpow.pop %v3290
        %v3292 = vmul.f32 %v3269, 1.442695
        %v3293 = vpow.pop %v3292
        %v3294 = vmul.f32 %v3270, 1.442695
        %v3295 = vpow.pop %v3294
        %v3296 = vmul.f32 %v3271, 1.442695
        %v3297 = vpow.pop %v3296
        %v3298 = vmul.f32 %v3272, 1.442695
        %v3299 = vpow.pop %v3298
        %v3300 = vmul.f32 %v3273, 1.442695
        %v3301 = vpow.pop %v3300
        %v3302 = vmul.f32 %v3274, 1.442695
        %v3303 = vpow.pop %v3302
        %v3304 = vmul.f32 %v3275, 1.442695
        %v3305 = vpow.pop %v3304
        %v3306 = vmul.f32 %v3276, 1.442695
        %v3307 = vpow.pop %v3306
        %v3308 = vmul.f32 %v3277, 1.442695
        %v3309 = vpow.pop %v3308
        %3310 = vadd.xlane.f32.xlu0 %v3279
        %v3311 = vpop.xlane.xlu0 %3310
        %3312 = vadd.xlane.f32.xlu0 %v3281
        %v3313 = vpop.xlane.xlu0 %3312
        %3314 = vadd.xlane.f32.xlu0 %v3283
        %v3315 = vpop.xlane.xlu0 %3314
        %3316 = vadd.xlane.f32.xlu0 %v3285
        %v3317 = vpop.xlane.xlu0 %3316
        %3318 = vadd.xlane.f32.xlu0 %v3287
        %v3319 = vpop.xlane.xlu0 %3318
        %3320 = vadd.xlane.f32.xlu0 %v3289
        %v3321 = vpop.xlane.xlu0 %3320
        %3322 = vadd.xlane.f32.xlu0 %v3291
        %v3323 = vpop.xlane.xlu0 %3322
        %3324 = vadd.xlane.f32.xlu0 %v3293
        %v3325 = vpop.xlane.xlu0 %3324
        %3326 = vadd.xlane.f32.xlu0 %v3295
        %v3327 = vpop.xlane.xlu0 %3326
        %3328 = vadd.xlane.f32.xlu0 %v3297
        %v3329 = vpop.xlane.xlu0 %3328
        %3330 = vadd.xlane.f32.xlu0 %v3299
        %v3331 = vpop.xlane.xlu0 %3330
        %3332 = vadd.xlane.f32.xlu0 %v3301
        %v3333 = vpop.xlane.xlu0 %3332
        %3334 = vadd.xlane.f32.xlu0 %v3303
        %v3335 = vpop.xlane.xlu0 %3334
        %3336 = vadd.xlane.f32.xlu0 %v3305
        %v3337 = vpop.xlane.xlu0 %3336
        %3338 = vadd.xlane.f32.xlu0 %v3307
        %v3339 = vpop.xlane.xlu0 %3338
        %3340 = vadd.xlane.f32.xlu0 %v3309
        %v3341 = vpop.xlane.xlu0 %3340
        %v3342 = vrcp.pop %v3311
        %v3343 = vrcp.pop %v3313
        %v3344 = vrcp.pop %v3315
        %v3345 = vrcp.pop %v3317
        %v3346 = vrcp.pop %v3319
        %v3347 = vrcp.pop %v3321
        %v3348 = vrcp.pop %v3323
        %v3349 = vrcp.pop %v3325
        %v3350 = vrcp.pop %v3327
        %v3351 = vrcp.pop %v3329
        %v3352 = vrcp.pop %v3331
        %v3353 = vrcp.pop %v3333
        %v3354 = vrcp.pop %v3335
        %v3355 = vrcp.pop %v3337
        %v3356 = vrcp.pop %v3339
        %v3357 = vrcp.pop %v3341
        %v3358 = vmul.f32 %v3279, %v3342
        %v3359 = vmul.f32 %v3281, %v3343
        %v3360 = vmul.f32 %v3283, %v3344
        %v3361 = vmul.f32 %v3285, %v3345
        %v3362 = vmul.f32 %v3287, %v3346
        %v3363 = vmul.f32 %v3289, %v3347
        %v3364 = vmul.f32 %v3291, %v3348
        %v3365 = vmul.f32 %v3293, %v3349
        %v3366 = vmul.f32 %v3295, %v3350
        %v3367 = vmul.f32 %v3297, %v3351
        %v3368 = vmul.f32 %v3299, %v3352
        %v3369 = vmul.f32 %v3301, %v3353
        %v3370 = vmul.f32 %v3303, %v3354
        %v3371 = vmul.f32 %v3305, %v3355
        %v3372 = vmul.f32 %v3307, %v3356
        %v3373 = vmul.f32 %v3309, %v3357
        %v3374 = vrot.slane %v190, 6
        %3376 = vmatprep.subr.mxu0 0.0
        %3377 = vmatpush1.msra.mxu0 %v3358
        %3378 = vmatprep.subr.mxu0 0.0
        %3379 = vmatpush1.msra.mxu0 %v3359
        %3380 = vmatprep.subr.mxu0 0.0
        %3381 = vmatpush1.msra.mxu0 %v3360
        %3382 = vmatprep.subr.mxu0 0.0
        %3383 = vmatpush1.msra.mxu0 %v3361
        %3384 = vmatprep.subr.mxu0 0.0
        %3385 = vmatpush1.msra.mxu0 %v3362
        %3386 = vmatprep.subr.mxu0 0.0
        %3387 = vmatpush1.msra.mxu0 %v3363
        %3388 = vmatprep.subr.mxu0 0.0
        %3389 = vmatpush1.msra.mxu0 %v3364
        %3390 = vmatprep.subr.mxu0 0.0
        %3391 = vmatpush1.msra.mxu0 %v3365
        %3392 = vmatprep.subr.mxu0 0.0
        %3393 = vmatpush1.msra.mxu0 %v3366
        %3394 = vmatprep.subr.mxu0 0.0
        %3395 = vmatpush1.msra.mxu0 %v3367
        %3396 = vmatprep.subr.mxu0 0.0
        %3397 = vmatpush1.msra.mxu0 %v3368
        %3398 = vmatprep.subr.mxu0 0.0
        %3399 = vmatpush1.msra.mxu0 %v3369
        %3400 = vmatprep.subr.mxu0 0.0
        %3401 = vmatpush1.msra.mxu0 %v3370
        %3402 = vmatprep.subr.mxu0 0.0
        %3403 = vmatpush1.msra.mxu0 %v3371
        %3404 = vmatprep.subr.mxu0 0.0
        %3405 = vmatpush1.msra.mxu0 %v3372
        %3406 = vmatprep.subr.mxu0 0.0
        %3407 = vmatpush1.msra.mxu0 %v3373
        %3408 = vmatprep.subr.mxu0 0.0
        %3409 = vmatpush1.msra.mxu0 0.0
        %3410 = vmatprep.subr.mxu0 0.0
        %3411 = vmatpush1.msra.mxu0 0.0
        %3412 = vmatprep.subr.mxu0 0.0
        %3413 = vmatpush1.msra.mxu0 0.0
        %3414 = vmatprep.subr.mxu0 0.0
        %3415 = vmatpush1.msra.mxu0 0.0
        %3416 = vmatprep.subr.mxu0 0.0
        %3417 = vmatpush1.msra.mxu0 0.0
        %3418 = vmatprep.subr.mxu0 0.0
        %3419 = vmatpush1.msra.mxu0 0.0
        %3420 = vmatprep.subr.mxu0 0.0
        %3421 = vmatpush1.msra.mxu0 0.0
        %3422 = vmatprep.subr.mxu0 0.0
        %3423 = vmatpush1.msra.mxu0 0.0
        %3424 = vmatprep.subr.mxu0 0.0
        %3425 = vmatpush1.msra.mxu0 0.0
        %3426 = vmatprep.subr.mxu0 0.0
        %3427 = vmatpush1.msra.mxu0 0.0
        %3428 = vmatprep.subr.mxu0 0.0
        %3429 = vmatpush1.msra.mxu0 0.0
        %3430 = vmatprep.subr.mxu0 0.0
        %3431 = vmatpush1.msra.mxu0 0.0
        %3432 = vmatprep.subr.mxu0 0.0
        %3433 = vmatpush1.msra.mxu0 0.0
        %3434 = vmatprep.subr.mxu0 0.0
        %3435 = vmatpush1.msra.mxu0 0.0
        %3436 = vmatprep.subr.mxu0 0.0
        %3437 = vmatpush1.msra.mxu0 0.0
        %3438 = vmatprep.subr.mxu0 0.0
        %3439 = vmatpush1.msra.mxu0 0.0
        %3440 = vmatprep.mubr.f32.mxu0 0.0
        %3441 = vmatmul.mubr.f32.gmra.mrb[0].mxu0 %v3374
        %v3442 = vpop.f32.mrb[0].mxu0
        %v3443 = vadd.f32 0.0, %v3442
        %v3444 = vpop.f32.mrb[0].mxu0
        %3445 = vdwg.mxu0
        %v3446 = vmul.f32 %v648, %v3443
        %v3447 = vrot.slane %v178, 6
        %v3449 = vadd.f32 %v3446, %v3447
        %3450 = vst [vmem:[%s170 + $0x6] sm:$0x1] %v3449
        %vm3451 = vcmask 1047559
        %v3452 = vsel %vm3451, %v186, -inf
        %3453 = vmax.xlane.f32.xlu0 %v3452
        %v3454 = vpop.xlane.xlu0 %3453
        %v3455 = vsel %vm3451, %v186, inf
        %3456 = vmin.xlane.f32.xlu0 %v3455
        %v3457 = vpop.xlane.xlu0 %3456
        %v3458 = vrot.slane %v182, 7
        %3460 = vxpose.xlu0.b32.start [1/16] %v3458, 128
        %3461 = vxpose.xlu0.b32.cont [2/16] 0.0, 128
        %3462 = vxpose.xlu0.b32.cont [3/16] 0.0, 128
        %3463 = vxpose.xlu0.b32.cont [4/16] 0.0, 128
        %3464 = vxpose.xlu0.b32.cont [5/16] 0.0, 128
        %3465 = vxpose.xlu0.b32.cont [6/16] 0.0, 128
        %3466 = vxpose.xlu0.b32.cont [7/16] 0.0, 128
        %3467 = vxpose.xlu0.b32.cont [8/16] 0.0, 128
        %3468 = vxpose.xlu0.b32.cont [9/16] 0.0, 128
        %3469 = vxpose.xlu0.b32.cont [10/16] 0.0, 128
        %3470 = vxpose.xlu0.b32.cont [11/16] 0.0, 128
        %3471 = vxpose.xlu0.b32.cont [12/16] 0.0, 128
        %3472 = vxpose.xlu0.b32.cont [13/16] 0.0, 128
        %3473 = vxpose.xlu0.b32.cont [14/16] 0.0, 128
        %3474 = vxpose.xlu0.b32.cont [15/16] 0.0, 128
        %3475 = vxpose.xlu0.b32.end [16/16] 0.0, 128
        %v3476 = vpop.trf.xlu0
        %v3477 = vpop.trf.xlu0
        %v3478 = vpop.trf.xlu0
        %v3479 = vpop.trf.xlu0
        %v3480 = vpop.trf.xlu0
        %v3481 = vpop.trf.xlu0
        %v3482 = vpop.trf.xlu0
        %v3483 = vpop.trf.xlu0
        %v3484 = vpop.trf.xlu0
        %v3485 = vpop.trf.xlu0
        %v3486 = vpop.trf.xlu0
        %v3487 = vpop.trf.xlu0
        %v3488 = vpop.trf.xlu0
        %v3489 = vpop.trf.xlu0
        %v3490 = vpop.trf.xlu0
        %v3491 = vpop.trf.xlu0
        %v3492 = vlaneseq
        %v3493 = vshrl.u32 %v3492, 7
        %v3494 = vsub.s32 7, %v3493
        %v3495 = vrot.slane %v3454, %v3494
        %v3496 = vmul.f32 %v3476, %v3495
        %v3497 = vmul.f32 %v3477, %v3495
        %v3498 = vmul.f32 %v3478, %v3495
        %v3499 = vmul.f32 %v3479, %v3495
        %v3500 = vmul.f32 %v3480, %v3495
        %v3501 = vmul.f32 %v3481, %v3495
        %v3502 = vmul.f32 %v3482, %v3495
        %v3503 = vmul.f32 %v3483, %v3495
        %v3504 = vmul.f32 %v3484, %v3495
        %v3505 = vmul.f32 %v3485, %v3495
        %v3506 = vmul.f32 %v3486, %v3495
        %v3507 = vmul.f32 %v3487, %v3495
        %v3508 = vmul.f32 %v3488, %v3495
        %v3509 = vmul.f32 %v3489, %v3495
        %v3510 = vmul.f32 %v3490, %v3495
        %v3511 = vmul.f32 %v3491, %v3495
        %v3512 = vlaneseq
        %v3513 = vshrl.u32 %v3512, 7
        %v3514 = vsub.s32 7, %v3513
        %v3515 = vrot.slane %v3457, %v3514
        %v3516 = vmul.f32 %v3476, %v3515
        %v3517 = vmul.f32 %v3477, %v3515
        %v3518 = vmul.f32 %v3478, %v3515
        %v3519 = vmul.f32 %v3479, %v3515
        %v3520 = vmul.f32 %v3480, %v3515
        %v3521 = vmul.f32 %v3481, %v3515
        %v3522 = vmul.f32 %v3482, %v3515
        %v3523 = vmul.f32 %v3483, %v3515
        %v3524 = vmul.f32 %v3484, %v3515
        %v3525 = vmul.f32 %v3485, %v3515
        %v3526 = vmul.f32 %v3486, %v3515
        %v3527 = vmul.f32 %v3487, %v3515
        %v3528 = vmul.f32 %v3488, %v3515
        %v3529 = vmul.f32 %v3489, %v3515
        %v3530 = vmul.f32 %v3490, %v3515
        %v3531 = vmul.f32 %v3491, %v3515
        %v3532 = vmax.f32 %v3496, %v3516
        %v3533 = vmax.f32 %v3497, %v3517
        %v3534 = vmax.f32 %v3498, %v3518
        %v3535 = vmax.f32 %v3499, %v3519
        %v3536 = vmax.f32 %v3500, %v3520
        %v3537 = vmax.f32 %v3501, %v3521
        %v3538 = vmax.f32 %v3502, %v3522
        %v3539 = vmax.f32 %v3503, %v3523
        %v3540 = vmax.f32 %v3504, %v3524
        %v3541 = vmax.f32 %v3505, %v3525
        %v3542 = vmax.f32 %v3506, %v3526
        %v3543 = vmax.f32 %v3507, %v3527
        %v3544 = vmax.f32 %v3508, %v3528
        %v3545 = vmax.f32 %v3509, %v3529
        %v3546 = vmax.f32 %v3510, %v3530
        %v3547 = vmax.f32 %v3511, %v3531
        %3549 = vset.pattern.permute.xlu0 0
        %3550 = vperm.xlu0 %3549, %v3476
        %v3551 = vpop.permute.xlu0 %3550
        %3554 = vset.pattern.permute.xlu0 0
        %3555 = vperm.xlu0 %3554, %v3477
        %v3556 = vpop.permute.xlu0 %3555
        %3559 = vset.pattern.permute.xlu0 0
        %3560 = vperm.xlu0 %3559, %v3478
        %v3561 = vpop.permute.xlu0 %3560
        %3564 = vset.pattern.permute.xlu0 0
        %3565 = vperm.xlu0 %3564, %v3479
        %v3566 = vpop.permute.xlu0 %3565
        %3569 = vset.pattern.permute.xlu0 0
        %3570 = vperm.xlu0 %3569, %v3480
        %v3571 = vpop.permute.xlu0 %3570
        %3574 = vset.pattern.permute.xlu0 0
        %3575 = vperm.xlu0 %3574, %v3481
        %v3576 = vpop.permute.xlu0 %3575
        %3579 = vset.pattern.permute.xlu0 0
        %3580 = vperm.xlu0 %3579, %v3482
        %v3581 = vpop.permute.xlu0 %3580
        %3584 = vset.pattern.permute.xlu0 0
        %3585 = vperm.xlu0 %3584, %v3483
        %v3586 = vpop.permute.xlu0 %3585
        %3589 = vset.pattern.permute.xlu0 0
        %3590 = vperm.xlu0 %3589, %v3484
        %v3591 = vpop.permute.xlu0 %3590
        %3594 = vset.pattern.permute.xlu0 0
        %3595 = vperm.xlu0 %3594, %v3485
        %v3596 = vpop.permute.xlu0 %3595
        %3599 = vset.pattern.permute.xlu0 0
        %3600 = vperm.xlu0 %3599, %v3486
        %v3601 = vpop.permute.xlu0 %3600
        %3604 = vset.pattern.permute.xlu0 0
        %3605 = vperm.xlu0 %3604, %v3487
        %v3606 = vpop.permute.xlu0 %3605
        %3609 = vset.pattern.permute.xlu0 0
        %3610 = vperm.xlu0 %3609, %v3488
        %v3611 = vpop.permute.xlu0 %3610
        %3614 = vset.pattern.permute.xlu0 0
        %3615 = vperm.xlu0 %3614, %v3489
        %v3616 = vpop.permute.xlu0 %3615
        %3619 = vset.pattern.permute.xlu0 0
        %3620 = vperm.xlu0 %3619, %v3490
        %v3621 = vpop.permute.xlu0 %3620
        %3624 = vset.pattern.permute.xlu0 0
        %3625 = vperm.xlu0 %3624, %v3491
        %v3626 = vpop.permute.xlu0 %3625
        %v3628 = vlaneseq
        %v3629 = vshrl.u32 %v3628, 7
        %v3630 = vsub.s32 7, %v3629
        %v3631 = vrot.slane %v186, %v3630
        %v3632 = vmul.f32 %v3551, %v3631
        %v3633 = vmul.f32 %v3556, %v3631
        %v3634 = vmul.f32 %v3561, %v3631
        %v3635 = vmul.f32 %v3566, %v3631
        %v3636 = vmul.f32 %v3571, %v3631
        %v3637 = vmul.f32 %v3576, %v3631
        %v3638 = vmul.f32 %v3581, %v3631
        %v3639 = vmul.f32 %v3586, %v3631
        %v3640 = vmul.f32 %v3591, %v3631
        %v3641 = vmul.f32 %v3596, %v3631
        %v3642 = vmul.f32 %v3601, %v3631
        %v3643 = vmul.f32 %v3606, %v3631
        %v3644 = vmul.f32 %v3611, %v3631
        %v3645 = vmul.f32 %v3616, %v3631
        %v3646 = vmul.f32 %v3621, %v3631
        %v3647 = vmul.f32 %v3626, %v3631
        %3649 = vset.pattern.permute.xlu0 0
        %3650 = vperm.xlu0 %3649, %v3532
        %v3651 = vpop.permute.xlu0 %3650
        %3654 = vset.pattern.permute.xlu0 0
        %3655 = vperm.xlu0 %3654, %v3533
        %v3656 = vpop.permute.xlu0 %3655
        %3659 = vset.pattern.permute.xlu0 0
        %3660 = vperm.xlu0 %3659, %v3534
        %v3661 = vpop.permute.xlu0 %3660
        %3664 = vset.pattern.permute.xlu0 0
        %3665 = vperm.xlu0 %3664, %v3535
        %v3666 = vpop.permute.xlu0 %3665
        %3669 = vset.pattern.permute.xlu0 0
        %3670 = vperm.xlu0 %3669, %v3536
        %v3671 = vpop.permute.xlu0 %3670
        %3674 = vset.pattern.permute.xlu0 0
        %3675 = vperm.xlu0 %3674, %v3537
        %v3676 = vpop.permute.xlu0 %3675
        %3679 = vset.pattern.permute.xlu0 0
        %3680 = vperm.xlu0 %3679, %v3538
        %v3681 = vpop.permute.xlu0 %3680
        %3684 = vset.pattern.permute.xlu0 0
        %3685 = vperm.xlu0 %3684, %v3539
        %v3686 = vpop.permute.xlu0 %3685
        %3689 = vset.pattern.permute.xlu0 0
        %3690 = vperm.xlu0 %3689, %v3540
        %v3691 = vpop.permute.xlu0 %3690
        %3694 = vset.pattern.permute.xlu0 0
        %3695 = vperm.xlu0 %3694, %v3541
        %v3696 = vpop.permute.xlu0 %3695
        %3699 = vset.pattern.permute.xlu0 0
        %3700 = vperm.xlu0 %3699, %v3542
        %v3701 = vpop.permute.xlu0 %3700
        %3704 = vset.pattern.permute.xlu0 0
        %3705 = vperm.xlu0 %3704, %v3543
        %v3706 = vpop.permute.xlu0 %3705
        %3709 = vset.pattern.permute.xlu0 0
        %3710 = vperm.xlu0 %3709, %v3544
        %v3711 = vpop.permute.xlu0 %3710
        %3714 = vset.pattern.permute.xlu0 0
        %3715 = vperm.xlu0 %3714, %v3545
        %v3716 = vpop.permute.xlu0 %3715
        %3719 = vset.pattern.permute.xlu0 0
        %3720 = vperm.xlu0 %3719, %v3546
        %v3721 = vpop.permute.xlu0 %3720
        %3724 = vset.pattern.permute.xlu0 0
        %3725 = vperm.xlu0 %3724, %v3547
        %v3726 = vpop.permute.xlu0 %3725
        %v3728 = vsub.f32 %v3632, %v3651
        %v3729 = vsub.f32 %v3633, %v3656
        %v3730 = vsub.f32 %v3634, %v3661
        %v3731 = vsub.f32 %v3635, %v3666
        %v3732 = vsub.f32 %v3636, %v3671
        %v3733 = vsub.f32 %v3637, %v3676
        %v3734 = vsub.f32 %v3638, %v3681
        %v3735 = vsub.f32 %v3639, %v3686
        %v3736 = vsub.f32 %v3640, %v3691
        %v3737 = vsub.f32 %v3641, %v3696
        %v3738 = vsub.f32 %v3642, %v3701
        %v3739 = vsub.f32 %v3643, %v3706
        %v3740 = vsub.f32 %v3644, %v3711
        %v3741 = vsub.f32 %v3645, %v3716
        %v3742 = vsub.f32 %v3646, %v3721
        %v3743 = vsub.f32 %v3647, %v3726
        %v3744 = vmul.f32 %v3728, 1.442695
        %v3745 = vpow.pop %v3744
        %v3746 = vmul.f32 %v3729, 1.442695
        %v3747 = vpow.pop %v3746
        %v3748 = vmul.f32 %v3730, 1.442695
        %v3749 = vpow.pop %v3748
        %v3750 = vmul.f32 %v3731, 1.442695
        %v3751 = vpow.pop %v3750
        %v3752 = vmul.f32 %v3732, 1.442695
        %v3753 = vpow.pop %v3752
        %v3754 = vmul.f32 %v3733, 1.442695
        %v3755 = vpow.pop %v3754
        %v3756 = vmul.f32 %v3734, 1.442695
        %v3757 = vpow.pop %v3756
        %v3758 = vmul.f32 %v3735, 1.442695
        %v3759 = vpow.pop %v3758
        %v3760 = vmul.f32 %v3736, 1.442695
        %v3761 = vpow.pop %v3760
        %v3762 = vmul.f32 %v3737, 1.442695
        %v3763 = vpow.pop %v3762
        %v3764 = vmul.f32 %v3738, 1.442695
        %v3765 = vpow.pop %v3764
        %v3766 = vmul.f32 %v3739, 1.442695
        %v3767 = vpow.pop %v3766
        %v3768 = vmul.f32 %v3740, 1.442695
        %v3769 = vpow.pop %v3768
        %v3770 = vmul.f32 %v3741, 1.442695
        %v3771 = vpow.pop %v3770
        %v3772 = vmul.f32 %v3742, 1.442695
        %v3773 = vpow.pop %v3772
        %v3774 = vmul.f32 %v3743, 1.442695
        %v3775 = vpow.pop %v3774
        %3776 = vadd.xlane.f32.xlu0 %v3745
        %v3777 = vpop.xlane.xlu0 %3776
        %3778 = vadd.xlane.f32.xlu0 %v3747
        %v3779 = vpop.xlane.xlu0 %3778
        %3780 = vadd.xlane.f32.xlu0 %v3749
        %v3781 = vpop.xlane.xlu0 %3780
        %3782 = vadd.xlane.f32.xlu0 %v3751
        %v3783 = vpop.xlane.xlu0 %3782
        %3784 = vadd.xlane.f32.xlu0 %v3753
        %v3785 = vpop.xlane.xlu0 %3784
        %3786 = vadd.xlane.f32.xlu0 %v3755
        %v3787 = vpop.xlane.xlu0 %3786
        %3788 = vadd.xlane.f32.xlu0 %v3757
        %v3789 = vpop.xlane.xlu0 %3788
        %3790 = vadd.xlane.f32.xlu0 %v3759
        %v3791 = vpop.xlane.xlu0 %3790
        %3792 = vadd.xlane.f32.xlu0 %v3761
        %v3793 = vpop.xlane.xlu0 %3792
        %3794 = vadd.xlane.f32.xlu0 %v3763
        %v3795 = vpop.xlane.xlu0 %3794
        %3796 = vadd.xlane.f32.xlu0 %v3765
        %v3797 = vpop.xlane.xlu0 %3796
        %3798 = vadd.xlane.f32.xlu0 %v3767
        %v3799 = vpop.xlane.xlu0 %3798
        %3800 = vadd.xlane.f32.xlu0 %v3769
        %v3801 = vpop.xlane.xlu0 %3800
        %3802 = vadd.xlane.f32.xlu0 %v3771
        %v3803 = vpop.xlane.xlu0 %3802
        %3804 = vadd.xlane.f32.xlu0 %v3773
        %v3805 = vpop.xlane.xlu0 %3804
        %3806 = vadd.xlane.f32.xlu0 %v3775
        %v3807 = vpop.xlane.xlu0 %3806
        %v3808 = vrcp.pop %v3777
        %v3809 = vrcp.pop %v3779
        %v3810 = vrcp.pop %v3781
        %v3811 = vrcp.pop %v3783
        %v3812 = vrcp.pop %v3785
        %v3813 = vrcp.pop %v3787
        %v3814 = vrcp.pop %v3789
        %v3815 = vrcp.pop %v3791
        %v3816 = vrcp.pop %v3793
        %v3817 = vrcp.pop %v3795
        %v3818 = vrcp.pop %v3797
        %v3819 = vrcp.pop %v3799
        %v3820 = vrcp.pop %v3801
        %v3821 = vrcp.pop %v3803
        %v3822 = vrcp.pop %v3805
        %v3823 = vrcp.pop %v3807
        %v3824 = vmul.f32 %v3745, %v3808
        %v3825 = vmul.f32 %v3747, %v3809
        %v3826 = vmul.f32 %v3749, %v3810
        %v3827 = vmul.f32 %v3751, %v3811
        %v3828 = vmul.f32 %v3753, %v3812
        %v3829 = vmul.f32 %v3755, %v3813
        %v3830 = vmul.f32 %v3757, %v3814
        %v3831 = vmul.f32 %v3759, %v3815
        %v3832 = vmul.f32 %v3761, %v3816
        %v3833 = vmul.f32 %v3763, %v3817
        %v3834 = vmul.f32 %v3765, %v3818
        %v3835 = vmul.f32 %v3767, %v3819
        %v3836 = vmul.f32 %v3769, %v3820
        %v3837 = vmul.f32 %v3771, %v3821
        %v3838 = vmul.f32 %v3773, %v3822
        %v3839 = vmul.f32 %v3775, %v3823
        %v3840 = vrot.slane %v190, 7
        %3842 = vmatprep.subr.mxu0 0.0
        %3843 = vmatpush1.msra.mxu0 %v3824
        %3844 = vmatprep.subr.mxu0 0.0
        %3845 = vmatpush1.msra.mxu0 %v3825
        %3846 = vmatprep.subr.mxu0 0.0
        %3847 = vmatpush1.msra.mxu0 %v3826
        %3848 = vmatprep.subr.mxu0 0.0
        %3849 = vmatpush1.msra.mxu0 %v3827
        %3850 = vmatprep.subr.mxu0 0.0
        %3851 = vmatpush1.msra.mxu0 %v3828
        %3852 = vmatprep.subr.mxu0 0.0
        %3853 = vmatpush1.msra.mxu0 %v3829
        %3854 = vmatprep.subr.mxu0 0.0
        %3855 = vmatpush1.msra.mxu0 %v3830
        %3856 = vmatprep.subr.mxu0 0.0
        %3857 = vmatpush1.msra.mxu0 %v3831
        %3858 = vmatprep.subr.mxu0 0.0
        %3859 = vmatpush1.msra.mxu0 %v3832
        %3860 = vmatprep.subr.mxu0 0.0
        %3861 = vmatpush1.msra.mxu0 %v3833
        %3862 = vmatprep.subr.mxu0 0.0
        %3863 = vmatpush1.msra.mxu0 %v3834
        %3864 = vmatprep.subr.mxu0 0.0
        %3865 = vmatpush1.msra.mxu0 %v3835
        %3866 = vmatprep.subr.mxu0 0.0
        %3867 = vmatpush1.msra.mxu0 %v3836
        %3868 = vmatprep.subr.mxu0 0.0
        %3869 = vmatpush1.msra.mxu0 %v3837
        %3870 = vmatprep.subr.mxu0 0.0
        %3871 = vmatpush1.msra.mxu0 %v3838
        %3872 = vmatprep.subr.mxu0 0.0
        %3873 = vmatpush1.msra.mxu0 %v3839
        %3874 = vmatprep.subr.mxu0 0.0
        %3875 = vmatpush1.msra.mxu0 0.0
        %3876 = vmatprep.subr.mxu0 0.0
        %3877 = vmatpush1.msra.mxu0 0.0
        %3878 = vmatprep.subr.mxu0 0.0
        %3879 = vmatpush1.msra.mxu0 0.0
        %3880 = vmatprep.subr.mxu0 0.0
        %3881 = vmatpush1.msra.mxu0 0.0
        %3882 = vmatprep.subr.mxu0 0.0
        %3883 = vmatpush1.msra.mxu0 0.0
        %3884 = vmatprep.subr.mxu0 0.0
        %3885 = vmatpush1.msra.mxu0 0.0
        %3886 = vmatprep.subr.mxu0 0.0
        %3887 = vmatpush1.msra.mxu0 0.0
        %3888 = vmatprep.subr.mxu0 0.0
        %3889 = vmatpush1.msra.mxu0 0.0
        %3890 = vmatprep.subr.mxu0 0.0
        %3891 = vmatpush1.msra.mxu0 0.0
        %3892 = vmatprep.subr.mxu0 0.0
        %3893 = vmatpush1.msra.mxu0 0.0
        %3894 = vmatprep.subr.mxu0 0.0
        %3895 = vmatpush1.msra.mxu0 0.0
        %3896 = vmatprep.subr.mxu0 0.0
        %3897 = vmatpush1.msra.mxu0 0.0
        %3898 = vmatprep.subr.mxu0 0.0
        %3899 = vmatpush1.msra.mxu0 0.0
        %3900 = vmatprep.subr.mxu0 0.0
        %3901 = vmatpush1.msra.mxu0 0.0
        %3902 = vmatprep.subr.mxu0 0.0
        %3903 = vmatpush1.msra.mxu0 0.0
        %3904 = vmatprep.subr.mxu0 0.0
        %3905 = vmatpush1.msra.mxu0 0.0
        %3906 = vmatprep.mubr.f32.mxu0 0.0
        %3907 = vmatmul.mubr.f32.gmra.mrb[0].mxu0 %v3840
        %v3908 = vpop.f32.mrb[0].mxu0
        %v3909 = vadd.f32 0.0, %v3908
        %v3910 = vpop.f32.mrb[0].mxu0
        %3911 = vdwg.mxu0
        %v3912 = vmul.f32 %v648, %v3909
        %v3913 = vrot.slane %v178, 7
        %v3915 = vadd.f32 %v3912, %v3913
        %3916 = vst [vmem:[%s170 + $0x7] sm:$0x1] %v3915
        %s3917 = sand.u32 %s75, 1
        %s3918 = scalar_lea.sflag [#allocation4], %s3917
        %s3919 = sand.u32 %s75, 1
        %s3920 = smul.addr %s3919, 8
        %s3921 = scalar_lea.vmem [#allocation7], %s3920
        // Predicated region
        $region37: #{tpu_custom_call.1} parent=27 // pred_check
          %p3922 = pneg %p85
        $region38: #{tpu_custom_call.1} parent=27 // pred_check_branch
          %3924 = sbr.rel (%p3922) target = $region40
        $region39: #{tpu_custom_call.1} parent=27 // pred_region
          %s3926 = ssub.s32 128, 128
          %3927 = vsyncadd %s3918, %s3926
          %s3928 = smul.addr %s20, 128
          %s3929 = scalar_lea.hbm %s2, %s3928
          %s3931 = sshll.u32 %s3921, 4
          %s3932 = int_to_ptr.vmem [resolvable:$true] %s3931
          %3934 = dma.vmem_to_hbm [thread:$0]  %s3932, 128, %s3929, %s3918
        $region40: #{tpu_custom_call.1} parent=27 // pred_fallthru
          _
      $region28: #{tpu_custom_call.1} parent=5 // pred_fallthru
        _
      %p3935 = scmp.le.s32.totalorder 2, %s15
      // Predicated region
      $region41: #{tpu_custom_call.1} parent=5 // pred_check
        %p3936 = pneg %p3935
      $region42: #{tpu_custom_call.1} parent=5 // pred_check_branch
        %3938 = sbr.rel (%p3936) target = $region44
      $region43: #{tpu_custom_call.1} parent=5 // pred_region
        %s3939 = ssub.s32 %s15, 2
        // Predicated region
        $region45: #{tpu_custom_call.1} parent=43 // pred_check
          %p3940 = pneg %p91
        $region46: #{tpu_custom_call.1} parent=43 // pred_check_branch
          %3942 = sbr.rel (%p3940) target = $region48
        $region47: #{tpu_custom_call.1} parent=43 // pred_region
          %s3943 = sand.u32 %s76, 1
          %s3944 = scalar_lea.sflag [#allocation4], %s3943
          %s3945 = sand.u32 %s76, 1
          %s3946 = smul.addr %s3945, 8
          %s3947 = scalar_lea.vmem [#allocation7], %s3946
          %3948 = dma.done %s3944, 128
        $region48: #{tpu_custom_call.1} parent=43 // pred_fallthru
          _
      $region44: #{tpu_custom_call.1} parent=5 // pred_fallthru
        _
    $region6: #{tpu_custom_call.1} parent=1 // loop_footer
      %s19 = sadd.s32 1, %s15
    $region7: #{tpu_custom_call.1} parent=1 // loop_footer_branch
      %14 = sbr.rel target = $region3
    $region8: #{tpu_custom_call.1} parent=1 // loop_exit
      _
    %3949 = vsyncpa [#allocation3], 1
    %s3950 = scalar_lea.sflag [#allocation3], 1
    %3951 = vsyncpa %s3950, 1
    %3952 = vsyncpa [#allocation4], 1
    %s3953 = scalar_lea.sflag [#allocation4], 1
    %3954 = vsyncpa %s3953, 1
    %3955 = vsyncpa [#allocation5], 1
    %s3956 = scalar_lea.sflag [#allocation5], 1
    %3957 = vsyncpa %s3956, 1

</llo_original>
